<compile_context>
chip_gen: v6e
topology: v6e:2x2x1
jax: 0.10.0
libtpu: 0.0.40
codegen_flags: <defaults>
</compile_context>

<pallas_src>
import functools
import math

import jax
import jax.numpy as jnp
from jax.experimental import pallas as pl
from jax.experimental.pallas import tpu as pltpu


# ------------------------------ fused kernel --------------------------------

def _fused_msa_kernel(x_ref, wq_ref, bq_ref, wkv_ref, bkv_ref, wo_ref, bo_ref,
                      gamma_ref, y_ref, *, m, C, gsz, da, eps, mxu_dtype):
    """One tile of TB (b*s)-rows: Q/KV proj -> GQA -> out proj -> residual -> RMSNorm.

    x_ref block is (TB*m, d): row t*m + mm holds source MSA row mm of tile-row t.
    """
    tb = y_ref.shape[0]
    scale = 1.0 / math.sqrt(da)

    # De-interleave the m source MSA rows with strided sublane loads.
    rows = [x_ref[pl.ds(mm, tb, stride=m), :] for mm in range(m)]   # m x (TB, d) f32
    x0 = rows[0]                                                    # query / residual row

    # ---- Q projection (MXU: bf16 operands, f32 accumulation) ----------------
    wq = wq_ref[...].astype(mxu_dtype)
    q = jnp.dot(x0.astype(mxu_dtype), wq,
                preferred_element_type=jnp.float32) + bq_ref[...]   # (TB, Hq*da)

    # ---- KV projection: one lane-dense matmul per source MSA row ------------
    wkv = wkv_ref[...].astype(mxu_dtype)
    bkv = bkv_ref[...]
    kv_rows = [jnp.dot(rows[mm].astype(mxu_dtype), wkv,
                       preferred_element_type=jnp.float32) + bkv    # (TB, 2*C*da)
               for mm in range(m)]

    # torch: kv.reshape(b*s, C, m, 2*da) on the (b*s, m, 2*C*da) projection.
    # Flat da-wide chunk p of that view lives at source row p // (2*C) and
    # feature-chunk p % (2*C) of the w_kv output.  Static lane slices only.
    def kv_chunk(p):
        jc = p % (2 * C)
        return kv_rows[p // (2 * C)][:, jc * da:(jc + 1) * da]      # (TB, da)

    # ---- grouped-query attention (m small: unrolled, f32 VPU/XLU math) ------
    out_heads = []
    for c in range(C):
        k_chunks = [kv_chunk(c * 2 * m + 2 * m2) for m2 in range(m)]      # K[c, m2]
        v_chunks = [kv_chunk(c * 2 * m + 2 * m2 + 1) for m2 in range(m)]  # V[c, m2]
        for gi in range(gsz):
            h = c * gsz + gi                                              # query head
            qh = q[:, h * da:(h + 1) * da]                                # (TB, da)
            s_cols = [jnp.sum(qh * kc, axis=-1, keepdims=True) * scale
                      for kc in k_chunks]                                 # m x (TB, 1)
            s_max = s_cols[0]
            for sc in s_cols[1:]:
                s_max = jnp.maximum(s_max, sc)
            p_cols = [jnp.exp(sc - s_max) for sc in s_cols]
            denom = p_cols[0]
            for pc in p_cols[1:]:
                denom = denom + pc
            inv = pl.reciprocal(denom, approx=True)                       # EUP slot
            o_h = (p_cols[0] * inv) * v_chunks[0]
            for m2 in range(1, m):
                o_h = o_h + (p_cols[m2] * inv) * v_chunks[m2]
            out_heads.append(o_h)                                         # (TB, da)

    o = jnp.concatenate(out_heads, axis=-1)                               # (TB, Hq*da)

    # ---- output projection + residual + RMSNorm (fused epilogue) ------------
    wo = wo_ref[...].astype(mxu_dtype)
    y = (jnp.dot(o.astype(mxu_dtype), wo, preferred_element_type=jnp.float32)
         + bo_ref[...] + x0)                                              # (TB, d)
    ms = jnp.mean(y * y, axis=-1, keepdims=True)
    y_ref[...] = (y * jax.lax.rsqrt(ms + eps) * gamma_ref[...]).astype(y_ref.dtype)


# -------------------------------- wrapper ------------------------------------

def _pick_block_rows(n_rows, target=128):
    """Largest multiple-of-8 divisor of n_rows that is <= target (else all rows)."""
    for cand in range(min(target, n_rows), 7, -1):
        if n_rows % cand == 0 and cand % 8 == 0:
            return cand
    return n_rows


def msa_cross_attention(x, params, n_out_channels, n_query_heads, d_attn,
                        norm_eps=1e-6, block_rows=128, mxu_dtype=jnp.bfloat16):
    b, m, s, d = x.shape
    C, Hq, da = n_out_channels, n_query_heads, d_attn
    assert Hq % C == 0, "query heads must divide into valid group sizes"
    assert Hq * da == d * C, "o.view(b, s, d*n_out_channels) requires Hq*da == d*C"
    gsz = Hq // C
    bs = b * s

    # x.view(b, s, m, d) is a row-major reinterpretation (free); flatten to rows.
    # Row t*m + mm of x2 is source MSA row mm of (b*s)-row t.
    x2 = x.reshape(bs * m, d)

    tb = _pick_block_rows(bs, block_rows)
    n_tiles = bs // tb

    kernel = functools.partial(_fused_msa_kernel, m=m, C=C, gsz=gsz, da=da,
                               eps=norm_eps, mxu_dtype=mxu_dtype)

    const2 = lambda i: (0, 0)   # weights/biases: same block every step -> VMEM-resident
    y = pl.pallas_call(
        kernel,
        out_shape=jax.ShapeDtypeStruct((bs, d), jnp.float32),
        grid=(n_tiles,),
        in_specs=[
            pl.BlockSpec((tb * m, d), lambda i: (i, 0)),       # x tile (streamed once)
            pl.BlockSpec((d, Hq * da), const2),                # w_q
            pl.BlockSpec((1, Hq * da), const2),                # b_q
            pl.BlockSpec((d, 2 * C * da), const2),             # w_kv
            pl.BlockSpec((1, 2 * C * da), const2),             # b_kv
            pl.BlockSpec((Hq * da, d), const2),                # w_o
            pl.BlockSpec((1, d), const2),                      # b_o
            pl.BlockSpec((1, d), const2),                      # RMSNorm gamma
        ],
        out_specs=pl.BlockSpec((tb, d), lambda i: (i, 0)),     # lane-dense when d%128==0
        compiler_params=pltpu.CompilerParams(
            dimension_semantics=("parallel",)),                # megacore-shardable
    )(x2, params["wq"], params["bq"], params["wkv"], params["bkv"],
      params["wo"], params["bo"], params["gamma"])

    return y.reshape(b, s, d)


# ---------------------------- pure-JAX reference -----------------------------

def reference(x, params, C, Hq, da, eps=1e-6, mxu_dtype=None):
    """Mirror of the PyTorch forward.  mxu_dtype=None -> exact f32 semantics;
    mxu_dtype=bf16 -> mirrors the kernel's bf16 MXU operands (f32 accumulation)."""
    b, m, s, d = x.shape
    g = Hq // C
    hi = jax.lax.Precision.HIGHEST

    def proj(a, w, bias):
        if mxu_dtype is not None:
            a, w = a.astype(mxu_dtype), w.astype(mxu_dtype)
        return jnp.dot(a, w, preferred_element_type=jnp.float32, precision=hi) + bias

    xv = x.reshape(b, s, m, d)
    x0 = xv[:, :, 0, :].reshape(b * s, d)
    Q = proj(x0, params["wq"], params["bq"])
    kv = proj(xv.reshape(b * s * m, d), params["wkv"], params["bkv"])
    kv = kv.reshape(b * s, C, m, 2 * da)
    K, V = kv[..., :da], kv[..., da:]
    Qg = Q.reshape(b * s, C, g, da)
    sc = jnp.einsum("bcgd,bcmd->bcgm", Qg, K, precision=hi) / math.sqrt(da)
    p = jax.nn.softmax(sc, axis=-1)
    o = jnp.einsum("bcgm,bcmd->bcgd", p, V, precision=hi).reshape(b * s, Hq * da)
    y = proj(o, params["wo"], params["bo"]) + x0
    ms = jnp.mean(y * y, axis=-1, keepdims=True)
    out = y * jax.lax.rsqrt(ms + eps) * params["gamma"]
    return out.reshape(b, s, d)


# ----------------------------------- main -------------------------------------

if __name__ == "__main__":
    # Small but TPU-shaped problem: b*s = 256 rows (two 128-row grid steps,
    # shardable across 2 TensorCores), d_model = 128 (lane-dense blocks), m = 4.
    b, m, s = 2, 4, 128
    d_model, n_out_channels, n_query_heads = 128, 2, 4
    d_attn = (d_model * n_out_channels) // n_query_heads   # = 64 (Hq*da == d*C)

    key = jax.random.PRNGKey(0)
    ks = jax.random.split(key, 7)
    x = jax.random.normal(ks[0], (b, m, s, d_model), dtype=jnp.float32)

    params = {
        "wq": 0.1 * jax.random.normal(ks[1], (d_model, n_query_heads * d_attn), jnp.float32),
        "bq": 0.1 * jax.random.normal(ks[2], (1, n_query_heads * d_attn), jnp.float32),
        "wkv": 0.1 * jax.random.normal(ks[3], (d_model, 2 * n_out_channels * d_attn), jnp.float32),
        "bkv": 0.1 * jax.random.normal(ks[4], (1, 2 * n_out_channels * d_attn), jnp.float32),
        "wo": 0.1 * jax.random.normal(ks[5], (n_query_heads * d_attn, d_model), jnp.float32),
        "bo": 0.1 * jax.random.normal(ks[6], (1, d_model), jnp.float32),
        "gamma": jnp.ones((1, d_model), jnp.float32),       # RMSNorm weight init (ones)
    }

    out = jax.block_until_ready(
        msa_cross_attention(x, params, n_out_channels, n_query_heads, d_attn))
    assert out.shape == (b, s, d_model), out.shape

    # Tight check vs a reference that mirrors the kernel's bf16 MXU operands
    # (catches any structural bug), plus a looser sanity bound vs the exact f32
    # module semantics (bf16 operands + approx reciprocal cost ~1e-2 worst-case
    # absolute error on the unit-scale RMSNorm outputs).
    ref_mx = reference(x, params, n_out_channels, n_query_heads, d_attn,
                       mxu_dtype=jnp.bfloat16)
    ref_f32 = reference(x, params, n_out_channels, n_query_heads, d_attn)
    err_mx = float(jnp.max(jnp.abs(out - ref_mx)))
    err_f32 = float(jnp.max(jnp.abs(out - ref_f32)))
    assert err_mx < 2e-2, f"mismatch vs bf16-operand reference: {err_mx}"
    assert err_f32 < 1e-1, f"mismatch vs exact f32 reference: {err_f32}"

    print("KERNEL_OK")
</pallas_src>

<mosaic_0001>
module attributes {stable_mosaic.version = 11 : i64} {
  func.func @_fused_msa_kernel(%arg0: i32, %arg1: memref<512x128xf32, #tpu.memory_space<vmem>>, %arg2: memref<128x256xf32, #tpu.memory_space<vmem>>, %arg3: memref<1x256xf32, #tpu.memory_space<vmem>>, %arg4: memref<128x256xf32, #tpu.memory_space<vmem>>, %arg5: memref<1x256xf32, #tpu.memory_space<vmem>>, %arg6: memref<256x128xf32, #tpu.memory_space<vmem>>, %arg7: memref<1x128xf32, #tpu.memory_space<vmem>>, %arg8: memref<1x128xf32, #tpu.memory_space<vmem>>, %arg9: memref<128x128xf32, #tpu.memory_space<vmem>>) attributes {dimension_semantics = [#tpu.dimension_semantics<parallel>], iteration_bounds = array<i64: 2>, scalar_prefetch = 0 : i64, scratch_operands = 0 : i64, tpu.core_type = #tpu.core_type<tc>, window_params = [{transform_indices = @transform_0, window_bounds = array<i64: 512, 128>}, {pipeline_mode = #tpu.pipeline_mode<synchronous>, transform_indices = @transform_1, window_bounds = array<i64: 128, 256>}, {pipeline_mode = #tpu.pipeline_mode<synchronous>, transform_indices = @transform_2, window_bounds = array<i64: 1, 256>}, {pipeline_mode = #tpu.pipeline_mode<synchronous>, transform_indices = @transform_3, window_bounds = array<i64: 128, 256>}, {pipeline_mode = #tpu.pipeline_mode<synchronous>, transform_indices = @transform_4, window_bounds = array<i64: 1, 256>}, {pipeline_mode = #tpu.pipeline_mode<synchronous>, transform_indices = @transform_5, window_bounds = array<i64: 256, 128>}, {pipeline_mode = #tpu.pipeline_mode<synchronous>, transform_indices = @transform_6, window_bounds = array<i64: 1, 128>}, {pipeline_mode = #tpu.pipeline_mode<synchronous>, transform_indices = @transform_7, window_bounds = array<i64: 1, 128>}, {transform_indices = @transform_8, window_bounds = array<i64: 128, 128>}]} {
    %c0 = arith.constant 0 : index
    %c0_0 = arith.constant 0 : index
    %0 = tpu.strided_load %arg1[%c0, %c0_0] {strides = array<i32: 4, 1>} : memref<512x128xf32, #tpu.memory_space<vmem>>, vector<128x128xf32>
    %c1 = arith.constant 1 : index
    %c0_1 = arith.constant 0 : index
    %1 = tpu.strided_load %arg1[%c1, %c0_1] {strides = array<i32: 4, 1>} : memref<512x128xf32, #tpu.memory_space<vmem>>, vector<128x128xf32>
    %c2 = arith.constant 2 : index
    %c0_2 = arith.constant 0 : index
    %2 = tpu.strided_load %arg1[%c2, %c0_2] {strides = array<i32: 4, 1>} : memref<512x128xf32, #tpu.memory_space<vmem>>, vector<128x128xf32>
    %c3 = arith.constant 3 : index
    %c0_3 = arith.constant 0 : index
    %3 = tpu.strided_load %arg1[%c3, %c0_3] {strides = array<i32: 4, 1>} : memref<512x128xf32, #tpu.memory_space<vmem>>, vector<128x128xf32>
    %c0_4 = arith.constant 0 : index
    %c0_5 = arith.constant 0 : index
    %4 = vector.load %arg2[%c0_4, %c0_5] : memref<128x256xf32, #tpu.memory_space<vmem>>, vector<128x256xf32>
    %5 = arith.truncf %4 : vector<128x256xf32> to vector<128x256xbf16>
    %6 = arith.truncf %0 : vector<128x128xf32> to vector<128x128xbf16>
    %cst = arith.constant dense<0.000000e+00> : vector<128x256xf32>
    %7 = tpu.matmul %6, %5, %cst {dimension_numbers = #tpu.dot_dimension_numbers<[1], [0], [0], [1], [0, 0, 1, 1], [], []>} : vector<128x128xbf16>, vector<128x256xbf16>, vector<128x256xf32> -> vector<128x256xf32>
    %c0_6 = arith.constant 0 : index
    %c0_7 = arith.constant 0 : index
    %8 = vector.load %arg3[%c0_6, %c0_7] : memref<1x256xf32, #tpu.memory_space<vmem>>, vector<1x256xf32>
    %9 = vector.broadcast %8 : vector<1x256xf32> to vector<128x256xf32>
    %10 = arith.addf %7, %9 : vector<128x256xf32>
    %c0_8 = arith.constant 0 : index
    %c0_9 = arith.constant 0 : index
    %11 = vector.load %arg4[%c0_8, %c0_9] : memref<128x256xf32, #tpu.memory_space<vmem>>, vector<128x256xf32>
    %12 = arith.truncf %11 : vector<128x256xf32> to vector<128x256xbf16>
    %c0_10 = arith.constant 0 : index
    %c0_11 = arith.constant 0 : index
    %13 = vector.load %arg5[%c0_10, %c0_11] : memref<1x256xf32, #tpu.memory_space<vmem>>, vector<1x256xf32>
    %14 = arith.truncf %0 : vector<128x128xf32> to vector<128x128xbf16>
    %cst_12 = arith.constant dense<0.000000e+00> : vector<128x256xf32>
    %15 = tpu.matmul %14, %12, %cst_12 {dimension_numbers = #tpu.dot_dimension_numbers<[1], [0], [0], [1], [0, 0, 1, 1], [], []>} : vector<128x128xbf16>, vector<128x256xbf16>, vector<128x256xf32> -> vector<128x256xf32>
    %16 = vector.broadcast %13 : vector<1x256xf32> to vector<128x256xf32>
    %17 = arith.addf %15, %16 : vector<128x256xf32>
    %18 = arith.truncf %1 : vector<128x128xf32> to vector<128x128xbf16>
    %cst_13 = arith.constant dense<0.000000e+00> : vector<128x256xf32>
    %19 = tpu.matmul %18, %12, %cst_13 {dimension_numbers = #tpu.dot_dimension_numbers<[1], [0], [0], [1], [0, 0, 1, 1], [], []>} : vector<128x128xbf16>, vector<128x256xbf16>, vector<128x256xf32> -> vector<128x256xf32>
    %20 = vector.broadcast %13 : vector<1x256xf32> to vector<128x256xf32>
    %21 = arith.addf %19, %20 : vector<128x256xf32>
    %22 = arith.truncf %2 : vector<128x128xf32> to vector<128x128xbf16>
    %cst_14 = arith.constant dense<0.000000e+00> : vector<128x256xf32>
    %23 = tpu.matmul %22, %12, %cst_14 {dimension_numbers = #tpu.dot_dimension_numbers<[1], [0], [0], [1], [0, 0, 1, 1], [], []>} : vector<128x128xbf16>, vector<128x256xbf16>, vector<128x256xf32> -> vector<128x256xf32>
    %24 = vector.broadcast %13 : vector<1x256xf32> to vector<128x256xf32>
    %25 = arith.addf %23, %24 : vector<128x256xf32>
    %26 = arith.truncf %3 : vector<128x128xf32> to vector<128x128xbf16>
    %cst_15 = arith.constant dense<0.000000e+00> : vector<128x256xf32>
    %27 = tpu.matmul %26, %12, %cst_15 {dimension_numbers = #tpu.dot_dimension_numbers<[1], [0], [0], [1], [0, 0, 1, 1], [], []>} : vector<128x128xbf16>, vector<128x256xbf16>, vector<128x256xf32> -> vector<128x256xf32>
    %28 = vector.broadcast %13 : vector<1x256xf32> to vector<128x256xf32>
    %29 = arith.addf %27, %28 : vector<128x256xf32>
    %30 = vector.extract_strided_slice %17 {offsets = [0, 0], sizes = [128, 64], strides = [1, 1]} : vector<128x256xf32> to vector<128x64xf32>
    %31 = vector.extract_strided_slice %17 {offsets = [0, 128], sizes = [128, 64], strides = [1, 1]} : vector<128x256xf32> to vector<128x64xf32>
    %32 = vector.extract_strided_slice %21 {offsets = [0, 0], sizes = [128, 64], strides = [1, 1]} : vector<128x256xf32> to vector<128x64xf32>
    %33 = vector.extract_strided_slice %21 {offsets = [0, 128], sizes = [128, 64], strides = [1, 1]} : vector<128x256xf32> to vector<128x64xf32>
    %34 = vector.extract_strided_slice %17 {offsets = [0, 64], sizes = [128, 64], strides = [1, 1]} : vector<128x256xf32> to vector<128x64xf32>
    %35 = vector.extract_strided_slice %17 {offsets = [0, 192], sizes = [128, 64], strides = [1, 1]} : vector<128x256xf32> to vector<128x64xf32>
    %36 = vector.extract_strided_slice %21 {offsets = [0, 64], sizes = [128, 64], strides = [1, 1]} : vector<128x256xf32> to vector<128x64xf32>
    %37 = vector.extract_strided_slice %21 {offsets = [0, 192], sizes = [128, 64], strides = [1, 1]} : vector<128x256xf32> to vector<128x64xf32>
    %38 = vector.extract_strided_slice %10 {offsets = [0, 0], sizes = [128, 64], strides = [1, 1]} : vector<128x256xf32> to vector<128x64xf32>
    %39 = arith.mulf %38, %30 : vector<128x64xf32>
    %cst_16 = arith.constant dense<0.000000e+00> : vector<128xf32>
    %40 = vector.multi_reduction <add>, %39, %cst_16 [1] : vector<128x64xf32> to vector<128xf32>
    %41 = vector.shape_cast %40 : vector<128xf32> to vector<128x1xf32>
    %cst_17 = arith.constant 1.250000e-01 : f32
    %42 = vector.broadcast %cst_17 : f32 to vector<128x1xf32>
    %43 = arith.mulf %41, %42 : vector<128x1xf32>
    %44 = arith.mulf %38, %31 : vector<128x64xf32>
    %cst_18 = arith.constant dense<0.000000e+00> : vector<128xf32>
    %45 = vector.multi_reduction <add>, %44, %cst_18 [1] : vector<128x64xf32> to vector<128xf32>
    %46 = vector.shape_cast %45 : vector<128xf32> to vector<128x1xf32>
    %cst_19 = arith.constant 1.250000e-01 : f32
    %47 = vector.broadcast %cst_19 : f32 to vector<128x1xf32>
    %48 = arith.mulf %46, %47 : vector<128x1xf32>
    %49 = arith.mulf %38, %32 : vector<128x64xf32>
    %cst_20 = arith.constant dense<0.000000e+00> : vector<128xf32>
    %50 = vector.multi_reduction <add>, %49, %cst_20 [1] : vector<128x64xf32> to vector<128xf32>
    %51 = vector.shape_cast %50 : vector<128xf32> to vector<128x1xf32>
    %cst_21 = arith.constant 1.250000e-01 : f32
    %52 = vector.broadcast %cst_21 : f32 to vector<128x1xf32>
    %53 = arith.mulf %51, %52 : vector<128x1xf32>
    %54 = arith.mulf %38, %33 : vector<128x64xf32>
    %cst_22 = arith.constant dense<0.000000e+00> : vector<128xf32>
    %55 = vector.multi_reduction <add>, %54, %cst_22 [1] : vector<128x64xf32> to vector<128xf32>
    %56 = vector.shape_cast %55 : vector<128xf32> to vector<128x1xf32>
    %cst_23 = arith.constant 1.250000e-01 : f32
    %57 = vector.broadcast %cst_23 : f32 to vector<128x1xf32>
    %58 = arith.mulf %56, %57 : vector<128x1xf32>
    %59 = arith.maximumf %43, %48 : vector<128x1xf32>
    %60 = arith.maximumf %59, %53 : vector<128x1xf32>
    %61 = arith.maximumf %60, %58 : vector<128x1xf32>
    %62 = arith.subf %43, %61 : vector<128x1xf32>
    %63 = math.exp %62 : vector<128x1xf32>
    %64 = arith.subf %48, %61 : vector<128x1xf32>
    %65 = math.exp %64 : vector<128x1xf32>
    %66 = arith.subf %53, %61 : vector<128x1xf32>
    %67 = math.exp %66 : vector<128x1xf32>
    %68 = arith.subf %58, %61 : vector<128x1xf32>
    %69 = math.exp %68 : vector<128x1xf32>
    %70 = arith.addf %63, %65 : vector<128x1xf32>
    %71 = arith.addf %70, %67 : vector<128x1xf32>
    %72 = arith.addf %71, %69 : vector<128x1xf32>
    %73 = tpu.reciprocal %72 {approx = true} : vector<128x1xf32> -> vector<128x1xf32>
    %74 = arith.mulf %63, %73 : vector<128x1xf32>
    %75 = vector.broadcast %74 : vector<128x1xf32> to vector<128x64xf32>
    %76 = arith.mulf %75, %34 : vector<128x64xf32>
    %77 = arith.mulf %65, %73 : vector<128x1xf32>
    %78 = vector.broadcast %77 : vector<128x1xf32> to vector<128x64xf32>
    %79 = arith.mulf %78, %35 : vector<128x64xf32>
    %80 = arith.addf %76, %79 : vector<128x64xf32>
    %81 = arith.mulf %67, %73 : vector<128x1xf32>
    %82 = vector.broadcast %81 : vector<128x1xf32> to vector<128x64xf32>
    %83 = arith.mulf %82, %36 : vector<128x64xf32>
    %84 = arith.addf %80, %83 : vector<128x64xf32>
    %85 = arith.mulf %69, %73 : vector<128x1xf32>
    %86 = vector.broadcast %85 : vector<128x1xf32> to vector<128x64xf32>
    %87 = arith.mulf %86, %37 : vector<128x64xf32>
    %88 = arith.addf %84, %87 : vector<128x64xf32>
    %89 = vector.extract_strided_slice %10 {offsets = [0, 64], sizes = [128, 64], strides = [1, 1]} : vector<128x256xf32> to vector<128x64xf32>
    %90 = arith.mulf %89, %30 : vector<128x64xf32>
    %cst_24 = arith.constant dense<0.000000e+00> : vector<128xf32>
    %91 = vector.multi_reduction <add>, %90, %cst_24 [1] : vector<128x64xf32> to vector<128xf32>
    %92 = vector.shape_cast %91 : vector<128xf32> to vector<128x1xf32>
    %cst_25 = arith.constant 1.250000e-01 : f32
    %93 = vector.broadcast %cst_25 : f32 to vector<128x1xf32>
    %94 = arith.mulf %92, %93 : vector<128x1xf32>
    %95 = arith.mulf %89, %31 : vector<128x64xf32>
    %cst_26 = arith.constant dense<0.000000e+00> : vector<128xf32>
    %96 = vector.multi_reduction <add>, %95, %cst_26 [1] : vector<128x64xf32> to vector<128xf32>
    %97 = vector.shape_cast %96 : vector<128xf32> to vector<128x1xf32>
    %cst_27 = arith.constant 1.250000e-01 : f32
    %98 = vector.broadcast %cst_27 : f32 to vector<128x1xf32>
    %99 = arith.mulf %97, %98 : vector<128x1xf32>
    %100 = arith.mulf %89, %32 : vector<128x64xf32>
    %cst_28 = arith.constant dense<0.000000e+00> : vector<128xf32>
    %101 = vector.multi_reduction <add>, %100, %cst_28 [1] : vector<128x64xf32> to vector<128xf32>
    %102 = vector.shape_cast %101 : vector<128xf32> to vector<128x1xf32>
    %cst_29 = arith.constant 1.250000e-01 : f32
    %103 = vector.broadcast %cst_29 : f32 to vector<128x1xf32>
    %104 = arith.mulf %102, %103 : vector<128x1xf32>
    %105 = arith.mulf %89, %33 : vector<128x64xf32>
    %cst_30 = arith.constant dense<0.000000e+00> : vector<128xf32>
    %106 = vector.multi_reduction <add>, %105, %cst_30 [1] : vector<128x64xf32> to vector<128xf32>
    %107 = vector.shape_cast %106 : vector<128xf32> to vector<128x1xf32>
    %cst_31 = arith.constant 1.250000e-01 : f32
    %108 = vector.broadcast %cst_31 : f32 to vector<128x1xf32>
    %109 = arith.mulf %107, %108 : vector<128x1xf32>
    %110 = arith.maximumf %94, %99 : vector<128x1xf32>
    %111 = arith.maximumf %110, %104 : vector<128x1xf32>
    %112 = arith.maximumf %111, %109 : vector<128x1xf32>
    %113 = arith.subf %94, %112 : vector<128x1xf32>
    %114 = math.exp %113 : vector<128x1xf32>
    %115 = arith.subf %99, %112 : vector<128x1xf32>
    %116 = math.exp %115 : vector<128x1xf32>
    %117 = arith.subf %104, %112 : vector<128x1xf32>
    %118 = math.exp %117 : vector<128x1xf32>
    %119 = arith.subf %109, %112 : vector<128x1xf32>
    %120 = math.exp %119 : vector<128x1xf32>
    %121 = arith.addf %114, %116 : vector<128x1xf32>
    %122 = arith.addf %121, %118 : vector<128x1xf32>
    %123 = arith.addf %122, %120 : vector<128x1xf32>
    %124 = tpu.reciprocal %123 {approx = true} : vector<128x1xf32> -> vector<128x1xf32>
    %125 = arith.mulf %114, %124 : vector<128x1xf32>
    %126 = vector.broadcast %125 : vector<128x1xf32> to vector<128x64xf32>
    %127 = arith.mulf %126, %34 : vector<128x64xf32>
    %128 = arith.mulf %116, %124 : vector<128x1xf32>
    %129 = vector.broadcast %128 : vector<128x1xf32> to vector<128x64xf32>
    %130 = arith.mulf %129, %35 : vector<128x64xf32>
    %131 = arith.addf %127, %130 : vector<128x64xf32>
    %132 = arith.mulf %118, %124 : vector<128x1xf32>
    %133 = vector.broadcast %132 : vector<128x1xf32> to vector<128x64xf32>
    %134 = arith.mulf %133, %36 : vector<128x64xf32>
    %135 = arith.addf %131, %134 : vector<128x64xf32>
    %136 = arith.mulf %120, %124 : vector<128x1xf32>
    %137 = vector.broadcast %136 : vector<128x1xf32> to vector<128x64xf32>
    %138 = arith.mulf %137, %37 : vector<128x64xf32>
    %139 = arith.addf %135, %138 : vector<128x64xf32>
    %140 = vector.extract_strided_slice %25 {offsets = [0, 0], sizes = [128, 64], strides = [1, 1]} : vector<128x256xf32> to vector<128x64xf32>
    %141 = vector.extract_strided_slice %25 {offsets = [0, 128], sizes = [128, 64], strides = [1, 1]} : vector<128x256xf32> to vector<128x64xf32>
    %142 = vector.extract_strided_slice %29 {offsets = [0, 0], sizes = [128, 64], strides = [1, 1]} : vector<128x256xf32> to vector<128x64xf32>
    %143 = vector.extract_strided_slice %29 {offsets = [0, 128], sizes = [128, 64], strides = [1, 1]} : vector<128x256xf32> to vector<128x64xf32>
    %144 = vector.extract_strided_slice %25 {offsets = [0, 64], sizes = [128, 64], strides = [1, 1]} : vector<128x256xf32> to vector<128x64xf32>
    %145 = vector.extract_strided_slice %25 {offsets = [0, 192], sizes = [128, 64], strides = [1, 1]} : vector<128x256xf32> to vector<128x64xf32>
    %146 = vector.extract_strided_slice %29 {offsets = [0, 64], sizes = [128, 64], strides = [1, 1]} : vector<128x256xf32> to vector<128x64xf32>
    %147 = vector.extract_strided_slice %29 {offsets = [0, 192], sizes = [128, 64], strides = [1, 1]} : vector<128x256xf32> to vector<128x64xf32>
    %148 = vector.extract_strided_slice %10 {offsets = [0, 128], sizes = [128, 64], strides = [1, 1]} : vector<128x256xf32> to vector<128x64xf32>
    %149 = arith.mulf %148, %140 : vector<128x64xf32>
    %cst_32 = arith.constant dense<0.000000e+00> : vector<128xf32>
    %150 = vector.multi_reduction <add>, %149, %cst_32 [1] : vector<128x64xf32> to vector<128xf32>
    %151 = vector.shape_cast %150 : vector<128xf32> to vector<128x1xf32>
    %cst_33 = arith.constant 1.250000e-01 : f32
    %152 = vector.broadcast %cst_33 : f32 to vector<128x1xf32>
    %153 = arith.mulf %151, %152 : vector<128x1xf32>
    %154 = arith.mulf %148, %141 : vector<128x64xf32>
    %cst_34 = arith.constant dense<0.000000e+00> : vector<128xf32>
    %155 = vector.multi_reduction <add>, %154, %cst_34 [1] : vector<128x64xf32> to vector<128xf32>
    %156 = vector.shape_cast %155 : vector<128xf32> to vector<128x1xf32>
    %cst_35 = arith.constant 1.250000e-01 : f32
    %157 = vector.broadcast %cst_35 : f32 to vector<128x1xf32>
    %158 = arith.mulf %156, %157 : vector<128x1xf32>
    %159 = arith.mulf %148, %142 : vector<128x64xf32>
    %cst_36 = arith.constant dense<0.000000e+00> : vector<128xf32>
    %160 = vector.multi_reduction <add>, %159, %cst_36 [1] : vector<128x64xf32> to vector<128xf32>
    %161 = vector.shape_cast %160 : vector<128xf32> to vector<128x1xf32>
    %cst_37 = arith.constant 1.250000e-01 : f32
    %162 = vector.broadcast %cst_37 : f32 to vector<128x1xf32>
    %163 = arith.mulf %161, %162 : vector<128x1xf32>
    %164 = arith.mulf %148, %143 : vector<128x64xf32>
    %cst_38 = arith.constant dense<0.000000e+00> : vector<128xf32>
    %165 = vector.multi_reduction <add>, %164, %cst_38 [1] : vector<128x64xf32> to vector<128xf32>
    %166 = vector.shape_cast %165 : vector<128xf32> to vector<128x1xf32>
    %cst_39 = arith.constant 1.250000e-01 : f32
    %167 = vector.broadcast %cst_39 : f32 to vector<128x1xf32>
    %168 = arith.mulf %166, %167 : vector<128x1xf32>
    %169 = arith.maximumf %153, %158 : vector<128x1xf32>
    %170 = arith.maximumf %169, %163 : vector<128x1xf32>
    %171 = arith.maximumf %170, %168 : vector<128x1xf32>
    %172 = arith.subf %153, %171 : vector<128x1xf32>
    %173 = math.exp %172 : vector<128x1xf32>
    %174 = arith.subf %158, %171 : vector<128x1xf32>
    %175 = math.exp %174 : vector<128x1xf32>
    %176 = arith.subf %163, %171 : vector<128x1xf32>
    %177 = math.exp %176 : vector<128x1xf32>
    %178 = arith.subf %168, %171 : vector<128x1xf32>
    %179 = math.exp %178 : vector<128x1xf32>
    %180 = arith.addf %173, %175 : vector<128x1xf32>
    %181 = arith.addf %180, %177 : vector<128x1xf32>
    %182 = arith.addf %181, %179 : vector<128x1xf32>
    %183 = tpu.reciprocal %182 {approx = true} : vector<128x1xf32> -> vector<128x1xf32>
    %184 = arith.mulf %173, %183 : vector<128x1xf32>
    %185 = vector.broadcast %184 : vector<128x1xf32> to vector<128x64xf32>
    %186 = arith.mulf %185, %144 : vector<128x64xf32>
    %187 = arith.mulf %175, %183 : vector<128x1xf32>
    %188 = vector.broadcast %187 : vector<128x1xf32> to vector<128x64xf32>
    %189 = arith.mulf %188, %145 : vector<128x64xf32>
    %190 = arith.addf %186, %189 : vector<128x64xf32>
    %191 = arith.mulf %177, %183 : vector<128x1xf32>
    %192 = vector.broadcast %191 : vector<128x1xf32> to vector<128x64xf32>
    %193 = arith.mulf %192, %146 : vector<128x64xf32>
    %194 = arith.addf %190, %193 : vector<128x64xf32>
    %195 = arith.mulf %179, %183 : vector<128x1xf32>
    %196 = vector.broadcast %195 : vector<128x1xf32> to vector<128x64xf32>
    %197 = arith.mulf %196, %147 : vector<128x64xf32>
    %198 = arith.addf %194, %197 : vector<128x64xf32>
    %199 = vector.extract_strided_slice %10 {offsets = [0, 192], sizes = [128, 64], strides = [1, 1]} : vector<128x256xf32> to vector<128x64xf32>
    %200 = arith.mulf %199, %140 : vector<128x64xf32>
    %cst_40 = arith.constant dense<0.000000e+00> : vector<128xf32>
    %201 = vector.multi_reduction <add>, %200, %cst_40 [1] : vector<128x64xf32> to vector<128xf32>
    %202 = vector.shape_cast %201 : vector<128xf32> to vector<128x1xf32>
    %cst_41 = arith.constant 1.250000e-01 : f32
    %203 = vector.broadcast %cst_41 : f32 to vector<128x1xf32>
    %204 = arith.mulf %202, %203 : vector<128x1xf32>
    %205 = arith.mulf %199, %141 : vector<128x64xf32>
    %cst_42 = arith.constant dense<0.000000e+00> : vector<128xf32>
    %206 = vector.multi_reduction <add>, %205, %cst_42 [1] : vector<128x64xf32> to vector<128xf32>
    %207 = vector.shape_cast %206 : vector<128xf32> to vector<128x1xf32>
    %cst_43 = arith.constant 1.250000e-01 : f32
    %208 = vector.broadcast %cst_43 : f32 to vector<128x1xf32>
    %209 = arith.mulf %207, %208 : vector<128x1xf32>
    %210 = arith.mulf %199, %142 : vector<128x64xf32>
    %cst_44 = arith.constant dense<0.000000e+00> : vector<128xf32>
    %211 = vector.multi_reduction <add>, %210, %cst_44 [1] : vector<128x64xf32> to vector<128xf32>
    %212 = vector.shape_cast %211 : vector<128xf32> to vector<128x1xf32>
    %cst_45 = arith.constant 1.250000e-01 : f32
    %213 = vector.broadcast %cst_45 : f32 to vector<128x1xf32>
    %214 = arith.mulf %212, %213 : vector<128x1xf32>
    %215 = arith.mulf %199, %143 : vector<128x64xf32>
    %cst_46 = arith.constant dense<0.000000e+00> : vector<128xf32>
    %216 = vector.multi_reduction <add>, %215, %cst_46 [1] : vector<128x64xf32> to vector<128xf32>
    %217 = vector.shape_cast %216 : vector<128xf32> to vector<128x1xf32>
    %cst_47 = arith.constant 1.250000e-01 : f32
    %218 = vector.broadcast %cst_47 : f32 to vector<128x1xf32>
    %219 = arith.mulf %217, %218 : vector<128x1xf32>
    %220 = arith.maximumf %204, %209 : vector<128x1xf32>
    %221 = arith.maximumf %220, %214 : vector<128x1xf32>
    %222 = arith.maximumf %221, %219 : vector<128x1xf32>
    %223 = arith.subf %204, %222 : vector<128x1xf32>
    %224 = math.exp %223 : vector<128x1xf32>
    %225 = arith.subf %209, %222 : vector<128x1xf32>
    %226 = math.exp %225 : vector<128x1xf32>
    %227 = arith.subf %214, %222 : vector<128x1xf32>
    %228 = math.exp %227 : vector<128x1xf32>
    %229 = arith.subf %219, %222 : vector<128x1xf32>
    %230 = math.exp %229 : vector<128x1xf32>
    %231 = arith.addf %224, %226 : vector<128x1xf32>
    %232 = arith.addf %231, %228 : vector<128x1xf32>
    %233 = arith.addf %232, %230 : vector<128x1xf32>
    %234 = tpu.reciprocal %233 {approx = true} : vector<128x1xf32> -> vector<128x1xf32>
    %235 = arith.mulf %224, %234 : vector<128x1xf32>
    %236 = vector.broadcast %235 : vector<128x1xf32> to vector<128x64xf32>
    %237 = arith.mulf %236, %144 : vector<128x64xf32>
    %238 = arith.mulf %226, %234 : vector<128x1xf32>
    %239 = vector.broadcast %238 : vector<128x1xf32> to vector<128x64xf32>
    %240 = arith.mulf %239, %145 : vector<128x64xf32>
    %241 = arith.addf %237, %240 : vector<128x64xf32>
    %242 = arith.mulf %228, %234 : vector<128x1xf32>
    %243 = vector.broadcast %242 : vector<128x1xf32> to vector<128x64xf32>
    %244 = arith.mulf %243, %146 : vector<128x64xf32>
    %245 = arith.addf %241, %244 : vector<128x64xf32>
    %246 = arith.mulf %230, %234 : vector<128x1xf32>
    %247 = vector.broadcast %246 : vector<128x1xf32> to vector<128x64xf32>
    %248 = arith.mulf %247, %147 : vector<128x64xf32>
    %249 = arith.addf %245, %248 : vector<128x64xf32>
    %250 = tpu.concatenate %88, %139, %198, %249 in 1 : vector<128x64xf32>, vector<128x64xf32>, vector<128x64xf32>, vector<128x64xf32> -> vector<128x256xf32>
    %c0_48 = arith.constant 0 : index
    %c0_49 = arith.constant 0 : index
    %251 = vector.load %arg6[%c0_48, %c0_49] : memref<256x128xf32, #tpu.memory_space<vmem>>, vector<256x128xf32>
    %252 = arith.truncf %251 : vector<256x128xf32> to vector<256x128xbf16>
    %253 = arith.truncf %250 : vector<128x256xf32> to vector<128x256xbf16>
    %cst_50 = arith.constant dense<0.000000e+00> : vector<128x128xf32>
    %254 = tpu.matmul %253, %252, %cst_50 {dimension_numbers = #tpu.dot_dimension_numbers<[1], [0], [0], [1], [0, 0, 1, 1], [], []>} : vector<128x256xbf16>, vector<256x128xbf16>, vector<128x128xf32> -> vector<128x128xf32>
    %c0_51 = arith.constant 0 : index
    %c0_52 = arith.constant 0 : index
    %255 = vector.load %arg7[%c0_51, %c0_52] : memref<1x128xf32, #tpu.memory_space<vmem>>, vector<1x128xf32>
    %256 = vector.broadcast %255 : vector<1x128xf32> to vector<128x128xf32>
    %257 = arith.addf %254, %256 : vector<128x128xf32>
    %258 = arith.addf %257, %0 : vector<128x128xf32>
    %259 = arith.mulf %258, %258 : vector<128x128xf32>
    %cst_53 = arith.constant dense<0.000000e+00> : vector<128xf32>
    %260 = vector.multi_reduction <add>, %259, %cst_53 [1] : vector<128x128xf32> to vector<128xf32>
    %261 = vector.shape_cast %260 : vector<128xf32> to vector<128x1xf32>
    %cst_54 = arith.constant 1.280000e+02 : f32
    %262 = vector.broadcast %cst_54 : f32 to vector<128x1xf32>
    %263 = arith.divf %261, %262 : vector<128x1xf32>
    %cst_55 = arith.constant 9.99999997E-7 : f32
    %264 = vector.broadcast %cst_55 : f32 to vector<128x1xf32>
    %265 = arith.addf %263, %264 : vector<128x1xf32>
    %266 = math.rsqrt %265 : vector<128x1xf32>
    %267 = vector.broadcast %266 : vector<128x1xf32> to vector<128x128xf32>
    %268 = arith.mulf %258, %267 : vector<128x128xf32>
    %c0_56 = arith.constant 0 : index
    %c0_57 = arith.constant 0 : index
    %269 = vector.load %arg8[%c0_56, %c0_57] : memref<1x128xf32, #tpu.memory_space<vmem>>, vector<1x128xf32>
    %270 = vector.broadcast %269 : vector<1x128xf32> to vector<128x128xf32>
    %271 = arith.mulf %268, %270 : vector<128x128xf32>
    %c0_58 = arith.constant 0 : index
    %c0_59 = arith.constant 0 : index
    %272 = vector.load %arg9[%c0_58, %c0_59] : memref<128x128xf32, #tpu.memory_space<vmem>>, vector<128x128xf32>
    tpu.vector_store %arg9[%c0_58, %c0_59], %271 {strides = array<i32>} : memref<128x128xf32, #tpu.memory_space<vmem>>, vector<128x128xf32>,
    return
  }
  func.func @transform_0(%arg0: i32) -> (i32, i32) {
    %c0_i32 = arith.constant 0 : i32
    %c0_i32_0 = arith.constant 0 : i32
    return %arg0, %c0_i32 : i32, i32
  }
  func.func @transform_1(%arg0: i32) -> (i32, i32) {
    %c0_i32 = arith.constant 0 : i32
    %c0_i32_0 = arith.constant 0 : i32
    %c0_i32_1 = arith.constant 0 : i32
    return %c0_i32, %c0_i32_0 : i32, i32
  }
  func.func @transform_2(%arg0: i32) -> (i32, i32) {
    %c0_i32 = arith.constant 0 : i32
    %c0_i32_0 = arith.constant 0 : i32
    %c0_i32_1 = arith.constant 0 : i32
    return %c0_i32, %c0_i32_0 : i32, i32
  }
  func.func @transform_3(%arg0: i32) -> (i32, i32) {
    %c0_i32 = arith.constant 0 : i32
    %c0_i32_0 = arith.constant 0 : i32
    %c0_i32_1 = arith.constant 0 : i32
    return %c0_i32, %c0_i32_0 : i32, i32
  }
  func.func @transform_4(%arg0: i32) -> (i32, i32) {
    %c0_i32 = arith.constant 0 : i32
    %c0_i32_0 = arith.constant 0 : i32
    %c0_i32_1 = arith.constant 0 : i32
    return %c0_i32, %c0_i32_0 : i32, i32
  }
  func.func @transform_5(%arg0: i32) -> (i32, i32) {
    %c0_i32 = arith.constant 0 : i32
    %c0_i32_0 = arith.constant 0 : i32
    %c0_i32_1 = arith.constant 0 : i32
    return %c0_i32, %c0_i32_0 : i32, i32
  }
  func.func @transform_6(%arg0: i32) -> (i32, i32) {
    %c0_i32 = arith.constant 0 : i32
    %c0_i32_0 = arith.constant 0 : i32
    %c0_i32_1 = arith.constant 0 : i32
    return %c0_i32, %c0_i32_0 : i32, i32
  }
  func.func @transform_7(%arg0: i32) -> (i32, i32) {
    %c0_i32 = arith.constant 0 : i32
    %c0_i32_0 = arith.constant 0 : i32
    %c0_i32_1 = arith.constant 0 : i32
    return %c0_i32, %c0_i32_0 : i32, i32
  }
  func.func @transform_8(%arg0: i32) -> (i32, i32) {
    %c0_i32 = arith.constant 0 : i32
    %c0_i32_0 = arith.constant 0 : i32
    return %arg0, %c0_i32 : i32, i32
  }
}

</mosaic_0001>

<llo_original>
// kernel: tpu_custom_call.1
$region0: #{tpu_custom_call.1}
  #allocation0 [shape = 'u32[]', space=smem, size = 0x4, offset = 0x4, fixed_abs, tag = 'smem constant byte address 0x4 - core index']
  #allocation1 [shape = 'u32[144,128]{1,0:T(1,128)}', space=vmem, size = 0x12000, scoped, tag = 'internal scratch']
  %s0 = inlined_call_operand.hbm [shape: f32[1024,128], index: 0, kind: input, shape index: {}]
  %s1 = inlined_call_operand.hbm [shape: f32[128,256], index: 1, kind: input, shape index: {}]
  %s2 = inlined_call_operand.vmem [shape: f32[1,256], index: 2, kind: input, shape index: {}]
  %s3 = inlined_call_operand.hbm [shape: f32[128,256], index: 3, kind: input, shape index: {}]
  %s4 = inlined_call_operand.vmem [shape: f32[1,256], index: 4, kind: input, shape index: {}]
  %s5 = inlined_call_operand.hbm [shape: f32[256,128], index: 5, kind: input, shape index: {}]
  %s6 = inlined_call_operand.vmem [shape: f32[1,128], index: 6, kind: input, shape index: {}]
  %s7 = inlined_call_operand.vmem [shape: f32[1,128], index: 7, kind: input, shape index: {}]
  %s8 = inlined_call_operand.hbm [shape: f32[256,128], index: 8, kind: output, shape index: {}]
  %s9 = sld [smem:[#allocation0]]
  $region81: #{tpu_custom_call.1} parent=0
    _
  %s11 = ssub.s32 1, %s9
  %s12 = scalar_select 0, %s11, %s9
  $region1: #{tpu_custom_call.1} parent=0
    #allocation2 [shape = 'u8[524288]{0}', space=vmem, size = 0x80000, scoped, tag = 'input window, operand 0']
    #allocation3 [shape = 's32[2]{0}', space=sflag, size = 0x8, scoped, tag = 'scoped memory for tpu_custom_call.1']
    #allocation4 [shape = 's32[2]{0}', space=sflag, size = 0x8, scoped, tag = 'scoped memory for tpu_custom_call.1']
    #allocation5 [shape = 'u8[131072]{0}', space=vmem, size = 0x20000, scoped, tag = 'input window, operand 1, single buffered']
    #allocation6 [shape = 's32[1]{0}', space=sflag, size = 0x4, scoped, tag = 'scoped memory for tpu_custom_call.1']
    #allocation7 [shape = 'u8[131072]{0}', space=vmem, size = 0x20000, scoped, tag = 'input window, operand 3, single buffered']
    #allocation8 [shape = 'u8[131072]{0}', space=vmem, size = 0x20000, scoped, tag = 'input window, operand 5, single buffered']
    #allocation9 [shape = 's32[1]{0}', space=sflag, size = 0x4, scoped, tag = 'scoped memory for tpu_custom_call.1']
    #allocation10 [shape = 'u8[131072]{0}', space=vmem, size = 0x20000, scoped, tag = 'output window, operand 0']
    %13 = vsyncpa [#allocation3], 0
    %s14 = scalar_lea.sflag [#allocation3], 1
    %15 = vsyncpa %s14, 0
    %16 = vsyncpa [#allocation6], 0
    %17 = vsyncpa [#allocation9], 0
    %18 = vsyncpa [#allocation4], 0
    %s19 = scalar_lea.sflag [#allocation4], 1
    %20 = vsyncpa %s19, 0
    loop: start=0, step=1, limit=4
    $region2: #{tpu_custom_call.1} parent=1 // loop_pre_header
      _
    $region3: #{tpu_custom_call.1} parent=1 // loop_header
      %s22 = sphi 0, %s26
      %p23 = scmp.ge.s32.totalorder %s22, 4
      %s32 = sphi 0, %s34
      %s35 = sphi 0, %s32
      %s36 = sphi 0, %s35
      %s52 = sphi 0, %s36
      %s56 = sphi 0, %s56
      %s58 = sphi 0, %s56
      %s59 = sphi 0, %s58
      %s73 = sphi 0, %s59
      %s77 = sphi 0, %s77
      %s79 = sphi 0, %s77
      %s80 = sphi 0, %s79
      %s94 = sphi 0, %s80
      %s98 = sphi 0, %s98
      %s100 = sphi 0, %s98
      %s101 = sphi 0, %s100
      %s115 = sphi 0, %s101
      %s119 = sphi 0, %s119
      %s121 = sphi 0, %s119
      %s122 = sphi 0, %s121
      %s136 = sphi 0, %s122
      %s140 = sphi 0, %s140
      %s142 = sphi 0, %s140
      %s143 = sphi 0, %s142
      %s157 = sphi 0, %s143
      %s161 = sphi 0, %s161
      %s163 = sphi 0, %s161
      %s164 = sphi 0, %s163
      %s178 = sphi 0, %s164
      %s182 = sphi 0, %s182
      %s184 = sphi 0, %s182
      %s185 = sphi 0, %s184
      %s199 = sphi 0, %s185
      %s205 = sphi 0, %s207
      %s208 = sphi 0, %s205
      %s209 = sphi 0, %s208
      %s225 = sphi 0, %s209
    $region4: #{tpu_custom_call.1} parent=1 // loop_header_branch
      %25 = sbr.rel (%p23) target = $region8
    $region5: #{tpu_custom_call.1} parent=1 // loop_body
      %s27 = ssub.s32 %s22, 1
      %s28 = ssub.s32 %s22, 2
      %s29 = sadd.s32 %s22, 1
      %s30 = ssub.s32 %s22, %s29
      %p31 = scmp.eq.s32.totalorder %s30, 0
      %s33 = sadd.s32 %s32, 1
      %s34 = scalar_select %p31, %s32, %s33
      %p37 = pneg %p31
      %p38 = scmp.eq.s32.totalorder %s22, 1
      %p39 = por %p37, %p38
      %p40 = scmp.ne.s32.totalorder %s32, %s35
      %p41 = scmp.eq.s32.totalorder %s22, 0
      %p42 = por %p40, %p41
      %p43 = scmp.ne.s32.totalorder %s32, %s35
      %p44 = scmp.eq.s32.totalorder %s27, 1
      %p45 = por %p43, %p44
      %p46 = scmp.ne.s32.totalorder %s35, %s36
      %p47 = scmp.eq.s32.totalorder %s27, 0
      %p48 = por %p46, %p47
      %p49 = scmp.ne.s32.totalorder %s35, %s36
      %p50 = scmp.eq.s32.totalorder %s28, 1
      %p51 = por %p49, %p50
      %p53 = scmp.ne.s32.totalorder %s36, %s52
      %p54 = scmp.eq.s32.totalorder %s28, 0
      %p55 = por %p53, %p54
      %s57 = sadd.s32 %s56, 1
      %p60 = scmp.eq.s32.totalorder %s22, 1
      %p61 = scmp.ne.s32.totalorder %s56, %s58
      %p62 = scmp.eq.s32.totalorder %s22, 0
      %p63 = por %p61, %p62
      %p64 = scmp.ne.s32.totalorder %s56, %s58
      %p65 = scmp.eq.s32.totalorder %s27, 1
      %p66 = por %p64, %p65
      %p67 = scmp.ne.s32.totalorder %s58, %s59
      %p68 = scmp.eq.s32.totalorder %s27, 0
      %p69 = por %p67, %p68
      %p70 = scmp.ne.s32.totalorder %s58, %s59
      %p71 = scmp.eq.s32.totalorder %s28, 1
      %p72 = por %p70, %p71
      %p74 = scmp.ne.s32.totalorder %s59, %s73
      %p75 = scmp.eq.s32.totalorder %s28, 0
      %p76 = por %p74, %p75
      %s78 = sadd.s32 %s77, 1
      %p81 = scmp.eq.s32.totalorder %s22, 1
      %p82 = scmp.ne.s32.totalorder %s77, %s79
      %p83 = scmp.eq.s32.totalorder %s22, 0
      %p84 = por %p82, %p83
      %p85 = scmp.ne.s32.totalorder %s77, %s79
      %p86 = scmp.eq.s32.totalorder %s27, 1
      %p87 = por %p85, %p86
      %p88 = scmp.ne.s32.totalorder %s79, %s80
      %p89 = scmp.eq.s32.totalorder %s27, 0
      %p90 = por %p88, %p89
      %p91 = scmp.ne.s32.totalorder %s79, %s80
      %p92 = scmp.eq.s32.totalorder %s28, 1
      %p93 = por %p91, %p92
      %p95 = scmp.ne.s32.totalorder %s80, %s94
      %p96 = scmp.eq.s32.totalorder %s28, 0
      %p97 = por %p95, %p96
      %s99 = sadd.s32 %s98, 1
      %p102 = scmp.eq.s32.totalorder %s22, 1
      %p103 = scmp.ne.s32.totalorder %s98, %s100
      %p104 = scmp.eq.s32.totalorder %s22, 0
      %p105 = por %p103, %p104
      %p106 = scmp.ne.s32.totalorder %s98, %s100
      %p107 = scmp.eq.s32.totalorder %s27, 1
      %p108 = por %p106, %p107
      %p109 = scmp.ne.s32.totalorder %s100, %s101
      %p110 = scmp.eq.s32.totalorder %s27, 0
      %p111 = por %p109, %p110
      %p112 = scmp.ne.s32.totalorder %s100, %s101
      %p113 = scmp.eq.s32.totalorder %s28, 1
      %p114 = por %p112, %p113
      %p116 = scmp.ne.s32.totalorder %s101, %s115
      %p117 = scmp.eq.s32.totalorder %s28, 0
      %p118 = por %p116, %p117
      %s120 = sadd.s32 %s119, 1
      %p123 = scmp.eq.s32.totalorder %s22, 1
      %p124 = scmp.ne.s32.totalorder %s119, %s121
      %p125 = scmp.eq.s32.totalorder %s22, 0
      %p126 = por %p124, %p125
      %p127 = scmp.ne.s32.totalorder %s119, %s121
      %p128 = scmp.eq.s32.totalorder %s27, 1
      %p129 = por %p127, %p128
      %p130 = scmp.ne.s32.totalorder %s121, %s122
      %p131 = scmp.eq.s32.totalorder %s27, 0
      %p132 = por %p130, %p131
      %p133 = scmp.ne.s32.totalorder %s121, %s122
      %p134 = scmp.eq.s32.totalorder %s28, 1
      %p135 = por %p133, %p134
      %p137 = scmp.ne.s32.totalorder %s122, %s136
      %p138 = scmp.eq.s32.totalorder %s28, 0
      %p139 = por %p137, %p138
      %s141 = sadd.s32 %s140, 1
      %p144 = scmp.eq.s32.totalorder %s22, 1
      %p145 = scmp.ne.s32.totalorder %s140, %s142
      %p146 = scmp.eq.s32.totalorder %s22, 0
      %p147 = por %p145, %p146
      %p148 = scmp.ne.s32.totalorder %s140, %s142
      %p149 = scmp.eq.s32.totalorder %s27, 1
      %p150 = por %p148, %p149
      %p151 = scmp.ne.s32.totalorder %s142, %s143
      %p152 = scmp.eq.s32.totalorder %s27, 0
      %p153 = por %p151, %p152
      %p154 = scmp.ne.s32.totalorder %s142, %s143
      %p155 = scmp.eq.s32.totalorder %s28, 1
      %p156 = por %p154, %p155
      %p158 = scmp.ne.s32.totalorder %s143, %s157
      %p159 = scmp.eq.s32.totalorder %s28, 0
      %p160 = por %p158, %p159
      %s162 = sadd.s32 %s161, 1
      %p165 = scmp.eq.s32.totalorder %s22, 1
      %p166 = scmp.ne.s32.totalorder %s161, %s163
      %p167 = scmp.eq.s32.totalorder %s22, 0
      %p168 = por %p166, %p167
      %p169 = scmp.ne.s32.totalorder %s161, %s163
      %p170 = scmp.eq.s32.totalorder %s27, 1
      %p171 = por %p169, %p170
      %p172 = scmp.ne.s32.totalorder %s163, %s164
      %p173 = scmp.eq.s32.totalorder %s27, 0
      %p174 = por %p172, %p173
      %p175 = scmp.ne.s32.totalorder %s163, %s164
      %p176 = scmp.eq.s32.totalorder %s28, 1
      %p177 = por %p175, %p176
      %p179 = scmp.ne.s32.totalorder %s164, %s178
      %p180 = scmp.eq.s32.totalorder %s28, 0
      %p181 = por %p179, %p180
      %s183 = sadd.s32 %s182, 1
      %p186 = scmp.eq.s32.totalorder %s22, 1
      %p187 = scmp.ne.s32.totalorder %s182, %s184
      %p188 = scmp.eq.s32.totalorder %s22, 0
      %p189 = por %p187, %p188
      %p190 = scmp.ne.s32.totalorder %s182, %s184
      %p191 = scmp.eq.s32.totalorder %s27, 1
      %p192 = por %p190, %p191
      %p193 = scmp.ne.s32.totalorder %s184, %s185
      %p194 = scmp.eq.s32.totalorder %s27, 0
      %p195 = por %p193, %p194
      %p196 = scmp.ne.s32.totalorder %s184, %s185
      %p197 = scmp.eq.s32.totalorder %s28, 1
      %p198 = por %p196, %p197
      %p200 = scmp.ne.s32.totalorder %s185, %s199
      %p201 = scmp.eq.s32.totalorder %s28, 0
      %p202 = por %p200, %p201
      %s203 = ssub.s32 %s22, %s29
      %p204 = scmp.eq.s32.totalorder %s203, 0
      %s206 = sadd.s32 %s205, 1
      %s207 = scalar_select %p204, %s205, %s206
      %p210 = pneg %p204
      %p211 = scmp.eq.s32.totalorder %s22, 1
      %p212 = por %p210, %p211
      %p213 = scmp.ne.s32.totalorder %s205, %s208
      %p214 = scmp.eq.s32.totalorder %s22, 0
      %p215 = por %p213, %p214
      %p216 = scmp.ne.s32.totalorder %s205, %s208
      %p217 = scmp.eq.s32.totalorder %s27, 1
      %p218 = por %p216, %p217
      %p219 = scmp.ne.s32.totalorder %s208, %s209
      %p220 = scmp.eq.s32.totalorder %s27, 0
      %p221 = por %p219, %p220
      %p222 = scmp.ne.s32.totalorder %s208, %s209
      %p223 = scmp.eq.s32.totalorder %s28, 1
      %p224 = por %p222, %p223
      %p226 = scmp.ne.s32.totalorder %s209, %s225
      %p227 = scmp.eq.s32.totalorder %s28, 0
      %p228 = por %p226, %p227
      %p229 = scmp.le.s32.totalorder 1, %s22
      %p230 = scmp.lt.s32.totalorder %s22, 3
      %p231 = pnand %p229, %p230
      %p232 = pneg %p231
      // Predicated region
      $region9: #{tpu_custom_call.1} parent=5 // pred_check
        _
      $region10: #{tpu_custom_call.1} parent=5 // pred_check_branch
        %234 = sbr.rel (%p231) target = $region12
      $region11: #{tpu_custom_call.1} parent=5 // pred_region
        %s235 = ssub.s32 %s22, 1
        // Predicated region
        $region13: #{tpu_custom_call.1} parent=11 // pred_check
          %p236 = pneg %p69
        $region14: #{tpu_custom_call.1} parent=11 // pred_check_branch
          %238 = sbr.rel (%p236) target = $region16
        $region15: #{tpu_custom_call.1} parent=11 // pred_region
          %s240 = ssub.s32 4096, 4096
          %241 = vsyncadd [#allocation6], %s240
          %s242 = sshll.u32 [#allocation5], 4
          %s243 = int_to_ptr.vmem [resolvable:$true] %s242
          %248 = dma.hbm_to_vmem [thread:$0]  %s1, 4096, %s243, [#allocation6], 256, 256, 16
        $region16: #{tpu_custom_call.1} parent=11 // pred_fallthru
          _
        // Predicated region
        $region17: #{tpu_custom_call.1} parent=11 // pred_check
          %p249 = pneg %p90
        $region18: #{tpu_custom_call.1} parent=11 // pred_check_branch
          %251 = sbr.rel (%p249) target = $region20
        $region19: #{tpu_custom_call.1} parent=11 // pred_region
          _
        $region20: #{tpu_custom_call.1} parent=11 // pred_fallthru
          _
        // Predicated region
        $region21: #{tpu_custom_call.1} parent=11 // pred_check
          %p252 = pneg %p111
        $region22: #{tpu_custom_call.1} parent=11 // pred_check_branch
          %254 = sbr.rel (%p252) target = $region24
        $region23: #{tpu_custom_call.1} parent=11 // pred_region
          %s256 = ssub.s32 4096, 4096
          %257 = vsyncadd [#allocation6], %s256
          %s258 = sshll.u32 [#allocation7], 4
          %s259 = int_to_ptr.vmem [resolvable:$true] %s258
          %264 = dma.hbm_to_vmem [thread:$0]  %s3, 4096, %s259, [#allocation6], 256, 256, 16
        $region24: #{tpu_custom_call.1} parent=11 // pred_fallthru
          _
        // Predicated region
        $region25: #{tpu_custom_call.1} parent=11 // pred_check
          %p265 = pneg %p132
        $region26: #{tpu_custom_call.1} parent=11 // pred_check_branch
          %267 = sbr.rel (%p265) target = $region28
        $region27: #{tpu_custom_call.1} parent=11 // pred_region
          _
        $region28: #{tpu_custom_call.1} parent=11 // pred_fallthru
          _
        // Predicated region
        $region29: #{tpu_custom_call.1} parent=11 // pred_check
          %p268 = pneg %p153
        $region30: #{tpu_custom_call.1} parent=11 // pred_check_branch
          %270 = sbr.rel (%p268) target = $region32
        $region31: #{tpu_custom_call.1} parent=11 // pred_region
          %s272 = ssub.s32 4096, 4096
          %273 = vsyncadd [#allocation9], %s272
          %s274 = sshll.u32 [#allocation8], 4
          %s275 = int_to_ptr.vmem [resolvable:$true] %s274
          %280 = dma.hbm_to_vmem [thread:$0]  %s5, 4096, %s275, [#allocation9], 128, 128, 8
        $region32: #{tpu_custom_call.1} parent=11 // pred_fallthru
          _
        // Predicated region
        $region33: #{tpu_custom_call.1} parent=11 // pred_check
          %p281 = pneg %p174
        $region34: #{tpu_custom_call.1} parent=11 // pred_check_branch
          %283 = sbr.rel (%p281) target = $region36
        $region35: #{tpu_custom_call.1} parent=11 // pred_region
          _
        $region36: #{tpu_custom_call.1} parent=11 // pred_fallthru
          _
        // Predicated region
        $region37: #{tpu_custom_call.1} parent=11 // pred_check
          %p284 = pneg %p195
        $region38: #{tpu_custom_call.1} parent=11 // pred_check_branch
          %286 = sbr.rel (%p284) target = $region40
        $region39: #{tpu_custom_call.1} parent=11 // pred_region
          _
        $region40: #{tpu_custom_call.1} parent=11 // pred_fallthru
          _
      $region12: #{tpu_custom_call.1} parent=5 // pred_fallthru
        _
      %p287 = scmp.lt.s32.totalorder %s22, 2
      // Predicated region
      $region41: #{tpu_custom_call.1} parent=5 // pred_check
        %p288 = pneg %p287
      $region42: #{tpu_custom_call.1} parent=5 // pred_check_branch
        %290 = sbr.rel (%p288) target = $region44
      $region43: #{tpu_custom_call.1} parent=5 // pred_region
        // Predicated region
        $region45: #{tpu_custom_call.1} parent=43 // pred_check
          %p291 = pneg %p42
        $region46: #{tpu_custom_call.1} parent=43 // pred_check_branch
          %293 = sbr.rel (%p291) target = $region48
        $region47: #{tpu_custom_call.1} parent=43 // pred_region
          %s294 = sand.u32 %s32, 1
          %s295 = scalar_lea.sflag [#allocation3], %s294
          %s296 = sand.u32 %s32, 1
          %s297 = smul.addr %s296, 512
          %s298 = scalar_lea.vmem [#allocation2], %s297
          %s299 = smul.u32 64, %s22
          %s301 = ssub.s32 8192, 8192
          %302 = vsyncadd %s295, %s301
          %s303 = smul.addr %s299, 128
          %s304 = scalar_lea.hbm %s0, %s303
          %s305 = sshll.u32 %s298, 4
          %s306 = int_to_ptr.vmem [resolvable:$true] %s305
          %311 = dma.hbm_to_vmem [thread:$0]  %s304, 8192, %s306, %s295, 128, 128, 8
        $region48: #{tpu_custom_call.1} parent=43 // pred_fallthru
          _
      $region44: #{tpu_custom_call.1} parent=5 // pred_fallthru
        _
      %p312 = scmp.le.s32.totalorder 1, %s22
      %p313 = scmp.lt.s32.totalorder %s22, 3
      %p314 = pnand %p312, %p313
      %p315 = pneg %p314
      // Predicated region
      $region49: #{tpu_custom_call.1} parent=5 // pred_check
        _
      $region50: #{tpu_custom_call.1} parent=5 // pred_check_branch
        %317 = sbr.rel (%p314) target = $region52
      $region51: #{tpu_custom_call.1} parent=5 // pred_region
        %s318 = ssub.s32 %s22, 1
        %s319 = sand.u32 %s35, 1
        %s320 = scalar_lea.sflag [#allocation3], %s319
        %s321 = sand.u32 %s35, 1
        %s322 = smul.addr %s321, 512
        %s323 = scalar_lea.vmem [#allocation2], %s322
        // Predicated region
        $region53: #{tpu_custom_call.1} parent=51 // pred_check
          %p324 = pneg %p48
        $region54: #{tpu_custom_call.1} parent=51 // pred_check_branch
          %326 = sbr.rel (%p324) target = $region56
        $region55: #{tpu_custom_call.1} parent=51 // pred_region
          %327 = dma.done %s320, 8192
        $region56: #{tpu_custom_call.1} parent=51 // pred_fallthru
          _
        // Predicated region
        $region57: #{tpu_custom_call.1} parent=51 // pred_check
          %p328 = pneg %p69
        $region58: #{tpu_custom_call.1} parent=51 // pred_check_branch
          %330 = sbr.rel (%p328) target = $region60
        $region59: #{tpu_custom_call.1} parent=51 // pred_region
          %331 = dma.done [#allocation6], 4096
        $region60: #{tpu_custom_call.1} parent=51 // pred_fallthru
          _
        // Predicated region
        $region61: #{tpu_custom_call.1} parent=51 // pred_check
          %p332 = pneg %p111
        $region62: #{tpu_custom_call.1} parent=51 // pred_check_branch
          %334 = sbr.rel (%p332) target = $region64
        $region63: #{tpu_custom_call.1} parent=51 // pred_region
          %335 = dma.done [#allocation6], 4096
        $region64: #{tpu_custom_call.1} parent=51 // pred_fallthru
          _
        // Predicated region
        $region65: #{tpu_custom_call.1} parent=51 // pred_check
          %p336 = pneg %p153
        $region66: #{tpu_custom_call.1} parent=51 // pred_check_branch
          %338 = sbr.rel (%p336) target = $region68
        $region67: #{tpu_custom_call.1} parent=51 // pred_region
          %339 = dma.done [#allocation9], 4096
        $region68: #{tpu_custom_call.1} parent=51 // pred_fallthru
          _
        %s340 = sand.u32 %s35, 1
        %s341 = scalar_lea.sflag [#allocation3], %s340
        %s342 = sand.u32 %s35, 1
        %s343 = smul.addr %s342, 512
        %s344 = scalar_lea.vmem [#allocation2], %s343
        %p345 = pneg %p48
        %p346 = pneg %p45
        %p347 = pneg %p69
        %p348 = pneg %p66
        %p349 = pneg %p90
        %p350 = pneg %p87
        %p351 = pneg %p111
        %p352 = pneg %p108
        %p353 = pneg %p132
        %p354 = pneg %p129
        %p355 = pneg %p153
        %p356 = pneg %p150
        %p357 = pneg %p174
        %p358 = pneg %p171
        %p359 = pneg %p195
        %p360 = pneg %p192
        %p361 = pneg %p221
        %p362 = pneg %p218
        %s363 = sand.u32 %s208, 1
        %s364 = scalar_lea.sflag [#allocation4], %s363
        %s365 = sand.u32 %s208, 1
        %s366 = smul.addr %s365, 128
        %s367 = scalar_lea.vmem [#allocation10], %s366
        %s368 = smul.u32 64, %s27
        %s369 = smul.u32 16, %s27
        %v371 = vld [vmem:[%s323] ss:$4 sm:$0xff]
        %s372 = scalar_lea.vmem %s323, 32 [#allocation2]
        %v373 = vld [vmem:[%s372] ss:$4 sm:$0xff]
        %s374 = scalar_lea.vmem %s323, 64 [#allocation2]
        %v375 = vld [vmem:[%s374] ss:$4 sm:$0xff]
        %s376 = scalar_lea.vmem %s323, 96 [#allocation2]
        %v377 = vld [vmem:[%s376] ss:$4 sm:$0xff]
        %s378 = scalar_lea.vmem %s323, 128 [#allocation2]
        %v379 = vld [vmem:[%s378] ss:$4 sm:$0xff]
        %s380 = scalar_lea.vmem %s323, 160 [#allocation2]
        %v381 = vld [vmem:[%s380] ss:$4 sm:$0xff]
        %s382 = scalar_lea.vmem %s323, 192 [#allocation2]
        %v383 = vld [vmem:[%s382] ss:$4 sm:$0xff]
        %s384 = scalar_lea.vmem %s323, 224 [#allocation2]
        %v385 = vld [vmem:[%s384] ss:$4 sm:$0xff]
        %s386 = scalar_lea.vmem %s323, 256 [#allocation2]
        %v387 = vld [vmem:[%s386] ss:$4 sm:$0xff]
        %s388 = scalar_lea.vmem %s323, 288 [#allocation2]
        %v389 = vld [vmem:[%s388] ss:$4 sm:$0xff]
        %s390 = scalar_lea.vmem %s323, 320 [#allocation2]
        %v391 = vld [vmem:[%s390] ss:$4 sm:$0xff]
        %s392 = scalar_lea.vmem %s323, 352 [#allocation2]
        %v393 = vld [vmem:[%s392] ss:$4 sm:$0xff]
        %s394 = scalar_lea.vmem %s323, 384 [#allocation2]
        %v395 = vld [vmem:[%s394] ss:$4 sm:$0xff]
        %s396 = scalar_lea.vmem %s323, 416 [#allocation2]
        %v397 = vld [vmem:[%s396] ss:$4 sm:$0xff]
        %s398 = scalar_lea.vmem %s323, 448 [#allocation2]
        %v399 = vld [vmem:[%s398] ss:$4 sm:$0xff]
        %s400 = scalar_lea.vmem %s323, 480 [#allocation2]
        %v401 = vld [vmem:[%s400] ss:$4 sm:$0xff]
        %s402 = scalar_lea.vmem %s323, 1 [#allocation2]
        %v403 = vld [vmem:[%s402] ss:$4 sm:$0xff]
        %s404 = scalar_lea.vmem %s323, 33 [#allocation2]
        %v405 = vld [vmem:[%s404] ss:$4 sm:$0xff]
        %s406 = scalar_lea.vmem %s323, 65 [#allocation2]
        %v407 = vld [vmem:[%s406] ss:$4 sm:$0xff]
        %s408 = scalar_lea.vmem %s323, 97 [#allocation2]
        %v409 = vld [vmem:[%s408] ss:$4 sm:$0xff]
        %s410 = scalar_lea.vmem %s323, 129 [#allocation2]
        %v411 = vld [vmem:[%s410] ss:$4 sm:$0xff]
        %s412 = scalar_lea.vmem %s323, 161 [#allocation2]
        %v413 = vld [vmem:[%s412] ss:$4 sm:$0xff]
        %s414 = scalar_lea.vmem %s323, 193 [#allocation2]
        %v415 = vld [vmem:[%s414] ss:$4 sm:$0xff]
        %s416 = scalar_lea.vmem %s323, 225 [#allocation2]
        %v417 = vld [vmem:[%s416] ss:$4 sm:$0xff]
        %s418 = scalar_lea.vmem %s323, 257 [#allocation2]
        %v419 = vld [vmem:[%s418] ss:$4 sm:$0xff]
        %s420 = scalar_lea.vmem %s323, 289 [#allocation2]
        %v421 = vld [vmem:[%s420] ss:$4 sm:$0xff]
        %s422 = scalar_lea.vmem %s323, 321 [#allocation2]
        %v423 = vld [vmem:[%s422] ss:$4 sm:$0xff]
        %s424 = scalar_lea.vmem %s323, 353 [#allocation2]
        %v425 = vld [vmem:[%s424] ss:$4 sm:$0xff]
        %s426 = scalar_lea.vmem %s323, 385 [#allocation2]
        %v427 = vld [vmem:[%s426] ss:$4 sm:$0xff]
        %s428 = scalar_lea.vmem %s323, 417 [#allocation2]
        %v429 = vld [vmem:[%s428] ss:$4 sm:$0xff]
        %s430 = scalar_lea.vmem %s323, 449 [#allocation2]
        %v431 = vld [vmem:[%s430] ss:$4 sm:$0xff]
        %s432 = scalar_lea.vmem %s323, 481 [#allocation2]
        %v433 = vld [vmem:[%s432] ss:$4 sm:$0xff]
        %s434 = scalar_lea.vmem %s323, 2 [#allocation2]
        %v435 = vld [vmem:[%s434] ss:$4 sm:$0xff]
        %s436 = scalar_lea.vmem %s323, 34 [#allocation2]
        %v437 = vld [vmem:[%s436] ss:$4 sm:$0xff]
        %s438 = scalar_lea.vmem %s323, 66 [#allocation2]
        %v439 = vld [vmem:[%s438] ss:$4 sm:$0xff]
        %s440 = scalar_lea.vmem %s323, 98 [#allocation2]
        %v441 = vld [vmem:[%s440] ss:$4 sm:$0xff]
        %s442 = scalar_lea.vmem %s323, 130 [#allocation2]
        %v443 = vld [vmem:[%s442] ss:$4 sm:$0xff]
        %s444 = scalar_lea.vmem %s323, 162 [#allocation2]
        %v445 = vld [vmem:[%s444] ss:$4 sm:$0xff]
        %s446 = scalar_lea.vmem %s323, 194 [#allocation2]
        %v447 = vld [vmem:[%s446] ss:$4 sm:$0xff]
        %s448 = scalar_lea.vmem %s323, 226 [#allocation2]
        %v449 = vld [vmem:[%s448] ss:$4 sm:$0xff]
        %s450 = scalar_lea.vmem %s323, 258 [#allocation2]
        %v451 = vld [vmem:[%s450] ss:$4 sm:$0xff]
        %s452 = scalar_lea.vmem %s323, 290 [#allocation2]
        %v453 = vld [vmem:[%s452] ss:$4 sm:$0xff]
        %s454 = scalar_lea.vmem %s323, 322 [#allocation2]
        %v455 = vld [vmem:[%s454] ss:$4 sm:$0xff]
        %s456 = scalar_lea.vmem %s323, 354 [#allocation2]
        %v457 = vld [vmem:[%s456] ss:$4 sm:$0xff]
        %s458 = scalar_lea.vmem %s323, 386 [#allocation2]
        %v459 = vld [vmem:[%s458] ss:$4 sm:$0xff]
        %s460 = scalar_lea.vmem %s323, 418 [#allocation2]
        %v461 = vld [vmem:[%s460] ss:$4 sm:$0xff]
        %s462 = scalar_lea.vmem %s323, 450 [#allocation2]
        %v463 = vld [vmem:[%s462] ss:$4 sm:$0xff]
        %s464 = scalar_lea.vmem %s323, 482 [#allocation2]
        %v465 = vld [vmem:[%s464] ss:$4 sm:$0xff]
        %s466 = scalar_lea.vmem %s323, 3 [#allocation2]
        %v467 = vld [vmem:[%s466] ss:$4 sm:$0xff]
        %s468 = scalar_lea.vmem %s323, 35 [#allocation2]
        %v469 = vld [vmem:[%s468] ss:$4 sm:$0xff]
        %s470 = scalar_lea.vmem %s323, 67 [#allocation2]
        %v471 = vld [vmem:[%s470] ss:$4 sm:$0xff]
        %s472 = scalar_lea.vmem %s323, 99 [#allocation2]
        %v473 = vld [vmem:[%s472] ss:$4 sm:$0xff]
        %s474 = scalar_lea.vmem %s323, 131 [#allocation2]
        %v475 = vld [vmem:[%s474] ss:$4 sm:$0xff]
        %s476 = scalar_lea.vmem %s323, 163 [#allocation2]
        %v477 = vld [vmem:[%s476] ss:$4 sm:$0xff]
        %s478 = scalar_lea.vmem %s323, 195 [#allocation2]
        %v479 = vld [vmem:[%s478] ss:$4 sm:$0xff]
        %s480 = scalar_lea.vmem %s323, 227 [#allocation2]
        %v481 = vld [vmem:[%s480] ss:$4 sm:$0xff]
        %s482 = scalar_lea.vmem %s323, 259 [#allocation2]
        %v483 = vld [vmem:[%s482] ss:$4 sm:$0xff]
        %s484 = scalar_lea.vmem %s323, 291 [#allocation2]
        %v485 = vld [vmem:[%s484] ss:$4 sm:$0xff]
        %s486 = scalar_lea.vmem %s323, 323 [#allocation2]
        %v487 = vld [vmem:[%s486] ss:$4 sm:$0xff]
        %s488 = scalar_lea.vmem %s323, 355 [#allocation2]
        %v489 = vld [vmem:[%s488] ss:$4 sm:$0xff]
        %s490 = scalar_lea.vmem %s323, 387 [#allocation2]
        %v491 = vld [vmem:[%s490] ss:$4 sm:$0xff]
        %s492 = scalar_lea.vmem %s323, 419 [#allocation2]
        %v493 = vld [vmem:[%s492] ss:$4 sm:$0xff]
        %s494 = scalar_lea.vmem %s323, 451 [#allocation2]
        %v495 = vld [vmem:[%s494] ss:$4 sm:$0xff]
        %s496 = scalar_lea.vmem %s323, 483 [#allocation2]
        %v497 = vld [vmem:[%s496] ss:$4 sm:$0xff]
        %v498 = vld [vmem:[#allocation5] sm:$0xff]
        %v499 = vld [vmem:[#allocation5 + $0x8] sm:$0xff]
        %v500 = vld [vmem:[#allocation5 + $0x10] sm:$0xff]
        %v501 = vld [vmem:[#allocation5 + $0x18] sm:$0xff]
        %v502 = vld [vmem:[#allocation5 + $0x20] sm:$0xff]
        %v503 = vld [vmem:[#allocation5 + $0x28] sm:$0xff]
        %v504 = vld [vmem:[#allocation5 + $0x30] sm:$0xff]
        %v505 = vld [vmem:[#allocation5 + $0x38] sm:$0xff]
        %v506 = vld [vmem:[#allocation5 + $0x40] sm:$0xff]
        %v507 = vld [vmem:[#allocation5 + $0x48] sm:$0xff]
        %v508 = vld [vmem:[#allocation5 + $0x50] sm:$0xff]
        %v509 = vld [vmem:[#allocation5 + $0x58] sm:$0xff]
        %v510 = vld [vmem:[#allocation5 + $0x60] sm:$0xff]
        %v511 = vld [vmem:[#allocation5 + $0x68] sm:$0xff]
        %v512 = vld [vmem:[#allocation5 + $0x70] sm:$0xff]
        %v513 = vld [vmem:[#allocation5 + $0x78] sm:$0xff]
        %v514 = vld [vmem:[#allocation5 + $0x80] sm:$0xff]
        %v515 = vld [vmem:[#allocation5 + $0x88] sm:$0xff]
        %v516 = vld [vmem:[#allocation5 + $0x90] sm:$0xff]
        %v517 = vld [vmem:[#allocation5 + $0x98] sm:$0xff]
        %v518 = vld [vmem:[#allocation5 + $0xa0] sm:$0xff]
        %v519 = vld [vmem:[#allocation5 + $0xa8] sm:$0xff]
        %v520 = vld [vmem:[#allocation5 + $0xb0] sm:$0xff]
        %v521 = vld [vmem:[#allocation5 + $0xb8] sm:$0xff]
        %v522 = vld [vmem:[#allocation5 + $0xc0] sm:$0xff]
        %v523 = vld [vmem:[#allocation5 + $0xc8] sm:$0xff]
        %v524 = vld [vmem:[#allocation5 + $0xd0] sm:$0xff]
        %v525 = vld [vmem:[#allocation5 + $0xd8] sm:$0xff]
        %v526 = vld [vmem:[#allocation5 + $0xe0] sm:$0xff]
        %v527 = vld [vmem:[#allocation5 + $0xe8] sm:$0xff]
        %v528 = vld [vmem:[#allocation5 + $0xf0] sm:$0xff]
        %v529 = vld [vmem:[#allocation5 + $0xf8] sm:$0xff]
        %v530 = vpack.c.bf16 %v500, %v498
        %v531 = vpack.c.bf16 %v501, %v499
        %v532 = vpack.c.bf16 %v504, %v502
        %v533 = vpack.c.bf16 %v505, %v503
        %v534 = vpack.c.bf16 %v508, %v506
        %v535 = vpack.c.bf16 %v509, %v507
        %v536 = vpack.c.bf16 %v512, %v510
        %v537 = vpack.c.bf16 %v513, %v511
        %v538 = vpack.c.bf16 %v516, %v514
        %v539 = vpack.c.bf16 %v517, %v515
        %v540 = vpack.c.bf16 %v520, %v518
        %v541 = vpack.c.bf16 %v521, %v519
        %v542 = vpack.c.bf16 %v524, %v522
        %v543 = vpack.c.bf16 %v525, %v523
        %v544 = vpack.c.bf16 %v528, %v526
        %v545 = vpack.c.bf16 %v529, %v527
        %v546 = vpack.c.bf16 %v373, %v371
        %v547 = vpack.c.bf16 %v377, %v375
        %v548 = vpack.c.bf16 %v381, %v379
        %v549 = vpack.c.bf16 %v385, %v383
        %v550 = vpack.c.bf16 %v389, %v387
        %v551 = vpack.c.bf16 %v393, %v391
        %v552 = vpack.c.bf16 %v397, %v395
        %v553 = vpack.c.bf16 %v401, %v399
        %v554 = vld [vmem:[%s2] sm:$0x3]
        %v556 = vlaneseq
        %v557 = vshrl.u32 %v556, 7
        %v558 = vsub.s32 0, %v557
        %v559 = vrot.slane %v554, %v558
        %v560 = vlaneseq
        %v561 = vshrl.u32 %v560, 7
        %v562 = vsub.s32 1, %v561
        %v563 = vrot.slane %v554, %v562
        %566 = vmatprep.subr.bf16.mxu0 %v545
        %567 = vmatpush1.bf16.msra.mxu0 %v544
        %568 = vmatprep.subr.bf16.mxu0 %v543
        %569 = vmatpush1.bf16.msra.mxu0 %v542
        %570 = vmatprep.subr.bf16.mxu0 %v541
        %571 = vmatpush1.bf16.msra.mxu0 %v540
        %572 = vmatprep.subr.bf16.mxu0 %v539
        %573 = vmatpush1.bf16.msra.mxu0 %v538
        %574 = vmatprep.subr.bf16.mxu0 %v537
        %575 = vmatpush1.bf16.msra.mxu0 %v536
        %576 = vmatprep.subr.bf16.mxu0 %v535
        %577 = vmatpush1.bf16.msra.mxu0 %v534
        %578 = vmatprep.subr.bf16.mxu0 %v533
        %579 = vmatpush1.bf16.msra.mxu0 %v532
        %580 = vmatprep.subr.bf16.mxu0 %v531
        %581 = vmatpush1.bf16.msra.mxu0 %v530
        %582 = vmatprep.subr.bf16.mxu0 0
        %583 = vmatpush2.bf16.msra.mxu0 0
        %584 = vmatprep.subr.bf16.mxu0 0
        %585 = vmatpush2.bf16.msra.mxu0 0
        %586 = vmatprep.subr.bf16.mxu0 0
        %587 = vmatpush2.bf16.msra.mxu0 0
        %588 = vmatprep.subr.bf16.mxu0 0
        %589 = vmatpush2.bf16.msra.mxu0 0
        %590 = vmatprep.subr.bf16.mxu0 0
        %591 = vmatpush2.bf16.msra.mxu0 0
        %592 = vmatprep.subr.bf16.mxu0 0
        %593 = vmatpush2.bf16.msra.mxu0 0
        %594 = vmatprep.subr.bf16.mxu0 0
        %595 = vmatpush2.bf16.msra.mxu0 0
        %596 = vmatprep.subr.bf16.mxu0 0
        %597 = vmatpush2.bf16.msra.mxu0 0
        %598 = vmatprep.mubr.bf16.mxu0 0
        %599 = vmatmul.mubr.bf16.gmra.mxu0 %v546
        %v600 = vpop.f32.mrf.mxu0
        %v601 = vadd.f32 %v559, %v600
        %v602 = vpop.f32.mrf.mxu0
        %v603 = vadd.f32 %v563, %v602
        %v604 = vpop.f32.mrf.mxu0
        %v605 = vadd.f32 %v559, %v604
        %v606 = vpop.f32.mrf.mxu0
        %v607 = vadd.f32 %v563, %v606
        %608 = vmatprep.mubr.bf16.mxu0 0
        %609 = vmatmul.mubr.bf16.gmra.mxu0 %v547
        %v610 = vpop.f32.mrf.mxu0
        %v611 = vadd.f32 %v559, %v610
        %v612 = vpop.f32.mrf.mxu0
        %v613 = vadd.f32 %v563, %v612
        %v614 = vpop.f32.mrf.mxu0
        %v615 = vadd.f32 %v559, %v614
        %v616 = vpop.f32.mrf.mxu0
        %v617 = vadd.f32 %v563, %v616
        %618 = vmatprep.mubr.bf16.mxu0 0
        %619 = vmatmul.mubr.bf16.gmra.mxu0 %v548
        %v620 = vpop.f32.mrf.mxu0
        %v621 = vadd.f32 %v559, %v620
        %v622 = vpop.f32.mrf.mxu0
        %v623 = vadd.f32 %v563, %v622
        %v624 = vpop.f32.mrf.mxu0
        %v625 = vadd.f32 %v559, %v624
        %v626 = vpop.f32.mrf.mxu0
        %v627 = vadd.f32 %v563, %v626
        %628 = vmatprep.mubr.bf16.mxu0 0
        %629 = vmatmul.mubr.bf16.gmra.mxu0 %v549
        %v630 = vpop.f32.mrf.mxu0
        %v631 = vadd.f32 %v559, %v630
        %v632 = vpop.f32.mrf.mxu0
        %v633 = vadd.f32 %v563, %v632
        %v634 = vpop.f32.mrf.mxu0
        %v635 = vadd.f32 %v559, %v634
        %v636 = vpop.f32.mrf.mxu0
        %v637 = vadd.f32 %v563, %v636
        %638 = vmatprep.mubr.bf16.mxu0 0
        %639 = vmatmul.mubr.bf16.gmra.mxu0 %v550
        %v640 = vpop.f32.mrf.mxu0
        %v641 = vadd.f32 %v559, %v640
        %v642 = vpop.f32.mrf.mxu0
        %v643 = vadd.f32 %v563, %v642
        %v644 = vpop.f32.mrf.mxu0
        %v645 = vadd.f32 %v559, %v644
        %v646 = vpop.f32.mrf.mxu0
        %v647 = vadd.f32 %v563, %v646
        %648 = vmatprep.mubr.bf16.mxu0 0
        %649 = vmatmul.mubr.bf16.gmra.mxu0 %v551
        %v650 = vpop.f32.mrf.mxu0
        %v651 = vadd.f32 %v559, %v650
        %v652 = vpop.f32.mrf.mxu0
        %v653 = vadd.f32 %v563, %v652
        %v654 = vpop.f32.mrf.mxu0
        %v655 = vadd.f32 %v559, %v654
        %v656 = vpop.f32.mrf.mxu0
        %v657 = vadd.f32 %v563, %v656
        %658 = vmatprep.mubr.bf16.mxu0 0
        %659 = vmatmul.mubr.bf16.gmra.mxu0 %v552
        %v660 = vpop.f32.mrf.mxu0
        %v661 = vadd.f32 %v559, %v660
        %v662 = vpop.f32.mrf.mxu0
        %v663 = vadd.f32 %v563, %v662
        %v664 = vpop.f32.mrf.mxu0
        %v665 = vadd.f32 %v559, %v664
        %v666 = vpop.f32.mrf.mxu0
        %v667 = vadd.f32 %v563, %v666
        %668 = vmatprep.mubr.bf16.mxu0 0
        %669 = vmatmul.mubr.bf16.gmra.mxu0 %v553
        %v670 = vpop.f32.mrf.mxu0
        %v671 = vadd.f32 %v559, %v670
        %v672 = vpop.f32.mrf.mxu0
        %v673 = vadd.f32 %v563, %v672
        %v674 = vpop.f32.mrf.mxu0
        %v675 = vadd.f32 %v559, %v674
        %v676 = vpop.f32.mrf.mxu0
        %v677 = vadd.f32 %v563, %v676
        %678 = vdwg.mxu0
        %v679 = vld [vmem:[#allocation7] sm:$0xff]
        %v680 = vld [vmem:[#allocation7 + $0x8] sm:$0xff]
        %v681 = vld [vmem:[#allocation7 + $0x10] sm:$0xff]
        %v682 = vld [vmem:[#allocation7 + $0x18] sm:$0xff]
        %v683 = vld [vmem:[#allocation7 + $0x20] sm:$0xff]
        %v684 = vld [vmem:[#allocation7 + $0x28] sm:$0xff]
        %v685 = vld [vmem:[#allocation7 + $0x30] sm:$0xff]
        %v686 = vld [vmem:[#allocation7 + $0x38] sm:$0xff]
        %v687 = vld [vmem:[#allocation7 + $0x40] sm:$0xff]
        %v688 = vld [vmem:[#allocation7 + $0x48] sm:$0xff]
        %v689 = vld [vmem:[#allocation7 + $0x50] sm:$0xff]
        %v690 = vld [vmem:[#allocation7 + $0x58] sm:$0xff]
        %v691 = vld [vmem:[#allocation7 + $0x60] sm:$0xff]
        %v692 = vld [vmem:[#allocation7 + $0x68] sm:$0xff]
        %v693 = vld [vmem:[#allocation7 + $0x70] sm:$0xff]
        %v694 = vld [vmem:[#allocation7 + $0x78] sm:$0xff]
        %v695 = vld [vmem:[#allocation7 + $0x80] sm:$0xff]
        %v696 = vld [vmem:[#allocation7 + $0x88] sm:$0xff]
        %v697 = vld [vmem:[#allocation7 + $0x90] sm:$0xff]
        %v698 = vld [vmem:[#allocation7 + $0x98] sm:$0xff]
        %v699 = vld [vmem:[#allocation7 + $0xa0] sm:$0xff]
        %v700 = vld [vmem:[#allocation7 + $0xa8] sm:$0xff]
        %v701 = vld [vmem:[#allocation7 + $0xb0] sm:$0xff]
        %v702 = vld [vmem:[#allocation7 + $0xb8] sm:$0xff]
        %v703 = vld [vmem:[#allocation7 + $0xc0] sm:$0xff]
        %v704 = vld [vmem:[#allocation7 + $0xc8] sm:$0xff]
        %v705 = vld [vmem:[#allocation7 + $0xd0] sm:$0xff]
        %v706 = vld [vmem:[#allocation7 + $0xd8] sm:$0xff]
        %v707 = vld [vmem:[#allocation7 + $0xe0] sm:$0xff]
        %v708 = vld [vmem:[#allocation7 + $0xe8] sm:$0xff]
        %v709 = vld [vmem:[#allocation7 + $0xf0] sm:$0xff]
        %v710 = vld [vmem:[#allocation7 + $0xf8] sm:$0xff]
        %v711 = vpack.c.bf16 %v681, %v679
        %v712 = vpack.c.bf16 %v682, %v680
        %v713 = vpack.c.bf16 %v685, %v683
        %v714 = vpack.c.bf16 %v686, %v684
        %v715 = vpack.c.bf16 %v689, %v687
        %v716 = vpack.c.bf16 %v690, %v688
        %v717 = vpack.c.bf16 %v693, %v691
        %v718 = vpack.c.bf16 %v694, %v692
        %v719 = vpack.c.bf16 %v697, %v695
        %v720 = vpack.c.bf16 %v698, %v696
        %v721 = vpack.c.bf16 %v701, %v699
        %v722 = vpack.c.bf16 %v702, %v700
        %v723 = vpack.c.bf16 %v705, %v703
        %v724 = vpack.c.bf16 %v706, %v704
        %v725 = vpack.c.bf16 %v709, %v707
        %v726 = vpack.c.bf16 %v710, %v708
        %v727 = vld [vmem:[%s4] sm:$0x3]
        %v729 = vlaneseq
        %v730 = vshrl.u32 %v729, 7
        %v731 = vsub.s32 0, %v730
        %v732 = vrot.slane %v727, %v731
        %v733 = vlaneseq
        %v734 = vshrl.u32 %v733, 7
        %v735 = vsub.s32 1, %v734
        %v736 = vrot.slane %v727, %v735
        %739 = vmatprep.subr.bf16.mxu0 %v726
        %740 = vmatpush1.bf16.msra.mxu0 %v725
        %741 = vmatprep.subr.bf16.mxu0 %v724
        %742 = vmatpush1.bf16.msra.mxu0 %v723
        %743 = vmatprep.subr.bf16.mxu0 %v722
        %744 = vmatpush1.bf16.msra.mxu0 %v721
        %745 = vmatprep.subr.bf16.mxu0 %v720
        %746 = vmatpush1.bf16.msra.mxu0 %v719
        %747 = vmatprep.subr.bf16.mxu0 %v718
        %748 = vmatpush1.bf16.msra.mxu0 %v717
        %749 = vmatprep.subr.bf16.mxu0 %v716
        %750 = vmatpush1.bf16.msra.mxu0 %v715
        %751 = vmatprep.subr.bf16.mxu0 %v714
        %752 = vmatpush1.bf16.msra.mxu0 %v713
        %753 = vmatprep.subr.bf16.mxu0 %v712
        %754 = vmatpush1.bf16.msra.mxu0 %v711
        %755 = vmatprep.subr.bf16.mxu0 0
        %756 = vmatpush2.bf16.msra.mxu0 0
        %757 = vmatprep.subr.bf16.mxu0 0
        %758 = vmatpush2.bf16.msra.mxu0 0
        %759 = vmatprep.subr.bf16.mxu0 0
        %760 = vmatpush2.bf16.msra.mxu0 0
        %761 = vmatprep.subr.bf16.mxu0 0
        %762 = vmatpush2.bf16.msra.mxu0 0
        %763 = vmatprep.subr.bf16.mxu0 0
        %764 = vmatpush2.bf16.msra.mxu0 0
        %765 = vmatprep.subr.bf16.mxu0 0
        %766 = vmatpush2.bf16.msra.mxu0 0
        %767 = vmatprep.subr.bf16.mxu0 0
        %768 = vmatpush2.bf16.msra.mxu0 0
        %769 = vmatprep.subr.bf16.mxu0 0
        %770 = vmatpush2.bf16.msra.mxu0 0
        %771 = vmatprep.mubr.bf16.mxu0 0
        %772 = vmatmul.mubr.bf16.gmra.mxu0 %v546
        %v773 = vpop.f32.mrf.mxu0
        %v774 = vadd.f32 %v732, %v773
        %v775 = vpop.f32.mrf.mxu0
        %v776 = vadd.f32 %v736, %v775
        %v777 = vpop.f32.mrf.mxu0
        %v778 = vadd.f32 %v732, %v777
        %v779 = vpop.f32.mrf.mxu0
        %v780 = vadd.f32 %v736, %v779
        %781 = vmatprep.mubr.bf16.mxu0 0
        %782 = vmatmul.mubr.bf16.gmra.mxu0 %v547
        %v783 = vpop.f32.mrf.mxu0
        %v784 = vadd.f32 %v732, %v783
        %v785 = vpop.f32.mrf.mxu0
        %v786 = vadd.f32 %v736, %v785
        %v787 = vpop.f32.mrf.mxu0
        %v788 = vadd.f32 %v732, %v787
        %v789 = vpop.f32.mrf.mxu0
        %v790 = vadd.f32 %v736, %v789
        %791 = vmatprep.mubr.bf16.mxu0 0
        %792 = vmatmul.mubr.bf16.gmra.mxu0 %v548
        %v793 = vpop.f32.mrf.mxu0
        %v794 = vadd.f32 %v732, %v793
        %v795 = vpop.f32.mrf.mxu0
        %v796 = vadd.f32 %v736, %v795
        %v797 = vpop.f32.mrf.mxu0
        %v798 = vadd.f32 %v732, %v797
        %v799 = vpop.f32.mrf.mxu0
        %v800 = vadd.f32 %v736, %v799
        %801 = vmatprep.mubr.bf16.mxu0 0
        %802 = vmatmul.mubr.bf16.gmra.mxu0 %v549
        %v803 = vpop.f32.mrf.mxu0
        %v804 = vadd.f32 %v732, %v803
        %v805 = vpop.f32.mrf.mxu0
        %v806 = vadd.f32 %v736, %v805
        %v807 = vpop.f32.mrf.mxu0
        %v808 = vadd.f32 %v732, %v807
        %v809 = vpop.f32.mrf.mxu0
        %v810 = vadd.f32 %v736, %v809
        %811 = vmatprep.mubr.bf16.mxu0 0
        %812 = vmatmul.mubr.bf16.gmra.mxu0 %v550
        %v813 = vpop.f32.mrf.mxu0
        %v814 = vadd.f32 %v732, %v813
        %v815 = vpop.f32.mrf.mxu0
        %v816 = vadd.f32 %v736, %v815
        %v817 = vpop.f32.mrf.mxu0
        %v818 = vadd.f32 %v732, %v817
        %v819 = vpop.f32.mrf.mxu0
        %v820 = vadd.f32 %v736, %v819
        %821 = vmatprep.mubr.bf16.mxu0 0
        %822 = vmatmul.mubr.bf16.gmra.mxu0 %v551
        %v823 = vpop.f32.mrf.mxu0
        %v824 = vadd.f32 %v732, %v823
        %v825 = vpop.f32.mrf.mxu0
        %v826 = vadd.f32 %v736, %v825
        %v827 = vpop.f32.mrf.mxu0
        %v828 = vadd.f32 %v732, %v827
        %v829 = vpop.f32.mrf.mxu0
        %v830 = vadd.f32 %v736, %v829
        %831 = vmatprep.mubr.bf16.mxu0 0
        %832 = vmatmul.mubr.bf16.gmra.mxu0 %v552
        %v833 = vpop.f32.mrf.mxu0
        %v834 = vadd.f32 %v732, %v833
        %v835 = vpop.f32.mrf.mxu0
        %v836 = vadd.f32 %v736, %v835
        %v837 = vpop.f32.mrf.mxu0
        %v838 = vadd.f32 %v732, %v837
        %v839 = vpop.f32.mrf.mxu0
        %v840 = vadd.f32 %v736, %v839
        %841 = vmatprep.mubr.bf16.mxu0 0
        %842 = vmatmul.mubr.bf16.gmra.mxu0 %v553
        %v843 = vpop.f32.mrf.mxu0
        %v844 = vadd.f32 %v732, %v843
        %v845 = vpop.f32.mrf.mxu0
        %v846 = vadd.f32 %v736, %v845
        %v847 = vpop.f32.mrf.mxu0
        %v848 = vadd.f32 %v732, %v847
        %v849 = vpop.f32.mrf.mxu0
        %v850 = vadd.f32 %v736, %v849
        %851 = vdwg.mxu0
        %v852 = vpack.c.bf16 %v405, %v403
        %v853 = vpack.c.bf16 %v409, %v407
        %v854 = vpack.c.bf16 %v413, %v411
        %v855 = vpack.c.bf16 %v417, %v415
        %v856 = vpack.c.bf16 %v421, %v419
        %v857 = vpack.c.bf16 %v425, %v423
        %v858 = vpack.c.bf16 %v429, %v427
        %v859 = vpack.c.bf16 %v433, %v431
        %860 = vmatprep.subr.bf16.mxu0 %v726
        %861 = vmatpush1.bf16.msra.mxu0 %v725
        %862 = vmatprep.subr.bf16.mxu0 %v724
        %863 = vmatpush1.bf16.msra.mxu0 %v723
        %864 = vmatprep.subr.bf16.mxu0 %v722
        %865 = vmatpush1.bf16.msra.mxu0 %v721
        %866 = vmatprep.subr.bf16.mxu0 %v720
        %867 = vmatpush1.bf16.msra.mxu0 %v719
        %868 = vmatprep.subr.bf16.mxu0 %v718
        %869 = vmatpush1.bf16.msra.mxu0 %v717
        %870 = vmatprep.subr.bf16.mxu0 %v716
        %871 = vmatpush1.bf16.msra.mxu0 %v715
        %872 = vmatprep.subr.bf16.mxu0 %v714
        %873 = vmatpush1.bf16.msra.mxu0 %v713
        %874 = vmatprep.subr.bf16.mxu0 %v712
        %875 = vmatpush1.bf16.msra.mxu0 %v711
        %876 = vmatprep.subr.bf16.mxu0 0
        %877 = vmatpush2.bf16.msra.mxu0 0
        %878 = vmatprep.subr.bf16.mxu0 0
        %879 = vmatpush2.bf16.msra.mxu0 0
        %880 = vmatprep.subr.bf16.mxu0 0
        %881 = vmatpush2.bf16.msra.mxu0 0
        %882 = vmatprep.subr.bf16.mxu0 0
        %883 = vmatpush2.bf16.msra.mxu0 0
        %884 = vmatprep.subr.bf16.mxu0 0
        %885 = vmatpush2.bf16.msra.mxu0 0
        %886 = vmatprep.subr.bf16.mxu0 0
        %887 = vmatpush2.bf16.msra.mxu0 0
        %888 = vmatprep.subr.bf16.mxu0 0
        %889 = vmatpush2.bf16.msra.mxu0 0
        %890 = vmatprep.subr.bf16.mxu0 0
        %891 = vmatpush2.bf16.msra.mxu0 0
        %892 = vmatprep.mubr.bf16.mxu0 0
        %893 = vmatmul.mubr.bf16.gmra.mxu0 %v852
        %v894 = vpop.f32.mrf.mxu0
        %v895 = vadd.f32 %v732, %v894
        %v896 = vpop.f32.mrf.mxu0
        %v897 = vadd.f32 %v736, %v896
        %v898 = vpop.f32.mrf.mxu0
        %v899 = vadd.f32 %v732, %v898
        %v900 = vpop.f32.mrf.mxu0
        %v901 = vadd.f32 %v736, %v900
        %902 = vmatprep.mubr.bf16.mxu0 0
        %903 = vmatmul.mubr.bf16.gmra.mxu0 %v853
        %v904 = vpop.f32.mrf.mxu0
        %v905 = vadd.f32 %v732, %v904
        %v906 = vpop.f32.mrf.mxu0
        %v907 = vadd.f32 %v736, %v906
        %v908 = vpop.f32.mrf.mxu0
        %v909 = vadd.f32 %v732, %v908
        %v910 = vpop.f32.mrf.mxu0
        %v911 = vadd.f32 %v736, %v910
        %912 = vmatprep.mubr.bf16.mxu0 0
        %913 = vmatmul.mubr.bf16.gmra.mxu0 %v854
        %v914 = vpop.f32.mrf.mxu0
        %v915 = vadd.f32 %v732, %v914
        %v916 = vpop.f32.mrf.mxu0
        %v917 = vadd.f32 %v736, %v916
        %v918 = vpop.f32.mrf.mxu0
        %v919 = vadd.f32 %v732, %v918
        %v920 = vpop.f32.mrf.mxu0
        %v921 = vadd.f32 %v736, %v920
        %922 = vmatprep.mubr.bf16.mxu0 0
        %923 = vmatmul.mubr.bf16.gmra.mxu0 %v855
        %v924 = vpop.f32.mrf.mxu0
        %v925 = vadd.f32 %v732, %v924
        %v926 = vpop.f32.mrf.mxu0
        %v927 = vadd.f32 %v736, %v926
        %v928 = vpop.f32.mrf.mxu0
        %v929 = vadd.f32 %v732, %v928
        %v930 = vpop.f32.mrf.mxu0
        %v931 = vadd.f32 %v736, %v930
        %932 = vmatprep.mubr.bf16.mxu0 0
        %933 = vmatmul.mubr.bf16.gmra.mxu0 %v856
        %v934 = vpop.f32.mrf.mxu0
        %v935 = vadd.f32 %v732, %v934
        %v936 = vpop.f32.mrf.mxu0
        %v937 = vadd.f32 %v736, %v936
        %v938 = vpop.f32.mrf.mxu0
        %v939 = vadd.f32 %v732, %v938
        %v940 = vpop.f32.mrf.mxu0
        %v941 = vadd.f32 %v736, %v940
        %942 = vmatprep.mubr.bf16.mxu0 0
        %943 = vmatmul.mubr.bf16.gmra.mxu0 %v857
        %v944 = vpop.f32.mrf.mxu0
        %v945 = vadd.f32 %v732, %v944
        %v946 = vpop.f32.mrf.mxu0
        %v947 = vadd.f32 %v736, %v946
        %v948 = vpop.f32.mrf.mxu0
        %v949 = vadd.f32 %v732, %v948
        %v950 = vpop.f32.mrf.mxu0
        %v951 = vadd.f32 %v736, %v950
        %952 = vmatprep.mubr.bf16.mxu0 0
        %953 = vmatmul.mubr.bf16.gmra.mxu0 %v858
        %v954 = vpop.f32.mrf.mxu0
        %v955 = vadd.f32 %v732, %v954
        %v956 = vpop.f32.mrf.mxu0
        %v957 = vadd.f32 %v736, %v956
        %v958 = vpop.f32.mrf.mxu0
        %v959 = vadd.f32 %v732, %v958
        %v960 = vpop.f32.mrf.mxu0
        %v961 = vadd.f32 %v736, %v960
        %962 = vmatprep.mubr.bf16.mxu0 0
        %963 = vmatmul.mubr.bf16.gmra.mxu0 %v859
        %v964 = vpop.f32.mrf.mxu0
        %v965 = vadd.f32 %v732, %v964
        %v966 = vpop.f32.mrf.mxu0
        %v967 = vadd.f32 %v736, %v966
        %v968 = vpop.f32.mrf.mxu0
        %v969 = vadd.f32 %v732, %v968
        %v970 = vpop.f32.mrf.mxu0
        %v971 = vadd.f32 %v736, %v970
        %972 = vdwg.mxu0
        %v973 = vpack.c.bf16 %v437, %v435
        %v974 = vpack.c.bf16 %v441, %v439
        %v975 = vpack.c.bf16 %v445, %v443
        %v976 = vpack.c.bf16 %v449, %v447
        %v977 = vpack.c.bf16 %v453, %v451
        %v978 = vpack.c.bf16 %v457, %v455
        %v979 = vpack.c.bf16 %v461, %v459
        %v980 = vpack.c.bf16 %v465, %v463
        %981 = vmatprep.subr.bf16.mxu0 %v726
        %982 = vmatpush1.bf16.msra.mxu0 %v725
        %983 = vmatprep.subr.bf16.mxu0 %v724
        %984 = vmatpush1.bf16.msra.mxu0 %v723
        %985 = vmatprep.subr.bf16.mxu0 %v722
        %986 = vmatpush1.bf16.msra.mxu0 %v721
        %987 = vmatprep.subr.bf16.mxu0 %v720
        %988 = vmatpush1.bf16.msra.mxu0 %v719
        %989 = vmatprep.subr.bf16.mxu0 %v718
        %990 = vmatpush1.bf16.msra.mxu0 %v717
        %991 = vmatprep.subr.bf16.mxu0 %v716
        %992 = vmatpush1.bf16.msra.mxu0 %v715
        %993 = vmatprep.subr.bf16.mxu0 %v714
        %994 = vmatpush1.bf16.msra.mxu0 %v713
        %995 = vmatprep.subr.bf16.mxu0 %v712
        %996 = vmatpush1.bf16.msra.mxu0 %v711
        %997 = vmatprep.subr.bf16.mxu0 0
        %998 = vmatpush2.bf16.msra.mxu0 0
        %999 = vmatprep.subr.bf16.mxu0 0
        %1000 = vmatpush2.bf16.msra.mxu0 0
        %1001 = vmatprep.subr.bf16.mxu0 0
        %1002 = vmatpush2.bf16.msra.mxu0 0
        %1003 = vmatprep.subr.bf16.mxu0 0
        %1004 = vmatpush2.bf16.msra.mxu0 0
        %1005 = vmatprep.subr.bf16.mxu0 0
        %1006 = vmatpush2.bf16.msra.mxu0 0
        %1007 = vmatprep.subr.bf16.mxu0 0
        %1008 = vmatpush2.bf16.msra.mxu0 0
        %1009 = vmatprep.subr.bf16.mxu0 0
        %1010 = vmatpush2.bf16.msra.mxu0 0
        %1011 = vmatprep.subr.bf16.mxu0 0
        %1012 = vmatpush2.bf16.msra.mxu0 0
        %1013 = vmatprep.mubr.bf16.mxu0 0
        %1014 = vmatmul.mubr.bf16.gmra.mxu0 %v973
        %v1015 = vpop.f32.mrf.mxu0
        %v1016 = vadd.f32 %v732, %v1015
        %v1017 = vpop.f32.mrf.mxu0
        %v1018 = vadd.f32 %v736, %v1017
        %v1019 = vpop.f32.mrf.mxu0
        %v1020 = vadd.f32 %v732, %v1019
        %v1021 = vpop.f32.mrf.mxu0
        %v1022 = vadd.f32 %v736, %v1021
        %1023 = vmatprep.mubr.bf16.mxu0 0
        %1024 = vmatmul.mubr.bf16.gmra.mxu0 %v974
        %v1025 = vpop.f32.mrf.mxu0
        %v1026 = vadd.f32 %v732, %v1025
        %v1027 = vpop.f32.mrf.mxu0
        %v1028 = vadd.f32 %v736, %v1027
        %v1029 = vpop.f32.mrf.mxu0
        %v1030 = vadd.f32 %v732, %v1029
        %v1031 = vpop.f32.mrf.mxu0
        %v1032 = vadd.f32 %v736, %v1031
        %1033 = vmatprep.mubr.bf16.mxu0 0
        %1034 = vmatmul.mubr.bf16.gmra.mxu0 %v975
        %v1035 = vpop.f32.mrf.mxu0
        %v1036 = vadd.f32 %v732, %v1035
        %v1037 = vpop.f32.mrf.mxu0
        %v1038 = vadd.f32 %v736, %v1037
        %v1039 = vpop.f32.mrf.mxu0
        %v1040 = vadd.f32 %v732, %v1039
        %v1041 = vpop.f32.mrf.mxu0
        %v1042 = vadd.f32 %v736, %v1041
        %1043 = vmatprep.mubr.bf16.mxu0 0
        %1044 = vmatmul.mubr.bf16.gmra.mxu0 %v976
        %v1045 = vpop.f32.mrf.mxu0
        %v1046 = vadd.f32 %v732, %v1045
        %v1047 = vpop.f32.mrf.mxu0
        %v1048 = vadd.f32 %v736, %v1047
        %v1049 = vpop.f32.mrf.mxu0
        %v1050 = vadd.f32 %v732, %v1049
        %v1051 = vpop.f32.mrf.mxu0
        %v1052 = vadd.f32 %v736, %v1051
        %1053 = vmatprep.mubr.bf16.mxu0 0
        %1054 = vmatmul.mubr.bf16.gmra.mxu0 %v977
        %v1055 = vpop.f32.mrf.mxu0
        %v1056 = vadd.f32 %v732, %v1055
        %v1057 = vpop.f32.mrf.mxu0
        %v1058 = vadd.f32 %v736, %v1057
        %v1059 = vpop.f32.mrf.mxu0
        %v1060 = vadd.f32 %v732, %v1059
        %v1061 = vpop.f32.mrf.mxu0
        %v1062 = vadd.f32 %v736, %v1061
        %1063 = vmatprep.mubr.bf16.mxu0 0
        %1064 = vmatmul.mubr.bf16.gmra.mxu0 %v978
        %v1065 = vpop.f32.mrf.mxu0
        %v1066 = vadd.f32 %v732, %v1065
        %v1067 = vpop.f32.mrf.mxu0
        %v1068 = vadd.f32 %v736, %v1067
        %v1069 = vpop.f32.mrf.mxu0
        %v1070 = vadd.f32 %v732, %v1069
        %v1071 = vpop.f32.mrf.mxu0
        %v1072 = vadd.f32 %v736, %v1071
        %1073 = vmatprep.mubr.bf16.mxu0 0
        %1074 = vmatmul.mubr.bf16.gmra.mxu0 %v979
        %v1075 = vpop.f32.mrf.mxu0
        %v1076 = vadd.f32 %v732, %v1075
        %v1077 = vpop.f32.mrf.mxu0
        %v1078 = vadd.f32 %v736, %v1077
        %v1079 = vpop.f32.mrf.mxu0
        %v1080 = vadd.f32 %v732, %v1079
        %v1081 = vpop.f32.mrf.mxu0
        %v1082 = vadd.f32 %v736, %v1081
        %1083 = vmatprep.mubr.bf16.mxu0 0
        %1084 = vmatmul.mubr.bf16.gmra.mxu0 %v980
        %v1085 = vpop.f32.mrf.mxu0
        %v1086 = vadd.f32 %v732, %v1085
        %v1087 = vpop.f32.mrf.mxu0
        %v1088 = vadd.f32 %v736, %v1087
        %v1089 = vpop.f32.mrf.mxu0
        %v1090 = vadd.f32 %v732, %v1089
        %v1091 = vpop.f32.mrf.mxu0
        %v1092 = vadd.f32 %v736, %v1091
        %1093 = vdwg.mxu0
        %v1094 = vpack.c.bf16 %v469, %v467
        %v1095 = vpack.c.bf16 %v473, %v471
        %v1096 = vpack.c.bf16 %v477, %v475
        %v1097 = vpack.c.bf16 %v481, %v479
        %v1098 = vpack.c.bf16 %v485, %v483
        %v1099 = vpack.c.bf16 %v489, %v487
        %v1100 = vpack.c.bf16 %v493, %v491
        %v1101 = vpack.c.bf16 %v497, %v495
        %1102 = vmatprep.subr.bf16.mxu0 %v726
        %1103 = vmatpush1.bf16.msra.mxu0 %v725
        %1104 = vmatprep.subr.bf16.mxu0 %v724
        %1105 = vmatpush1.bf16.msra.mxu0 %v723
        %1106 = vmatprep.subr.bf16.mxu0 %v722
        %1107 = vmatpush1.bf16.msra.mxu0 %v721
        %1108 = vmatprep.subr.bf16.mxu0 %v720
        %1109 = vmatpush1.bf16.msra.mxu0 %v719
        %1110 = vmatprep.subr.bf16.mxu0 %v718
        %1111 = vmatpush1.bf16.msra.mxu0 %v717
        %1112 = vmatprep.subr.bf16.mxu0 %v716
        %1113 = vmatpush1.bf16.msra.mxu0 %v715
        %1114 = vmatprep.subr.bf16.mxu0 %v714
        %1115 = vmatpush1.bf16.msra.mxu0 %v713
        %1116 = vmatprep.subr.bf16.mxu0 %v712
        %1117 = vmatpush1.bf16.msra.mxu0 %v711
        %1118 = vmatprep.subr.bf16.mxu0 0
        %1119 = vmatpush2.bf16.msra.mxu0 0
        %1120 = vmatprep.subr.bf16.mxu0 0
        %1121 = vmatpush2.bf16.msra.mxu0 0
        %1122 = vmatprep.subr.bf16.mxu0 0
        %1123 = vmatpush2.bf16.msra.mxu0 0
        %1124 = vmatprep.subr.bf16.mxu0 0
        %1125 = vmatpush2.bf16.msra.mxu0 0
        %1126 = vmatprep.subr.bf16.mxu0 0
        %1127 = vmatpush2.bf16.msra.mxu0 0
        %1128 = vmatprep.subr.bf16.mxu0 0
        %1129 = vmatpush2.bf16.msra.mxu0 0
        %1130 = vmatprep.subr.bf16.mxu0 0
        %1131 = vmatpush2.bf16.msra.mxu0 0
        %1132 = vmatprep.subr.bf16.mxu0 0
        %1133 = vmatpush2.bf16.msra.mxu0 0
        %1134 = vmatprep.mubr.bf16.mxu0 0
        %1135 = vmatmul.mubr.bf16.gmra.mxu0 %v1094
        %v1136 = vpop.f32.mrf.mxu0
        %v1137 = vadd.f32 %v732, %v1136
        %v1138 = vpop.f32.mrf.mxu0
        %v1139 = vadd.f32 %v736, %v1138
        %v1140 = vpop.f32.mrf.mxu0
        %v1141 = vadd.f32 %v732, %v1140
        %v1142 = vpop.f32.mrf.mxu0
        %v1143 = vadd.f32 %v736, %v1142
        %1144 = vmatprep.mubr.bf16.mxu0 0
        %1145 = vmatmul.mubr.bf16.gmra.mxu0 %v1095
        %v1146 = vpop.f32.mrf.mxu0
        %v1147 = vadd.f32 %v732, %v1146
        %v1148 = vpop.f32.mrf.mxu0
        %v1149 = vadd.f32 %v736, %v1148
        %v1150 = vpop.f32.mrf.mxu0
        %v1151 = vadd.f32 %v732, %v1150
        %v1152 = vpop.f32.mrf.mxu0
        %v1153 = vadd.f32 %v736, %v1152
        %1154 = vmatprep.mubr.bf16.mxu0 0
        %1155 = vmatmul.mubr.bf16.gmra.mxu0 %v1096
        %v1156 = vpop.f32.mrf.mxu0
        %v1157 = vadd.f32 %v732, %v1156
        %v1158 = vpop.f32.mrf.mxu0
        %v1159 = vadd.f32 %v736, %v1158
        %v1160 = vpop.f32.mrf.mxu0
        %v1161 = vadd.f32 %v732, %v1160
        %v1162 = vpop.f32.mrf.mxu0
        %v1163 = vadd.f32 %v736, %v1162
        %1164 = vmatprep.mubr.bf16.mxu0 0
        %1165 = vmatmul.mubr.bf16.gmra.mxu0 %v1097
        %v1166 = vpop.f32.mrf.mxu0
        %v1167 = vadd.f32 %v732, %v1166
        %v1168 = vpop.f32.mrf.mxu0
        %v1169 = vadd.f32 %v736, %v1168
        %v1170 = vpop.f32.mrf.mxu0
        %v1171 = vadd.f32 %v732, %v1170
        %v1172 = vpop.f32.mrf.mxu0
        %v1173 = vadd.f32 %v736, %v1172
        %1174 = vmatprep.mubr.bf16.mxu0 0
        %1175 = vmatmul.mubr.bf16.gmra.mxu0 %v1098
        %v1176 = vpop.f32.mrf.mxu0
        %v1177 = vadd.f32 %v732, %v1176
        %v1178 = vpop.f32.mrf.mxu0
        %v1179 = vadd.f32 %v736, %v1178
        %v1180 = vpop.f32.mrf.mxu0
        %v1181 = vadd.f32 %v732, %v1180
        %v1182 = vpop.f32.mrf.mxu0
        %v1183 = vadd.f32 %v736, %v1182
        %1184 = vmatprep.mubr.bf16.mxu0 0
        %1185 = vmatmul.mubr.bf16.gmra.mxu0 %v1099
        %v1186 = vpop.f32.mrf.mxu0
        %v1187 = vadd.f32 %v732, %v1186
        %v1188 = vpop.f32.mrf.mxu0
        %v1189 = vadd.f32 %v736, %v1188
        %v1190 = vpop.f32.mrf.mxu0
        %v1191 = vadd.f32 %v732, %v1190
        %v1192 = vpop.f32.mrf.mxu0
        %v1193 = vadd.f32 %v736, %v1192
        %1194 = vmatprep.mubr.bf16.mxu0 0
        %1195 = vmatmul.mubr.bf16.gmra.mxu0 %v1100
        %v1196 = vpop.f32.mrf.mxu0
        %v1197 = vadd.f32 %v732, %v1196
        %v1198 = vpop.f32.mrf.mxu0
        %v1199 = vadd.f32 %v736, %v1198
        %v1200 = vpop.f32.mrf.mxu0
        %v1201 = vadd.f32 %v732, %v1200
        %v1202 = vpop.f32.mrf.mxu0
        %v1203 = vadd.f32 %v736, %v1202
        %1204 = vmatprep.mubr.bf16.mxu0 0
        %1205 = vmatmul.mubr.bf16.gmra.mxu0 %v1101
        %v1206 = vpop.f32.mrf.mxu0
        %v1207 = vadd.f32 %v732, %v1206
        %v1208 = vpop.f32.mrf.mxu0
        %v1209 = vadd.f32 %v736, %v1208
        %v1210 = vpop.f32.mrf.mxu0
        %v1211 = vadd.f32 %v732, %v1210
        %v1212 = vpop.f32.mrf.mxu0
        %v1213 = vadd.f32 %v736, %v1212
        %1214 = vdwg.mxu0
        %v1215 = vmul.f32 %v601, %v774
        %v1216 = vmul.f32 %v605, %v778
        %v1217 = vmul.f32 %v611, %v784
        %v1218 = vmul.f32 %v615, %v788
        %v1219 = vmul.f32 %v621, %v794
        %v1220 = vmul.f32 %v625, %v798
        %v1221 = vmul.f32 %v631, %v804
        %v1222 = vmul.f32 %v635, %v808
        %v1223 = vmul.f32 %v641, %v814
        %v1224 = vmul.f32 %v645, %v818
        %v1225 = vmul.f32 %v651, %v824
        %v1226 = vmul.f32 %v655, %v828
        %v1227 = vmul.f32 %v661, %v834
        %v1228 = vmul.f32 %v665, %v838
        %v1229 = vmul.f32 %v671, %v844
        %v1230 = vmul.f32 %v675, %v848
        %vm1231 = vcmask 523264
        %v1232 = vsel %vm1231, %v1215, 0.0
        %1233 = vadd.xlane.f32.xlu0 %v1232
        %v1234 = vpop.xlane.xlu0 %1233
        %v1235 = vsel %vm1231, %v1216, 0.0
        %1236 = vadd.xlane.f32.xlu0 %v1235
        %v1237 = vpop.xlane.xlu0 %1236
        %v1238 = vsel %vm1231, %v1217, 0.0
        %1239 = vadd.xlane.f32.xlu0 %v1238
        %v1240 = vpop.xlane.xlu0 %1239
        %v1241 = vsel %vm1231, %v1218, 0.0
        %1242 = vadd.xlane.f32.xlu0 %v1241
        %v1243 = vpop.xlane.xlu0 %1242
        %v1244 = vsel %vm1231, %v1219, 0.0
        %1245 = vadd.xlane.f32.xlu0 %v1244
        %v1246 = vpop.xlane.xlu0 %1245
        %v1247 = vsel %vm1231, %v1220, 0.0
        %1248 = vadd.xlane.f32.xlu0 %v1247
        %v1249 = vpop.xlane.xlu0 %1248
        %v1250 = vsel %vm1231, %v1221, 0.0
        %1251 = vadd.xlane.f32.xlu0 %v1250
        %v1252 = vpop.xlane.xlu0 %1251
        %v1253 = vsel %vm1231, %v1222, 0.0
        %1254 = vadd.xlane.f32.xlu0 %v1253
        %v1255 = vpop.xlane.xlu0 %1254
        %v1256 = vsel %vm1231, %v1223, 0.0
        %1257 = vadd.xlane.f32.xlu0 %v1256
        %v1258 = vpop.xlane.xlu0 %1257
        %v1259 = vsel %vm1231, %v1224, 0.0
        %1260 = vadd.xlane.f32.xlu0 %v1259
        %v1261 = vpop.xlane.xlu0 %1260
        %v1262 = vsel %vm1231, %v1225, 0.0
        %1263 = vadd.xlane.f32.xlu0 %v1262
        %v1264 = vpop.xlane.xlu0 %1263
        %v1265 = vsel %vm1231, %v1226, 0.0
        %1266 = vadd.xlane.f32.xlu0 %v1265
        %v1267 = vpop.xlane.xlu0 %1266
        %v1268 = vsel %vm1231, %v1227, 0.0
        %1269 = vadd.xlane.f32.xlu0 %v1268
        %v1270 = vpop.xlane.xlu0 %1269
        %v1271 = vsel %vm1231, %v1228, 0.0
        %1272 = vadd.xlane.f32.xlu0 %v1271
        %v1273 = vpop.xlane.xlu0 %1272
        %v1274 = vsel %vm1231, %v1229, 0.0
        %1275 = vadd.xlane.f32.xlu0 %v1274
        %v1276 = vpop.xlane.xlu0 %1275
        %v1277 = vsel %vm1231, %v1230, 0.0
        %1278 = vadd.xlane.f32.xlu0 %v1277
        %v1279 = vpop.xlane.xlu0 %1278
        %v1280 = vmul.f32 %v1234, 0.125
        %v1281 = vmul.f32 %v1237, 0.125
        %v1282 = vmul.f32 %v1240, 0.125
        %v1283 = vmul.f32 %v1243, 0.125
        %v1284 = vmul.f32 %v1246, 0.125
        %v1285 = vmul.f32 %v1249, 0.125
        %v1286 = vmul.f32 %v1252, 0.125
        %v1287 = vmul.f32 %v1255, 0.125
        %v1288 = vmul.f32 %v1258, 0.125
        %v1289 = vmul.f32 %v1261, 0.125
        %v1290 = vmul.f32 %v1264, 0.125
        %v1291 = vmul.f32 %v1267, 0.125
        %v1292 = vmul.f32 %v1270, 0.125
        %v1293 = vmul.f32 %v1273, 0.125
        %v1294 = vmul.f32 %v1276, 0.125
        %v1295 = vmul.f32 %v1279, 0.125
        %v1296 = vmul.f32 %v601, %v776
        %v1297 = vmul.f32 %v605, %v780
        %v1298 = vmul.f32 %v611, %v786
        %v1299 = vmul.f32 %v615, %v790
        %v1300 = vmul.f32 %v621, %v796
        %v1301 = vmul.f32 %v625, %v800
        %v1302 = vmul.f32 %v631, %v806
        %v1303 = vmul.f32 %v635, %v810
        %v1304 = vmul.f32 %v641, %v816
        %v1305 = vmul.f32 %v645, %v820
        %v1306 = vmul.f32 %v651, %v826
        %v1307 = vmul.f32 %v655, %v830
        %v1308 = vmul.f32 %v661, %v836
        %v1309 = vmul.f32 %v665, %v840
        %v1310 = vmul.f32 %v671, %v846
        %v1311 = vmul.f32 %v675, %v850
        %v1312 = vsel %vm1231, %v1296, 0.0
        %1313 = vadd.xlane.f32.xlu0 %v1312
        %v1314 = vpop.xlane.xlu0 %1313
        %v1315 = vsel %vm1231, %v1297, 0.0
        %1316 = vadd.xlane.f32.xlu0 %v1315
        %v1317 = vpop.xlane.xlu0 %1316
        %v1318 = vsel %vm1231, %v1298, 0.0
        %1319 = vadd.xlane.f32.xlu0 %v1318
        %v1320 = vpop.xlane.xlu0 %1319
        %v1321 = vsel %vm1231, %v1299, 0.0
        %1322 = vadd.xlane.f32.xlu0 %v1321
        %v1323 = vpop.xlane.xlu0 %1322
        %v1324 = vsel %vm1231, %v1300, 0.0
        %1325 = vadd.xlane.f32.xlu0 %v1324
        %v1326 = vpop.xlane.xlu0 %1325
        %v1327 = vsel %vm1231, %v1301, 0.0
        %1328 = vadd.xlane.f32.xlu0 %v1327
        %v1329 = vpop.xlane.xlu0 %1328
        %v1330 = vsel %vm1231, %v1302, 0.0
        %1331 = vadd.xlane.f32.xlu0 %v1330
        %v1332 = vpop.xlane.xlu0 %1331
        %v1333 = vsel %vm1231, %v1303, 0.0
        %1334 = vadd.xlane.f32.xlu0 %v1333
        %v1335 = vpop.xlane.xlu0 %1334
        %v1336 = vsel %vm1231, %v1304, 0.0
        %1337 = vadd.xlane.f32.xlu0 %v1336
        %v1338 = vpop.xlane.xlu0 %1337
        %v1339 = vsel %vm1231, %v1305, 0.0
        %1340 = vadd.xlane.f32.xlu0 %v1339
        %v1341 = vpop.xlane.xlu0 %1340
        %v1342 = vsel %vm1231, %v1306, 0.0
        %1343 = vadd.xlane.f32.xlu0 %v1342
        %v1344 = vpop.xlane.xlu0 %1343
        %v1345 = vsel %vm1231, %v1307, 0.0
        %1346 = vadd.xlane.f32.xlu0 %v1345
        %v1347 = vpop.xlane.xlu0 %1346
        %v1348 = vsel %vm1231, %v1308, 0.0
        %1349 = vadd.xlane.f32.xlu0 %v1348
        %v1350 = vpop.xlane.xlu0 %1349
        %v1351 = vsel %vm1231, %v1309, 0.0
        %1352 = vadd.xlane.f32.xlu0 %v1351
        %v1353 = vpop.xlane.xlu0 %1352
        %v1354 = vsel %vm1231, %v1310, 0.0
        %1355 = vadd.xlane.f32.xlu0 %v1354
        %v1356 = vpop.xlane.xlu0 %1355
        %v1357 = vsel %vm1231, %v1311, 0.0
        %1358 = vadd.xlane.f32.xlu0 %v1357
        %v1359 = vpop.xlane.xlu0 %1358
        %v1360 = vmul.f32 %v1314, 0.125
        %v1361 = vmul.f32 %v1317, 0.125
        %v1362 = vmul.f32 %v1320, 0.125
        %v1363 = vmul.f32 %v1323, 0.125
        %v1364 = vmul.f32 %v1326, 0.125
        %v1365 = vmul.f32 %v1329, 0.125
        %v1366 = vmul.f32 %v1332, 0.125
        %v1367 = vmul.f32 %v1335, 0.125
        %v1368 = vmul.f32 %v1338, 0.125
        %v1369 = vmul.f32 %v1341, 0.125
        %v1370 = vmul.f32 %v1344, 0.125
        %v1371 = vmul.f32 %v1347, 0.125
        %v1372 = vmul.f32 %v1350, 0.125
        %v1373 = vmul.f32 %v1353, 0.125
        %v1374 = vmul.f32 %v1356, 0.125
        %v1375 = vmul.f32 %v1359, 0.125
        %v1376 = vmul.f32 %v601, %v895
        %v1377 = vmul.f32 %v605, %v899
        %v1378 = vmul.f32 %v611, %v905
        %v1379 = vmul.f32 %v615, %v909
        %v1380 = vmul.f32 %v621, %v915
        %v1381 = vmul.f32 %v625, %v919
        %v1382 = vmul.f32 %v631, %v925
        %v1383 = vmul.f32 %v635, %v929
        %v1384 = vmul.f32 %v641, %v935
        %v1385 = vmul.f32 %v645, %v939
        %v1386 = vmul.f32 %v651, %v945
        %v1387 = vmul.f32 %v655, %v949
        %v1388 = vmul.f32 %v661, %v955
        %v1389 = vmul.f32 %v665, %v959
        %v1390 = vmul.f32 %v671, %v965
        %v1391 = vmul.f32 %v675, %v969
        %v1392 = vsel %vm1231, %v1376, 0.0
        %1393 = vadd.xlane.f32.xlu0 %v1392
        %v1394 = vpop.xlane.xlu0 %1393
        %v1395 = vsel %vm1231, %v1377, 0.0
        %1396 = vadd.xlane.f32.xlu0 %v1395
        %v1397 = vpop.xlane.xlu0 %1396
        %v1398 = vsel %vm1231, %v1378, 0.0
        %1399 = vadd.xlane.f32.xlu0 %v1398
        %v1400 = vpop.xlane.xlu0 %1399
        %v1401 = vsel %vm1231, %v1379, 0.0
        %1402 = vadd.xlane.f32.xlu0 %v1401
        %v1403 = vpop.xlane.xlu0 %1402
        %v1404 = vsel %vm1231, %v1380, 0.0
        %1405 = vadd.xlane.f32.xlu0 %v1404
        %v1406 = vpop.xlane.xlu0 %1405
        %v1407 = vsel %vm1231, %v1381, 0.0
        %1408 = vadd.xlane.f32.xlu0 %v1407
        %v1409 = vpop.xlane.xlu0 %1408
        %v1410 = vsel %vm1231, %v1382, 0.0
        %1411 = vadd.xlane.f32.xlu0 %v1410
        %v1412 = vpop.xlane.xlu0 %1411
        %v1413 = vsel %vm1231, %v1383, 0.0
        %1414 = vadd.xlane.f32.xlu0 %v1413
        %v1415 = vpop.xlane.xlu0 %1414
        %v1416 = vsel %vm1231, %v1384, 0.0
        %1417 = vadd.xlane.f32.xlu0 %v1416
        %v1418 = vpop.xlane.xlu0 %1417
        %v1419 = vsel %vm1231, %v1385, 0.0
        %1420 = vadd.xlane.f32.xlu0 %v1419
        %v1421 = vpop.xlane.xlu0 %1420
        %v1422 = vsel %vm1231, %v1386, 0.0
        %1423 = vadd.xlane.f32.xlu0 %v1422
        %v1424 = vpop.xlane.xlu0 %1423
        %v1425 = vsel %vm1231, %v1387, 0.0
        %1426 = vadd.xlane.f32.xlu0 %v1425
        %v1427 = vpop.xlane.xlu0 %1426
        %v1428 = vsel %vm1231, %v1388, 0.0
        %1429 = vadd.xlane.f32.xlu0 %v1428
        %v1430 = vpop.xlane.xlu0 %1429
        %v1431 = vsel %vm1231, %v1389, 0.0
        %1432 = vadd.xlane.f32.xlu0 %v1431
        %v1433 = vpop.xlane.xlu0 %1432
        %v1434 = vsel %vm1231, %v1390, 0.0
        %1435 = vadd.xlane.f32.xlu0 %v1434
        %v1436 = vpop.xlane.xlu0 %1435
        %v1437 = vsel %vm1231, %v1391, 0.0
        %1438 = vadd.xlane.f32.xlu0 %v1437
        %v1439 = vpop.xlane.xlu0 %1438
        %v1440 = vmul.f32 %v1394, 0.125
        %v1441 = vmul.f32 %v1397, 0.125
        %v1442 = vmul.f32 %v1400, 0.125
        %v1443 = vmul.f32 %v1403, 0.125
        %v1444 = vmul.f32 %v1406, 0.125
        %v1445 = vmul.f32 %v1409, 0.125
        %v1446 = vmul.f32 %v1412, 0.125
        %v1447 = vmul.f32 %v1415, 0.125
        %v1448 = vmul.f32 %v1418, 0.125
        %v1449 = vmul.f32 %v1421, 0.125
        %v1450 = vmul.f32 %v1424, 0.125
        %v1451 = vmul.f32 %v1427, 0.125
        %v1452 = vmul.f32 %v1430, 0.125
        %v1453 = vmul.f32 %v1433, 0.125
        %v1454 = vmul.f32 %v1436, 0.125
        %v1455 = vmul.f32 %v1439, 0.125
        %v1456 = vmul.f32 %v601, %v897
        %v1457 = vmul.f32 %v605, %v901
        %v1458 = vmul.f32 %v611, %v907
        %v1459 = vmul.f32 %v615, %v911
        %v1460 = vmul.f32 %v621, %v917
        %v1461 = vmul.f32 %v625, %v921
        %v1462 = vmul.f32 %v631, %v927
        %v1463 = vmul.f32 %v635, %v931
        %v1464 = vmul.f32 %v641, %v937
        %v1465 = vmul.f32 %v645, %v941
        %v1466 = vmul.f32 %v651, %v947
        %v1467 = vmul.f32 %v655, %v951
        %v1468 = vmul.f32 %v661, %v957
        %v1469 = vmul.f32 %v665, %v961
        %v1470 = vmul.f32 %v671, %v967
        %v1471 = vmul.f32 %v675, %v971
        %v1472 = vsel %vm1231, %v1456, 0.0
        %1473 = vadd.xlane.f32.xlu0 %v1472
        %v1474 = vpop.xlane.xlu0 %1473
        %v1475 = vsel %vm1231, %v1457, 0.0
        %1476 = vadd.xlane.f32.xlu0 %v1475
        %v1477 = vpop.xlane.xlu0 %1476
        %v1478 = vsel %vm1231, %v1458, 0.0
        %1479 = vadd.xlane.f32.xlu0 %v1478
        %v1480 = vpop.xlane.xlu0 %1479
        %v1481 = vsel %vm1231, %v1459, 0.0
        %1482 = vadd.xlane.f32.xlu0 %v1481
        %v1483 = vpop.xlane.xlu0 %1482
        %v1484 = vsel %vm1231, %v1460, 0.0
        %1485 = vadd.xlane.f32.xlu0 %v1484
        %v1486 = vpop.xlane.xlu0 %1485
        %v1487 = vsel %vm1231, %v1461, 0.0
        %1488 = vadd.xlane.f32.xlu0 %v1487
        %v1489 = vpop.xlane.xlu0 %1488
        %v1490 = vsel %vm1231, %v1462, 0.0
        %1491 = vadd.xlane.f32.xlu0 %v1490
        %v1492 = vpop.xlane.xlu0 %1491
        %v1493 = vsel %vm1231, %v1463, 0.0
        %1494 = vadd.xlane.f32.xlu0 %v1493
        %v1495 = vpop.xlane.xlu0 %1494
        %v1496 = vsel %vm1231, %v1464, 0.0
        %1497 = vadd.xlane.f32.xlu0 %v1496
        %v1498 = vpop.xlane.xlu0 %1497
        %v1499 = vsel %vm1231, %v1465, 0.0
        %1500 = vadd.xlane.f32.xlu0 %v1499
        %v1501 = vpop.xlane.xlu0 %1500
        %v1502 = vsel %vm1231, %v1466, 0.0
        %1503 = vadd.xlane.f32.xlu0 %v1502
        %v1504 = vpop.xlane.xlu0 %1503
        %v1505 = vsel %vm1231, %v1467, 0.0
        %1506 = vadd.xlane.f32.xlu0 %v1505
        %v1507 = vpop.xlane.xlu0 %1506
        %v1508 = vsel %vm1231, %v1468, 0.0
        %1509 = vadd.xlane.f32.xlu0 %v1508
        %v1510 = vpop.xlane.xlu0 %1509
        %v1511 = vsel %vm1231, %v1469, 0.0
        %1512 = vadd.xlane.f32.xlu0 %v1511
        %v1513 = vpop.xlane.xlu0 %1512
        %v1514 = vsel %vm1231, %v1470, 0.0
        %1515 = vadd.xlane.f32.xlu0 %v1514
        %v1516 = vpop.xlane.xlu0 %1515
        %v1517 = vsel %vm1231, %v1471, 0.0
        %1518 = vadd.xlane.f32.xlu0 %v1517
        %v1519 = vpop.xlane.xlu0 %1518
        %v1520 = vmul.f32 %v1474, 0.125
        %v1521 = vmul.f32 %v1477, 0.125
        %v1522 = vmul.f32 %v1480, 0.125
        %v1523 = vmul.f32 %v1483, 0.125
        %v1524 = vmul.f32 %v1486, 0.125
        %v1525 = vmul.f32 %v1489, 0.125
        %v1526 = vmul.f32 %v1492, 0.125
        %v1527 = vmul.f32 %v1495, 0.125
        %v1528 = vmul.f32 %v1498, 0.125
        %v1529 = vmul.f32 %v1501, 0.125
        %v1530 = vmul.f32 %v1504, 0.125
        %v1531 = vmul.f32 %v1507, 0.125
        %v1532 = vmul.f32 %v1510, 0.125
        %v1533 = vmul.f32 %v1513, 0.125
        %v1534 = vmul.f32 %v1516, 0.125
        %v1535 = vmul.f32 %v1519, 0.125
        %v1536 = vmax.f32 %v1280, %v1360
        %v1537 = vmax.f32 %v1281, %v1361
        %v1538 = vmax.f32 %v1282, %v1362
        %v1539 = vmax.f32 %v1283, %v1363
        %v1540 = vmax.f32 %v1284, %v1364
        %v1541 = vmax.f32 %v1285, %v1365
        %v1542 = vmax.f32 %v1286, %v1366
        %v1543 = vmax.f32 %v1287, %v1367
        %v1544 = vmax.f32 %v1288, %v1368
        %v1545 = vmax.f32 %v1289, %v1369
        %v1546 = vmax.f32 %v1290, %v1370
        %v1547 = vmax.f32 %v1291, %v1371
        %v1548 = vmax.f32 %v1292, %v1372
        %v1549 = vmax.f32 %v1293, %v1373
        %v1550 = vmax.f32 %v1294, %v1374
        %v1551 = vmax.f32 %v1295, %v1375
        %v1552 = vmax.f32 %v1536, %v1440
        %v1553 = vmax.f32 %v1537, %v1441
        %v1554 = vmax.f32 %v1538, %v1442
        %v1555 = vmax.f32 %v1539, %v1443
        %v1556 = vmax.f32 %v1540, %v1444
        %v1557 = vmax.f32 %v1541, %v1445
        %v1558 = vmax.f32 %v1542, %v1446
        %v1559 = vmax.f32 %v1543, %v1447
        %v1560 = vmax.f32 %v1544, %v1448
        %v1561 = vmax.f32 %v1545, %v1449
        %v1562 = vmax.f32 %v1546, %v1450
        %v1563 = vmax.f32 %v1547, %v1451
        %v1564 = vmax.f32 %v1548, %v1452
        %v1565 = vmax.f32 %v1549, %v1453
        %v1566 = vmax.f32 %v1550, %v1454
        %v1567 = vmax.f32 %v1551, %v1455
        %v1568 = vmax.f32 %v1552, %v1520
        %v1569 = vmax.f32 %v1553, %v1521
        %v1570 = vmax.f32 %v1554, %v1522
        %v1571 = vmax.f32 %v1555, %v1523
        %v1572 = vmax.f32 %v1556, %v1524
        %v1573 = vmax.f32 %v1557, %v1525
        %v1574 = vmax.f32 %v1558, %v1526
        %v1575 = vmax.f32 %v1559, %v1527
        %v1576 = vmax.f32 %v1560, %v1528
        %v1577 = vmax.f32 %v1561, %v1529
        %v1578 = vmax.f32 %v1562, %v1530
        %v1579 = vmax.f32 %v1563, %v1531
        %v1580 = vmax.f32 %v1564, %v1532
        %v1581 = vmax.f32 %v1565, %v1533
        %v1582 = vmax.f32 %v1566, %v1534
        %v1583 = vmax.f32 %v1567, %v1535
        %v1584 = vsub.f32 %v1280, %v1568
        %v1585 = vsub.f32 %v1281, %v1569
        %v1586 = vsub.f32 %v1282, %v1570
        %v1587 = vsub.f32 %v1283, %v1571
        %v1588 = vsub.f32 %v1284, %v1572
        %v1589 = vsub.f32 %v1285, %v1573
        %v1590 = vsub.f32 %v1286, %v1574
        %v1591 = vsub.f32 %v1287, %v1575
        %v1592 = vsub.f32 %v1288, %v1576
        %v1593 = vsub.f32 %v1289, %v1577
        %v1594 = vsub.f32 %v1290, %v1578
        %v1595 = vsub.f32 %v1291, %v1579
        %v1596 = vsub.f32 %v1292, %v1580
        %v1597 = vsub.f32 %v1293, %v1581
        %v1598 = vsub.f32 %v1294, %v1582
        %v1599 = vsub.f32 %v1295, %v1583
        %v1600 = vmul.f32 %v1584, 1.442695
        %v1601 = vpow.pop %v1600
        %v1602 = vmul.f32 %v1585, 1.442695
        %v1603 = vpow.pop %v1602
        %v1604 = vmul.f32 %v1586, 1.442695
        %v1605 = vpow.pop %v1604
        %v1606 = vmul.f32 %v1587, 1.442695
        %v1607 = vpow.pop %v1606
        %v1608 = vmul.f32 %v1588, 1.442695
        %v1609 = vpow.pop %v1608
        %v1610 = vmul.f32 %v1589, 1.442695
        %v1611 = vpow.pop %v1610
        %v1612 = vmul.f32 %v1590, 1.442695
        %v1613 = vpow.pop %v1612
        %v1614 = vmul.f32 %v1591, 1.442695
        %v1615 = vpow.pop %v1614
        %v1616 = vmul.f32 %v1592, 1.442695
        %v1617 = vpow.pop %v1616
        %v1618 = vmul.f32 %v1593, 1.442695
        %v1619 = vpow.pop %v1618
        %v1620 = vmul.f32 %v1594, 1.442695
        %v1621 = vpow.pop %v1620
        %v1622 = vmul.f32 %v1595, 1.442695
        %v1623 = vpow.pop %v1622
        %v1624 = vmul.f32 %v1596, 1.442695
        %v1625 = vpow.pop %v1624
        %v1626 = vmul.f32 %v1597, 1.442695
        %v1627 = vpow.pop %v1626
        %v1628 = vmul.f32 %v1598, 1.442695
        %v1629 = vpow.pop %v1628
        %v1630 = vmul.f32 %v1599, 1.442695
        %v1631 = vpow.pop %v1630
        %v1632 = vsub.f32 %v1360, %v1568
        %v1633 = vsub.f32 %v1361, %v1569
        %v1634 = vsub.f32 %v1362, %v1570
        %v1635 = vsub.f32 %v1363, %v1571
        %v1636 = vsub.f32 %v1364, %v1572
        %v1637 = vsub.f32 %v1365, %v1573
        %v1638 = vsub.f32 %v1366, %v1574
        %v1639 = vsub.f32 %v1367, %v1575
        %v1640 = vsub.f32 %v1368, %v1576
        %v1641 = vsub.f32 %v1369, %v1577
        %v1642 = vsub.f32 %v1370, %v1578
        %v1643 = vsub.f32 %v1371, %v1579
        %v1644 = vsub.f32 %v1372, %v1580
        %v1645 = vsub.f32 %v1373, %v1581
        %v1646 = vsub.f32 %v1374, %v1582
        %v1647 = vsub.f32 %v1375, %v1583
        %v1648 = vmul.f32 %v1632, 1.442695
        %v1649 = vpow.pop %v1648
        %v1650 = vmul.f32 %v1633, 1.442695
        %v1651 = vpow.pop %v1650
        %v1652 = vmul.f32 %v1634, 1.442695
        %v1653 = vpow.pop %v1652
        %v1654 = vmul.f32 %v1635, 1.442695
        %v1655 = vpow.pop %v1654
        %v1656 = vmul.f32 %v1636, 1.442695
        %v1657 = vpow.pop %v1656
        %v1658 = vmul.f32 %v1637, 1.442695
        %v1659 = vpow.pop %v1658
        %v1660 = vmul.f32 %v1638, 1.442695
        %v1661 = vpow.pop %v1660
        %v1662 = vmul.f32 %v1639, 1.442695
        %v1663 = vpow.pop %v1662
        %v1664 = vmul.f32 %v1640, 1.442695
        %v1665 = vpow.pop %v1664
        %v1666 = vmul.f32 %v1641, 1.442695
        %v1667 = vpow.pop %v1666
        %v1668 = vmul.f32 %v1642, 1.442695
        %v1669 = vpow.pop %v1668
        %v1670 = vmul.f32 %v1643, 1.442695
        %v1671 = vpow.pop %v1670
        %v1672 = vmul.f32 %v1644, 1.442695
        %v1673 = vpow.pop %v1672
        %v1674 = vmul.f32 %v1645, 1.442695
        %v1675 = vpow.pop %v1674
        %v1676 = vmul.f32 %v1646, 1.442695
        %v1677 = vpow.pop %v1676
        %v1678 = vmul.f32 %v1647, 1.442695
        %v1679 = vpow.pop %v1678
        %v1680 = vsub.f32 %v1440, %v1568
        %v1681 = vsub.f32 %v1441, %v1569
        %v1682 = vsub.f32 %v1442, %v1570
        %v1683 = vsub.f32 %v1443, %v1571
        %v1684 = vsub.f32 %v1444, %v1572
        %v1685 = vsub.f32 %v1445, %v1573
        %v1686 = vsub.f32 %v1446, %v1574
        %v1687 = vsub.f32 %v1447, %v1575
        %v1688 = vsub.f32 %v1448, %v1576
        %v1689 = vsub.f32 %v1449, %v1577
        %v1690 = vsub.f32 %v1450, %v1578
        %v1691 = vsub.f32 %v1451, %v1579
        %v1692 = vsub.f32 %v1452, %v1580
        %v1693 = vsub.f32 %v1453, %v1581
        %v1694 = vsub.f32 %v1454, %v1582
        %v1695 = vsub.f32 %v1455, %v1583
        %v1696 = vmul.f32 %v1680, 1.442695
        %v1697 = vpow.pop %v1696
        %v1698 = vmul.f32 %v1681, 1.442695
        %v1699 = vpow.pop %v1698
        %v1700 = vmul.f32 %v1682, 1.442695
        %v1701 = vpow.pop %v1700
        %v1702 = vmul.f32 %v1683, 1.442695
        %v1703 = vpow.pop %v1702
        %v1704 = vmul.f32 %v1684, 1.442695
        %v1705 = vpow.pop %v1704
        %v1706 = vmul.f32 %v1685, 1.442695
        %v1707 = vpow.pop %v1706
        %v1708 = vmul.f32 %v1686, 1.442695
        %v1709 = vpow.pop %v1708
        %v1710 = vmul.f32 %v1687, 1.442695
        %v1711 = vpow.pop %v1710
        %v1712 = vmul.f32 %v1688, 1.442695
        %v1713 = vpow.pop %v1712
        %v1714 = vmul.f32 %v1689, 1.442695
        %v1715 = vpow.pop %v1714
        %v1716 = vmul.f32 %v1690, 1.442695
        %v1717 = vpow.pop %v1716
        %v1718 = vmul.f32 %v1691, 1.442695
        %v1719 = vpow.pop %v1718
        %v1720 = vmul.f32 %v1692, 1.442695
        %v1721 = vpow.pop %v1720
        %v1722 = vmul.f32 %v1693, 1.442695
        %v1723 = vpow.pop %v1722
        %v1724 = vmul.f32 %v1694, 1.442695
        %v1725 = vpow.pop %v1724
        %v1726 = vmul.f32 %v1695, 1.442695
        %v1727 = vpow.pop %v1726
        %v1728 = vsub.f32 %v1520, %v1568
        %v1729 = vsub.f32 %v1521, %v1569
        %v1730 = vsub.f32 %v1522, %v1570
        %v1731 = vsub.f32 %v1523, %v1571
        %v1732 = vsub.f32 %v1524, %v1572
        %v1733 = vsub.f32 %v1525, %v1573
        %v1734 = vsub.f32 %v1526, %v1574
        %v1735 = vsub.f32 %v1527, %v1575
        %v1736 = vsub.f32 %v1528, %v1576
        %v1737 = vsub.f32 %v1529, %v1577
        %v1738 = vsub.f32 %v1530, %v1578
        %v1739 = vsub.f32 %v1531, %v1579
        %v1740 = vsub.f32 %v1532, %v1580
        %v1741 = vsub.f32 %v1533, %v1581
        %v1742 = vsub.f32 %v1534, %v1582
        %v1743 = vsub.f32 %v1535, %v1583
        %v1744 = vmul.f32 %v1728, 1.442695
        %v1745 = vpow.pop %v1744
        %v1746 = vmul.f32 %v1729, 1.442695
        %v1747 = vpow.pop %v1746
        %v1748 = vmul.f32 %v1730, 1.442695
        %v1749 = vpow.pop %v1748
        %v1750 = vmul.f32 %v1731, 1.442695
        %v1751 = vpow.pop %v1750
        %v1752 = vmul.f32 %v1732, 1.442695
        %v1753 = vpow.pop %v1752
        %v1754 = vmul.f32 %v1733, 1.442695
        %v1755 = vpow.pop %v1754
        %v1756 = vmul.f32 %v1734, 1.442695
        %v1757 = vpow.pop %v1756
        %v1758 = vmul.f32 %v1735, 1.442695
        %v1759 = vpow.pop %v1758
        %v1760 = vmul.f32 %v1736, 1.442695
        %v1761 = vpow.pop %v1760
        %v1762 = vmul.f32 %v1737, 1.442695
        %v1763 = vpow.pop %v1762
        %v1764 = vmul.f32 %v1738, 1.442695
        %v1765 = vpow.pop %v1764
        %v1766 = vmul.f32 %v1739, 1.442695
        %v1767 = vpow.pop %v1766
        %v1768 = vmul.f32 %v1740, 1.442695
        %v1769 = vpow.pop %v1768
        %v1770 = vmul.f32 %v1741, 1.442695
        %v1771 = vpow.pop %v1770
        %v1772 = vmul.f32 %v1742, 1.442695
        %v1773 = vpow.pop %v1772
        %v1774 = vmul.f32 %v1743, 1.442695
        %v1775 = vpow.pop %v1774
        %v1776 = vadd.f32 %v1601, %v1649
        %v1777 = vadd.f32 %v1603, %v1651
        %v1778 = vadd.f32 %v1605, %v1653
        %v1779 = vadd.f32 %v1607, %v1655
        %v1780 = vadd.f32 %v1609, %v1657
        %v1781 = vadd.f32 %v1611, %v1659
        %v1782 = vadd.f32 %v1613, %v1661
        %v1783 = vadd.f32 %v1615, %v1663
        %v1784 = vadd.f32 %v1617, %v1665
        %v1785 = vadd.f32 %v1619, %v1667
        %v1786 = vadd.f32 %v1621, %v1669
        %v1787 = vadd.f32 %v1623, %v1671
        %v1788 = vadd.f32 %v1625, %v1673
        %v1789 = vadd.f32 %v1627, %v1675
        %v1790 = vadd.f32 %v1629, %v1677
        %v1791 = vadd.f32 %v1631, %v1679
        %v1792 = vadd.f32 %v1776, %v1697
        %v1793 = vadd.f32 %v1777, %v1699
        %v1794 = vadd.f32 %v1778, %v1701
        %v1795 = vadd.f32 %v1779, %v1703
        %v1796 = vadd.f32 %v1780, %v1705
        %v1797 = vadd.f32 %v1781, %v1707
        %v1798 = vadd.f32 %v1782, %v1709
        %v1799 = vadd.f32 %v1783, %v1711
        %v1800 = vadd.f32 %v1784, %v1713
        %v1801 = vadd.f32 %v1785, %v1715
        %v1802 = vadd.f32 %v1786, %v1717
        %v1803 = vadd.f32 %v1787, %v1719
        %v1804 = vadd.f32 %v1788, %v1721
        %v1805 = vadd.f32 %v1789, %v1723
        %v1806 = vadd.f32 %v1790, %v1725
        %v1807 = vadd.f32 %v1791, %v1727
        %v1808 = vadd.f32 %v1792, %v1745
        %v1809 = vadd.f32 %v1793, %v1747
        %v1810 = vadd.f32 %v1794, %v1749
        %v1811 = vadd.f32 %v1795, %v1751
        %v1812 = vadd.f32 %v1796, %v1753
        %v1813 = vadd.f32 %v1797, %v1755
        %v1814 = vadd.f32 %v1798, %v1757
        %v1815 = vadd.f32 %v1799, %v1759
        %v1816 = vadd.f32 %v1800, %v1761
        %v1817 = vadd.f32 %v1801, %v1763
        %v1818 = vadd.f32 %v1802, %v1765
        %v1819 = vadd.f32 %v1803, %v1767
        %v1820 = vadd.f32 %v1804, %v1769
        %v1821 = vadd.f32 %v1805, %v1771
        %v1822 = vadd.f32 %v1806, %v1773
        %v1823 = vadd.f32 %v1807, %v1775
        %v1824 = vrcp.pop %v1808
        %v1825 = vrcp.pop %v1809
        %v1826 = vrcp.pop %v1810
        %v1827 = vrcp.pop %v1811
        %v1828 = vrcp.pop %v1812
        %v1829 = vrcp.pop %v1813
        %v1830 = vrcp.pop %v1814
        %v1831 = vrcp.pop %v1815
        %v1832 = vrcp.pop %v1816
        %v1833 = vrcp.pop %v1817
        %v1834 = vrcp.pop %v1818
        %v1835 = vrcp.pop %v1819
        %v1836 = vrcp.pop %v1820
        %v1837 = vrcp.pop %v1821
        %v1838 = vrcp.pop %v1822
        %v1839 = vrcp.pop %v1823
        %v1840 = vmul.f32 %v1601, %v1824
        %v1841 = vmul.f32 %v1603, %v1825
        %v1842 = vmul.f32 %v1605, %v1826
        %v1843 = vmul.f32 %v1607, %v1827
        %v1844 = vmul.f32 %v1609, %v1828
        %v1845 = vmul.f32 %v1611, %v1829
        %v1846 = vmul.f32 %v1613, %v1830
        %v1847 = vmul.f32 %v1615, %v1831
        %v1848 = vmul.f32 %v1617, %v1832
        %v1849 = vmul.f32 %v1619, %v1833
        %v1850 = vmul.f32 %v1621, %v1834
        %v1851 = vmul.f32 %v1623, %v1835
        %v1852 = vmul.f32 %v1625, %v1836
        %v1853 = vmul.f32 %v1627, %v1837
        %v1854 = vmul.f32 %v1629, %v1838
        %v1855 = vmul.f32 %v1631, %v1839
        %v1856 = vmul.f32 %v1840, %v774
        %v1857 = vmul.f32 %v1841, %v778
        %v1858 = vmul.f32 %v1842, %v784
        %v1859 = vmul.f32 %v1843, %v788
        %v1860 = vmul.f32 %v1844, %v794
        %v1861 = vmul.f32 %v1845, %v798
        %v1862 = vmul.f32 %v1846, %v804
        %v1863 = vmul.f32 %v1847, %v808
        %v1864 = vmul.f32 %v1848, %v814
        %v1865 = vmul.f32 %v1849, %v818
        %v1866 = vmul.f32 %v1850, %v824
        %v1867 = vmul.f32 %v1851, %v828
        %v1868 = vmul.f32 %v1852, %v834
        %v1869 = vmul.f32 %v1853, %v838
        %v1870 = vmul.f32 %v1854, %v844
        %v1871 = vmul.f32 %v1855, %v848
        %v1872 = vmul.f32 %v1649, %v1824
        %v1873 = vmul.f32 %v1651, %v1825
        %v1874 = vmul.f32 %v1653, %v1826
        %v1875 = vmul.f32 %v1655, %v1827
        %v1876 = vmul.f32 %v1657, %v1828
        %v1877 = vmul.f32 %v1659, %v1829
        %v1878 = vmul.f32 %v1661, %v1830
        %v1879 = vmul.f32 %v1663, %v1831
        %v1880 = vmul.f32 %v1665, %v1832
        %v1881 = vmul.f32 %v1667, %v1833
        %v1882 = vmul.f32 %v1669, %v1834
        %v1883 = vmul.f32 %v1671, %v1835
        %v1884 = vmul.f32 %v1673, %v1836
        %v1885 = vmul.f32 %v1675, %v1837
        %v1886 = vmul.f32 %v1677, %v1838
        %v1887 = vmul.f32 %v1679, %v1839
        %v1888 = vmul.f32 %v1872, %v776
        %v1889 = vmul.f32 %v1873, %v780
        %v1890 = vmul.f32 %v1874, %v786
        %v1891 = vmul.f32 %v1875, %v790
        %v1892 = vmul.f32 %v1876, %v796
        %v1893 = vmul.f32 %v1877, %v800
        %v1894 = vmul.f32 %v1878, %v806
        %v1895 = vmul.f32 %v1879, %v810
        %v1896 = vmul.f32 %v1880, %v816
        %v1897 = vmul.f32 %v1881, %v820
        %v1898 = vmul.f32 %v1882, %v826
        %v1899 = vmul.f32 %v1883, %v830
        %v1900 = vmul.f32 %v1884, %v836
        %v1901 = vmul.f32 %v1885, %v840
        %v1902 = vmul.f32 %v1886, %v846
        %v1903 = vmul.f32 %v1887, %v850
        %v1904 = vadd.f32 %v1856, %v1888
        %v1905 = vadd.f32 %v1857, %v1889
        %v1906 = vadd.f32 %v1858, %v1890
        %v1907 = vadd.f32 %v1859, %v1891
        %v1908 = vadd.f32 %v1860, %v1892
        %v1909 = vadd.f32 %v1861, %v1893
        %v1910 = vadd.f32 %v1862, %v1894
        %v1911 = vadd.f32 %v1863, %v1895
        %v1912 = vadd.f32 %v1864, %v1896
        %v1913 = vadd.f32 %v1865, %v1897
        %v1914 = vadd.f32 %v1866, %v1898
        %v1915 = vadd.f32 %v1867, %v1899
        %v1916 = vadd.f32 %v1868, %v1900
        %v1917 = vadd.f32 %v1869, %v1901
        %v1918 = vadd.f32 %v1870, %v1902
        %v1919 = vadd.f32 %v1871, %v1903
        %v1920 = vmul.f32 %v1697, %v1824
        %v1921 = vmul.f32 %v1699, %v1825
        %v1922 = vmul.f32 %v1701, %v1826
        %v1923 = vmul.f32 %v1703, %v1827
        %v1924 = vmul.f32 %v1705, %v1828
        %v1925 = vmul.f32 %v1707, %v1829
        %v1926 = vmul.f32 %v1709, %v1830
        %v1927 = vmul.f32 %v1711, %v1831
        %v1928 = vmul.f32 %v1713, %v1832
        %v1929 = vmul.f32 %v1715, %v1833
        %v1930 = vmul.f32 %v1717, %v1834
        %v1931 = vmul.f32 %v1719, %v1835
        %v1932 = vmul.f32 %v1721, %v1836
        %v1933 = vmul.f32 %v1723, %v1837
        %v1934 = vmul.f32 %v1725, %v1838
        %v1935 = vmul.f32 %v1727, %v1839
        %v1936 = vmul.f32 %v1920, %v895
        %v1937 = vmul.f32 %v1921, %v899
        %v1938 = vmul.f32 %v1922, %v905
        %v1939 = vmul.f32 %v1923, %v909
        %v1940 = vmul.f32 %v1924, %v915
        %v1941 = vmul.f32 %v1925, %v919
        %v1942 = vmul.f32 %v1926, %v925
        %v1943 = vmul.f32 %v1927, %v929
        %v1944 = vmul.f32 %v1928, %v935
        %v1945 = vmul.f32 %v1929, %v939
        %v1946 = vmul.f32 %v1930, %v945
        %v1947 = vmul.f32 %v1931, %v949
        %v1948 = vmul.f32 %v1932, %v955
        %v1949 = vmul.f32 %v1933, %v959
        %v1950 = vmul.f32 %v1934, %v965
        %v1951 = vmul.f32 %v1935, %v969
        %v1952 = vadd.f32 %v1904, %v1936
        %v1953 = vadd.f32 %v1905, %v1937
        %v1954 = vadd.f32 %v1906, %v1938
        %v1955 = vadd.f32 %v1907, %v1939
        %v1956 = vadd.f32 %v1908, %v1940
        %v1957 = vadd.f32 %v1909, %v1941
        %v1958 = vadd.f32 %v1910, %v1942
        %v1959 = vadd.f32 %v1911, %v1943
        %v1960 = vadd.f32 %v1912, %v1944
        %v1961 = vadd.f32 %v1913, %v1945
        %v1962 = vadd.f32 %v1914, %v1946
        %v1963 = vadd.f32 %v1915, %v1947
        %v1964 = vadd.f32 %v1916, %v1948
        %v1965 = vadd.f32 %v1917, %v1949
        %v1966 = vadd.f32 %v1918, %v1950
        %v1967 = vadd.f32 %v1919, %v1951
        %v1968 = vmul.f32 %v1745, %v1824
        %v1969 = vmul.f32 %v1747, %v1825
        %v1970 = vmul.f32 %v1749, %v1826
        %v1971 = vmul.f32 %v1751, %v1827
        %v1972 = vmul.f32 %v1753, %v1828
        %v1973 = vmul.f32 %v1755, %v1829
        %v1974 = vmul.f32 %v1757, %v1830
        %v1975 = vmul.f32 %v1759, %v1831
        %v1976 = vmul.f32 %v1761, %v1832
        %v1977 = vmul.f32 %v1763, %v1833
        %v1978 = vmul.f32 %v1765, %v1834
        %v1979 = vmul.f32 %v1767, %v1835
        %v1980 = vmul.f32 %v1769, %v1836
        %v1981 = vmul.f32 %v1771, %v1837
        %v1982 = vmul.f32 %v1773, %v1838
        %v1983 = vmul.f32 %v1775, %v1839
        %v1984 = vmul.f32 %v1968, %v897
        %v1985 = vmul.f32 %v1969, %v901
        %v1986 = vmul.f32 %v1970, %v907
        %v1987 = vmul.f32 %v1971, %v911
        %v1988 = vmul.f32 %v1972, %v917
        %v1989 = vmul.f32 %v1973, %v921
        %v1990 = vmul.f32 %v1974, %v927
        %v1991 = vmul.f32 %v1975, %v931
        %v1992 = vmul.f32 %v1976, %v937
        %v1993 = vmul.f32 %v1977, %v941
        %v1994 = vmul.f32 %v1978, %v947
        %v1995 = vmul.f32 %v1979, %v951
        %v1996 = vmul.f32 %v1980, %v957
        %v1997 = vmul.f32 %v1981, %v961
        %v1998 = vmul.f32 %v1982, %v967
        %v1999 = vmul.f32 %v1983, %v971
        %v2000 = vadd.f32 %v1952, %v1984
        %v2001 = vadd.f32 %v1953, %v1985
        %v2002 = vadd.f32 %v1954, %v1986
        %v2003 = vadd.f32 %v1955, %v1987
        %v2004 = vadd.f32 %v1956, %v1988
        %v2005 = vadd.f32 %v1957, %v1989
        %v2006 = vadd.f32 %v1958, %v1990
        %v2007 = vadd.f32 %v1959, %v1991
        %v2008 = vadd.f32 %v1960, %v1992
        %v2009 = vadd.f32 %v1961, %v1993
        %v2010 = vadd.f32 %v1962, %v1994
        %v2011 = vadd.f32 %v1963, %v1995
        %v2012 = vadd.f32 %v1964, %v1996
        %v2013 = vadd.f32 %v1965, %v1997
        %v2014 = vadd.f32 %v1966, %v1998
        %v2015 = vadd.f32 %v1967, %v1999
        %2032 = vrot.lane.b32.xlu0 %v774, 64
        %v2033 = vpop.permute.xlu0 %2032
        %2034 = vrot.lane.b32.xlu0 %v778, 64
        %v2035 = vpop.permute.xlu0 %2034
        %2036 = vrot.lane.b32.xlu0 %v784, 64
        %v2037 = vpop.permute.xlu0 %2036
        %2038 = vrot.lane.b32.xlu0 %v788, 64
        %v2039 = vpop.permute.xlu0 %2038
        %2040 = vrot.lane.b32.xlu0 %v794, 64
        %v2041 = vpop.permute.xlu0 %2040
        %2042 = vrot.lane.b32.xlu0 %v798, 64
        %v2043 = vpop.permute.xlu0 %2042
        %2044 = vrot.lane.b32.xlu0 %v804, 64
        %v2045 = vpop.permute.xlu0 %2044
        %2046 = vrot.lane.b32.xlu0 %v808, 64
        %v2047 = vpop.permute.xlu0 %2046
        %2048 = vrot.lane.b32.xlu0 %v814, 64
        %v2049 = vpop.permute.xlu0 %2048
        %2050 = vrot.lane.b32.xlu0 %v818, 64
        %v2051 = vpop.permute.xlu0 %2050
        %2052 = vrot.lane.b32.xlu0 %v824, 64
        %v2053 = vpop.permute.xlu0 %2052
        %2054 = vrot.lane.b32.xlu0 %v828, 64
        %v2055 = vpop.permute.xlu0 %2054
        %2056 = vrot.lane.b32.xlu0 %v834, 64
        %v2057 = vpop.permute.xlu0 %2056
        %2058 = vrot.lane.b32.xlu0 %v838, 64
        %v2059 = vpop.permute.xlu0 %2058
        %2060 = vrot.lane.b32.xlu0 %v844, 64
        %v2061 = vpop.permute.xlu0 %2060
        %2062 = vrot.lane.b32.xlu0 %v848, 64
        %v2063 = vpop.permute.xlu0 %2062
        %v2080 = vmul.f32 %v601, %v2033
        %v2081 = vmul.f32 %v605, %v2035
        %v2082 = vmul.f32 %v611, %v2037
        %v2083 = vmul.f32 %v615, %v2039
        %v2084 = vmul.f32 %v621, %v2041
        %v2085 = vmul.f32 %v625, %v2043
        %v2086 = vmul.f32 %v631, %v2045
        %v2087 = vmul.f32 %v635, %v2047
        %v2088 = vmul.f32 %v641, %v2049
        %v2089 = vmul.f32 %v645, %v2051
        %v2090 = vmul.f32 %v651, %v2053
        %v2091 = vmul.f32 %v655, %v2055
        %v2092 = vmul.f32 %v661, %v2057
        %v2093 = vmul.f32 %v665, %v2059
        %v2094 = vmul.f32 %v671, %v2061
        %v2095 = vmul.f32 %v675, %v2063
        %2112 = vrot.lane.b32.xlu0 %v2080, 64
        %v2113 = vpop.permute.xlu0 %2112
        %2114 = vrot.lane.b32.xlu0 %v2081, 64
        %v2115 = vpop.permute.xlu0 %2114
        %2116 = vrot.lane.b32.xlu0 %v2082, 64
        %v2117 = vpop.permute.xlu0 %2116
        %2118 = vrot.lane.b32.xlu0 %v2083, 64
        %v2119 = vpop.permute.xlu0 %2118
        %2120 = vrot.lane.b32.xlu0 %v2084, 64
        %v2121 = vpop.permute.xlu0 %2120
        %2122 = vrot.lane.b32.xlu0 %v2085, 64
        %v2123 = vpop.permute.xlu0 %2122
        %2124 = vrot.lane.b32.xlu0 %v2086, 64
        %v2125 = vpop.permute.xlu0 %2124
        %2126 = vrot.lane.b32.xlu0 %v2087, 64
        %v2127 = vpop.permute.xlu0 %2126
        %2128 = vrot.lane.b32.xlu0 %v2088, 64
        %v2129 = vpop.permute.xlu0 %2128
        %2130 = vrot.lane.b32.xlu0 %v2089, 64
        %v2131 = vpop.permute.xlu0 %2130
        %2132 = vrot.lane.b32.xlu0 %v2090, 64
        %v2133 = vpop.permute.xlu0 %2132
        %2134 = vrot.lane.b32.xlu0 %v2091, 64
        %v2135 = vpop.permute.xlu0 %2134
        %2136 = vrot.lane.b32.xlu0 %v2092, 64
        %v2137 = vpop.permute.xlu0 %2136
        %2138 = vrot.lane.b32.xlu0 %v2093, 64
        %v2139 = vpop.permute.xlu0 %2138
        %2140 = vrot.lane.b32.xlu0 %v2094, 64
        %v2141 = vpop.permute.xlu0 %2140
        %2142 = vrot.lane.b32.xlu0 %v2095, 64
        %v2143 = vpop.permute.xlu0 %2142
        %v2160 = vsel %vm1231, %v2113, 0.0
        %2161 = vadd.xlane.f32.xlu0 %v2160
        %v2162 = vpop.xlane.xlu0 %2161
        %v2163 = vsel %vm1231, %v2115, 0.0
        %2164 = vadd.xlane.f32.xlu0 %v2163
        %v2165 = vpop.xlane.xlu0 %2164
        %v2166 = vsel %vm1231, %v2117, 0.0
        %2167 = vadd.xlane.f32.xlu0 %v2166
        %v2168 = vpop.xlane.xlu0 %2167
        %v2169 = vsel %vm1231, %v2119, 0.0
        %2170 = vadd.xlane.f32.xlu0 %v2169
        %v2171 = vpop.xlane.xlu0 %2170
        %v2172 = vsel %vm1231, %v2121, 0.0
        %2173 = vadd.xlane.f32.xlu0 %v2172
        %v2174 = vpop.xlane.xlu0 %2173
        %v2175 = vsel %vm1231, %v2123, 0.0
        %2176 = vadd.xlane.f32.xlu0 %v2175
        %v2177 = vpop.xlane.xlu0 %2176
        %v2178 = vsel %vm1231, %v2125, 0.0
        %2179 = vadd.xlane.f32.xlu0 %v2178
        %v2180 = vpop.xlane.xlu0 %2179
        %v2181 = vsel %vm1231, %v2127, 0.0
        %2182 = vadd.xlane.f32.xlu0 %v2181
        %v2183 = vpop.xlane.xlu0 %2182
        %v2184 = vsel %vm1231, %v2129, 0.0
        %2185 = vadd.xlane.f32.xlu0 %v2184
        %v2186 = vpop.xlane.xlu0 %2185
        %v2187 = vsel %vm1231, %v2131, 0.0
        %2188 = vadd.xlane.f32.xlu0 %v2187
        %v2189 = vpop.xlane.xlu0 %2188
        %v2190 = vsel %vm1231, %v2133, 0.0
        %2191 = vadd.xlane.f32.xlu0 %v2190
        %v2192 = vpop.xlane.xlu0 %2191
        %v2193 = vsel %vm1231, %v2135, 0.0
        %2194 = vadd.xlane.f32.xlu0 %v2193
        %v2195 = vpop.xlane.xlu0 %2194
        %v2196 = vsel %vm1231, %v2137, 0.0
        %2197 = vadd.xlane.f32.xlu0 %v2196
        %v2198 = vpop.xlane.xlu0 %2197
        %v2199 = vsel %vm1231, %v2139, 0.0
        %2200 = vadd.xlane.f32.xlu0 %v2199
        %v2201 = vpop.xlane.xlu0 %2200
        %v2202 = vsel %vm1231, %v2141, 0.0
        %2203 = vadd.xlane.f32.xlu0 %v2202
        %v2204 = vpop.xlane.xlu0 %2203
        %v2205 = vsel %vm1231, %v2143, 0.0
        %2206 = vadd.xlane.f32.xlu0 %v2205
        %v2207 = vpop.xlane.xlu0 %2206
        %v2208 = vmul.f32 %v2162, 0.125
        %v2209 = vmul.f32 %v2165, 0.125
        %v2210 = vmul.f32 %v2168, 0.125
        %v2211 = vmul.f32 %v2171, 0.125
        %v2212 = vmul.f32 %v2174, 0.125
        %v2213 = vmul.f32 %v2177, 0.125
        %v2214 = vmul.f32 %v2180, 0.125
        %v2215 = vmul.f32 %v2183, 0.125
        %v2216 = vmul.f32 %v2186, 0.125
        %v2217 = vmul.f32 %v2189, 0.125
        %v2218 = vmul.f32 %v2192, 0.125
        %v2219 = vmul.f32 %v2195, 0.125
        %v2220 = vmul.f32 %v2198, 0.125
        %v2221 = vmul.f32 %v2201, 0.125
        %v2222 = vmul.f32 %v2204, 0.125
        %v2223 = vmul.f32 %v2207, 0.125
        %2240 = vrot.lane.b32.xlu0 %v776, 64
        %v2241 = vpop.permute.xlu0 %2240
        %2242 = vrot.lane.b32.xlu0 %v780, 64
        %v2243 = vpop.permute.xlu0 %2242
        %2244 = vrot.lane.b32.xlu0 %v786, 64
        %v2245 = vpop.permute.xlu0 %2244
        %2246 = vrot.lane.b32.xlu0 %v790, 64
        %v2247 = vpop.permute.xlu0 %2246
        %2248 = vrot.lane.b32.xlu0 %v796, 64
        %v2249 = vpop.permute.xlu0 %2248
        %2250 = vrot.lane.b32.xlu0 %v800, 64
        %v2251 = vpop.permute.xlu0 %2250
        %2252 = vrot.lane.b32.xlu0 %v806, 64
        %v2253 = vpop.permute.xlu0 %2252
        %2254 = vrot.lane.b32.xlu0 %v810, 64
        %v2255 = vpop.permute.xlu0 %2254
        %2256 = vrot.lane.b32.xlu0 %v816, 64
        %v2257 = vpop.permute.xlu0 %2256
        %2258 = vrot.lane.b32.xlu0 %v820, 64
        %v2259 = vpop.permute.xlu0 %2258
        %2260 = vrot.lane.b32.xlu0 %v826, 64
        %v2261 = vpop.permute.xlu0 %2260
        %2262 = vrot.lane.b32.xlu0 %v830, 64
        %v2263 = vpop.permute.xlu0 %2262
        %2264 = vrot.lane.b32.xlu0 %v836, 64
        %v2265 = vpop.permute.xlu0 %2264
        %2266 = vrot.lane.b32.xlu0 %v840, 64
        %v2267 = vpop.permute.xlu0 %2266
        %2268 = vrot.lane.b32.xlu0 %v846, 64
        %v2269 = vpop.permute.xlu0 %2268
        %2270 = vrot.lane.b32.xlu0 %v850, 64
        %v2271 = vpop.permute.xlu0 %2270
        %v2288 = vmul.f32 %v601, %v2241
        %v2289 = vmul.f32 %v605, %v2243
        %v2290 = vmul.f32 %v611, %v2245
        %v2291 = vmul.f32 %v615, %v2247
        %v2292 = vmul.f32 %v621, %v2249
        %v2293 = vmul.f32 %v625, %v2251
        %v2294 = vmul.f32 %v631, %v2253
        %v2295 = vmul.f32 %v635, %v2255
        %v2296 = vmul.f32 %v641, %v2257
        %v2297 = vmul.f32 %v645, %v2259
        %v2298 = vmul.f32 %v651, %v2261
        %v2299 = vmul.f32 %v655, %v2263
        %v2300 = vmul.f32 %v661, %v2265
        %v2301 = vmul.f32 %v665, %v2267
        %v2302 = vmul.f32 %v671, %v2269
        %v2303 = vmul.f32 %v675, %v2271
        %2320 = vrot.lane.b32.xlu0 %v2288, 64
        %v2321 = vpop.permute.xlu0 %2320
        %2322 = vrot.lane.b32.xlu0 %v2289, 64
        %v2323 = vpop.permute.xlu0 %2322
        %2324 = vrot.lane.b32.xlu0 %v2290, 64
        %v2325 = vpop.permute.xlu0 %2324
        %2326 = vrot.lane.b32.xlu0 %v2291, 64
        %v2327 = vpop.permute.xlu0 %2326
        %2328 = vrot.lane.b32.xlu0 %v2292, 64
        %v2329 = vpop.permute.xlu0 %2328
        %2330 = vrot.lane.b32.xlu0 %v2293, 64
        %v2331 = vpop.permute.xlu0 %2330
        %2332 = vrot.lane.b32.xlu0 %v2294, 64
        %v2333 = vpop.permute.xlu0 %2332
        %2334 = vrot.lane.b32.xlu0 %v2295, 64
        %v2335 = vpop.permute.xlu0 %2334
        %2336 = vrot.lane.b32.xlu0 %v2296, 64
        %v2337 = vpop.permute.xlu0 %2336
        %2338 = vrot.lane.b32.xlu0 %v2297, 64
        %v2339 = vpop.permute.xlu0 %2338
        %2340 = vrot.lane.b32.xlu0 %v2298, 64
        %v2341 = vpop.permute.xlu0 %2340
        %2342 = vrot.lane.b32.xlu0 %v2299, 64
        %v2343 = vpop.permute.xlu0 %2342
        %2344 = vrot.lane.b32.xlu0 %v2300, 64
        %v2345 = vpop.permute.xlu0 %2344
        %2346 = vrot.lane.b32.xlu0 %v2301, 64
        %v2347 = vpop.permute.xlu0 %2346
        %2348 = vrot.lane.b32.xlu0 %v2302, 64
        %v2349 = vpop.permute.xlu0 %2348
        %2350 = vrot.lane.b32.xlu0 %v2303, 64
        %v2351 = vpop.permute.xlu0 %2350
        %v2368 = vsel %vm1231, %v2321, 0.0
        %2369 = vadd.xlane.f32.xlu0 %v2368
        %v2370 = vpop.xlane.xlu0 %2369
        %v2371 = vsel %vm1231, %v2323, 0.0
        %2372 = vadd.xlane.f32.xlu0 %v2371
        %v2373 = vpop.xlane.xlu0 %2372
        %v2374 = vsel %vm1231, %v2325, 0.0
        %2375 = vadd.xlane.f32.xlu0 %v2374
        %v2376 = vpop.xlane.xlu0 %2375
        %v2377 = vsel %vm1231, %v2327, 0.0
        %2378 = vadd.xlane.f32.xlu0 %v2377
        %v2379 = vpop.xlane.xlu0 %2378
        %v2380 = vsel %vm1231, %v2329, 0.0
        %2381 = vadd.xlane.f32.xlu0 %v2380
        %v2382 = vpop.xlane.xlu0 %2381
        %v2383 = vsel %vm1231, %v2331, 0.0
        %2384 = vadd.xlane.f32.xlu0 %v2383
        %v2385 = vpop.xlane.xlu0 %2384
        %v2386 = vsel %vm1231, %v2333, 0.0
        %2387 = vadd.xlane.f32.xlu0 %v2386
        %v2388 = vpop.xlane.xlu0 %2387
        %v2389 = vsel %vm1231, %v2335, 0.0
        %2390 = vadd.xlane.f32.xlu0 %v2389
        %v2391 = vpop.xlane.xlu0 %2390
        %v2392 = vsel %vm1231, %v2337, 0.0
        %2393 = vadd.xlane.f32.xlu0 %v2392
        %v2394 = vpop.xlane.xlu0 %2393
        %v2395 = vsel %vm1231, %v2339, 0.0
        %2396 = vadd.xlane.f32.xlu0 %v2395
        %v2397 = vpop.xlane.xlu0 %2396
        %v2398 = vsel %vm1231, %v2341, 0.0
        %2399 = vadd.xlane.f32.xlu0 %v2398
        %v2400 = vpop.xlane.xlu0 %2399
        %v2401 = vsel %vm1231, %v2343, 0.0
        %2402 = vadd.xlane.f32.xlu0 %v2401
        %v2403 = vpop.xlane.xlu0 %2402
        %v2404 = vsel %vm1231, %v2345, 0.0
        %2405 = vadd.xlane.f32.xlu0 %v2404
        %v2406 = vpop.xlane.xlu0 %2405
        %v2407 = vsel %vm1231, %v2347, 0.0
        %2408 = vadd.xlane.f32.xlu0 %v2407
        %v2409 = vpop.xlane.xlu0 %2408
        %v2410 = vsel %vm1231, %v2349, 0.0
        %2411 = vadd.xlane.f32.xlu0 %v2410
        %v2412 = vpop.xlane.xlu0 %2411
        %v2413 = vsel %vm1231, %v2351, 0.0
        %2414 = vadd.xlane.f32.xlu0 %v2413
        %v2415 = vpop.xlane.xlu0 %2414
        %v2416 = vmul.f32 %v2370, 0.125
        %v2417 = vmul.f32 %v2373, 0.125
        %v2418 = vmul.f32 %v2376, 0.125
        %v2419 = vmul.f32 %v2379, 0.125
        %v2420 = vmul.f32 %v2382, 0.125
        %v2421 = vmul.f32 %v2385, 0.125
        %v2422 = vmul.f32 %v2388, 0.125
        %v2423 = vmul.f32 %v2391, 0.125
        %v2424 = vmul.f32 %v2394, 0.125
        %v2425 = vmul.f32 %v2397, 0.125
        %v2426 = vmul.f32 %v2400, 0.125
        %v2427 = vmul.f32 %v2403, 0.125
        %v2428 = vmul.f32 %v2406, 0.125
        %v2429 = vmul.f32 %v2409, 0.125
        %v2430 = vmul.f32 %v2412, 0.125
        %v2431 = vmul.f32 %v2415, 0.125
        %2448 = vrot.lane.b32.xlu0 %v895, 64
        %v2449 = vpop.permute.xlu0 %2448
        %2450 = vrot.lane.b32.xlu0 %v899, 64
        %v2451 = vpop.permute.xlu0 %2450
        %2452 = vrot.lane.b32.xlu0 %v905, 64
        %v2453 = vpop.permute.xlu0 %2452
        %2454 = vrot.lane.b32.xlu0 %v909, 64
        %v2455 = vpop.permute.xlu0 %2454
        %2456 = vrot.lane.b32.xlu0 %v915, 64
        %v2457 = vpop.permute.xlu0 %2456
        %2458 = vrot.lane.b32.xlu0 %v919, 64
        %v2459 = vpop.permute.xlu0 %2458
        %2460 = vrot.lane.b32.xlu0 %v925, 64
        %v2461 = vpop.permute.xlu0 %2460
        %2462 = vrot.lane.b32.xlu0 %v929, 64
        %v2463 = vpop.permute.xlu0 %2462
        %2464 = vrot.lane.b32.xlu0 %v935, 64
        %v2465 = vpop.permute.xlu0 %2464
        %2466 = vrot.lane.b32.xlu0 %v939, 64
        %v2467 = vpop.permute.xlu0 %2466
        %2468 = vrot.lane.b32.xlu0 %v945, 64
        %v2469 = vpop.permute.xlu0 %2468
        %2470 = vrot.lane.b32.xlu0 %v949, 64
        %v2471 = vpop.permute.xlu0 %2470
        %2472 = vrot.lane.b32.xlu0 %v955, 64
        %v2473 = vpop.permute.xlu0 %2472
        %2474 = vrot.lane.b32.xlu0 %v959, 64
        %v2475 = vpop.permute.xlu0 %2474
        %2476 = vrot.lane.b32.xlu0 %v965, 64
        %v2477 = vpop.permute.xlu0 %2476
        %2478 = vrot.lane.b32.xlu0 %v969, 64
        %v2479 = vpop.permute.xlu0 %2478
        %v2496 = vmul.f32 %v601, %v2449
        %v2497 = vmul.f32 %v605, %v2451
        %v2498 = vmul.f32 %v611, %v2453
        %v2499 = vmul.f32 %v615, %v2455
        %v2500 = vmul.f32 %v621, %v2457
        %v2501 = vmul.f32 %v625, %v2459
        %v2502 = vmul.f32 %v631, %v2461
        %v2503 = vmul.f32 %v635, %v2463
        %v2504 = vmul.f32 %v641, %v2465
        %v2505 = vmul.f32 %v645, %v2467
        %v2506 = vmul.f32 %v651, %v2469
        %v2507 = vmul.f32 %v655, %v2471
        %v2508 = vmul.f32 %v661, %v2473
        %v2509 = vmul.f32 %v665, %v2475
        %v2510 = vmul.f32 %v671, %v2477
        %v2511 = vmul.f32 %v675, %v2479
        %2528 = vrot.lane.b32.xlu0 %v2496, 64
        %v2529 = vpop.permute.xlu0 %2528
        %2530 = vrot.lane.b32.xlu0 %v2497, 64
        %v2531 = vpop.permute.xlu0 %2530
        %2532 = vrot.lane.b32.xlu0 %v2498, 64
        %v2533 = vpop.permute.xlu0 %2532
        %2534 = vrot.lane.b32.xlu0 %v2499, 64
        %v2535 = vpop.permute.xlu0 %2534
        %2536 = vrot.lane.b32.xlu0 %v2500, 64
        %v2537 = vpop.permute.xlu0 %2536
        %2538 = vrot.lane.b32.xlu0 %v2501, 64
        %v2539 = vpop.permute.xlu0 %2538
        %2540 = vrot.lane.b32.xlu0 %v2502, 64
        %v2541 = vpop.permute.xlu0 %2540
        %2542 = vrot.lane.b32.xlu0 %v2503, 64
        %v2543 = vpop.permute.xlu0 %2542
        %2544 = vrot.lane.b32.xlu0 %v2504, 64
        %v2545 = vpop.permute.xlu0 %2544
        %2546 = vrot.lane.b32.xlu0 %v2505, 64
        %v2547 = vpop.permute.xlu0 %2546
        %2548 = vrot.lane.b32.xlu0 %v2506, 64
        %v2549 = vpop.permute.xlu0 %2548
        %2550 = vrot.lane.b32.xlu0 %v2507, 64
        %v2551 = vpop.permute.xlu0 %2550
        %2552 = vrot.lane.b32.xlu0 %v2508, 64
        %v2553 = vpop.permute.xlu0 %2552
        %2554 = vrot.lane.b32.xlu0 %v2509, 64
        %v2555 = vpop.permute.xlu0 %2554
        %2556 = vrot.lane.b32.xlu0 %v2510, 64
        %v2557 = vpop.permute.xlu0 %2556
        %2558 = vrot.lane.b32.xlu0 %v2511, 64
        %v2559 = vpop.permute.xlu0 %2558
        %v2576 = vsel %vm1231, %v2529, 0.0
        %2577 = vadd.xlane.f32.xlu0 %v2576
        %v2578 = vpop.xlane.xlu0 %2577
        %v2579 = vsel %vm1231, %v2531, 0.0
        %2580 = vadd.xlane.f32.xlu0 %v2579
        %v2581 = vpop.xlane.xlu0 %2580
        %v2582 = vsel %vm1231, %v2533, 0.0
        %2583 = vadd.xlane.f32.xlu0 %v2582
        %v2584 = vpop.xlane.xlu0 %2583
        %v2585 = vsel %vm1231, %v2535, 0.0
        %2586 = vadd.xlane.f32.xlu0 %v2585
        %v2587 = vpop.xlane.xlu0 %2586
        %v2588 = vsel %vm1231, %v2537, 0.0
        %2589 = vadd.xlane.f32.xlu0 %v2588
        %v2590 = vpop.xlane.xlu0 %2589
        %v2591 = vsel %vm1231, %v2539, 0.0
        %2592 = vadd.xlane.f32.xlu0 %v2591
        %v2593 = vpop.xlane.xlu0 %2592
        %v2594 = vsel %vm1231, %v2541, 0.0
        %2595 = vadd.xlane.f32.xlu0 %v2594
        %v2596 = vpop.xlane.xlu0 %2595
        %v2597 = vsel %vm1231, %v2543, 0.0
        %2598 = vadd.xlane.f32.xlu0 %v2597
        %v2599 = vpop.xlane.xlu0 %2598
        %v2600 = vsel %vm1231, %v2545, 0.0
        %2601 = vadd.xlane.f32.xlu0 %v2600
        %v2602 = vpop.xlane.xlu0 %2601
        %v2603 = vsel %vm1231, %v2547, 0.0
        %2604 = vadd.xlane.f32.xlu0 %v2603
        %v2605 = vpop.xlane.xlu0 %2604
        %v2606 = vsel %vm1231, %v2549, 0.0
        %2607 = vadd.xlane.f32.xlu0 %v2606
        %v2608 = vpop.xlane.xlu0 %2607
        %v2609 = vsel %vm1231, %v2551, 0.0
        %2610 = vadd.xlane.f32.xlu0 %v2609
        %v2611 = vpop.xlane.xlu0 %2610
        %v2612 = vsel %vm1231, %v2553, 0.0
        %2613 = vadd.xlane.f32.xlu0 %v2612
        %v2614 = vpop.xlane.xlu0 %2613
        %v2615 = vsel %vm1231, %v2555, 0.0
        %2616 = vadd.xlane.f32.xlu0 %v2615
        %v2617 = vpop.xlane.xlu0 %2616
        %v2618 = vsel %vm1231, %v2557, 0.0
        %2619 = vadd.xlane.f32.xlu0 %v2618
        %v2620 = vpop.xlane.xlu0 %2619
        %v2621 = vsel %vm1231, %v2559, 0.0
        %2622 = vadd.xlane.f32.xlu0 %v2621
        %v2623 = vpop.xlane.xlu0 %2622
        %v2624 = vmul.f32 %v2578, 0.125
        %v2625 = vmul.f32 %v2581, 0.125
        %v2626 = vmul.f32 %v2584, 0.125
        %v2627 = vmul.f32 %v2587, 0.125
        %v2628 = vmul.f32 %v2590, 0.125
        %v2629 = vmul.f32 %v2593, 0.125
        %v2630 = vmul.f32 %v2596, 0.125
        %v2631 = vmul.f32 %v2599, 0.125
        %v2632 = vmul.f32 %v2602, 0.125
        %v2633 = vmul.f32 %v2605, 0.125
        %v2634 = vmul.f32 %v2608, 0.125
        %v2635 = vmul.f32 %v2611, 0.125
        %v2636 = vmul.f32 %v2614, 0.125
        %v2637 = vmul.f32 %v2617, 0.125
        %v2638 = vmul.f32 %v2620, 0.125
        %v2639 = vmul.f32 %v2623, 0.125
        %2656 = vrot.lane.b32.xlu0 %v897, 64
        %v2657 = vpop.permute.xlu0 %2656
        %2658 = vrot.lane.b32.xlu0 %v901, 64
        %v2659 = vpop.permute.xlu0 %2658
        %2660 = vrot.lane.b32.xlu0 %v907, 64
        %v2661 = vpop.permute.xlu0 %2660
        %2662 = vrot.lane.b32.xlu0 %v911, 64
        %v2663 = vpop.permute.xlu0 %2662
        %2664 = vrot.lane.b32.xlu0 %v917, 64
        %v2665 = vpop.permute.xlu0 %2664
        %2666 = vrot.lane.b32.xlu0 %v921, 64
        %v2667 = vpop.permute.xlu0 %2666
        %2668 = vrot.lane.b32.xlu0 %v927, 64
        %v2669 = vpop.permute.xlu0 %2668
        %2670 = vrot.lane.b32.xlu0 %v931, 64
        %v2671 = vpop.permute.xlu0 %2670
        %2672 = vrot.lane.b32.xlu0 %v937, 64
        %v2673 = vpop.permute.xlu0 %2672
        %2674 = vrot.lane.b32.xlu0 %v941, 64
        %v2675 = vpop.permute.xlu0 %2674
        %2676 = vrot.lane.b32.xlu0 %v947, 64
        %v2677 = vpop.permute.xlu0 %2676
        %2678 = vrot.lane.b32.xlu0 %v951, 64
        %v2679 = vpop.permute.xlu0 %2678
        %2680 = vrot.lane.b32.xlu0 %v957, 64
        %v2681 = vpop.permute.xlu0 %2680
        %2682 = vrot.lane.b32.xlu0 %v961, 64
        %v2683 = vpop.permute.xlu0 %2682
        %2684 = vrot.lane.b32.xlu0 %v967, 64
        %v2685 = vpop.permute.xlu0 %2684
        %2686 = vrot.lane.b32.xlu0 %v971, 64
        %v2687 = vpop.permute.xlu0 %2686
        %v2704 = vmul.f32 %v601, %v2657
        %v2705 = vmul.f32 %v605, %v2659
        %v2706 = vmul.f32 %v611, %v2661
        %v2707 = vmul.f32 %v615, %v2663
        %v2708 = vmul.f32 %v621, %v2665
        %v2709 = vmul.f32 %v625, %v2667
        %v2710 = vmul.f32 %v631, %v2669
        %v2711 = vmul.f32 %v635, %v2671
        %v2712 = vmul.f32 %v641, %v2673
        %v2713 = vmul.f32 %v645, %v2675
        %v2714 = vmul.f32 %v651, %v2677
        %v2715 = vmul.f32 %v655, %v2679
        %v2716 = vmul.f32 %v661, %v2681
        %v2717 = vmul.f32 %v665, %v2683
        %v2718 = vmul.f32 %v671, %v2685
        %v2719 = vmul.f32 %v675, %v2687
        %2736 = vrot.lane.b32.xlu0 %v2704, 64
        %v2737 = vpop.permute.xlu0 %2736
        %2738 = vrot.lane.b32.xlu0 %v2705, 64
        %v2739 = vpop.permute.xlu0 %2738
        %2740 = vrot.lane.b32.xlu0 %v2706, 64
        %v2741 = vpop.permute.xlu0 %2740
        %2742 = vrot.lane.b32.xlu0 %v2707, 64
        %v2743 = vpop.permute.xlu0 %2742
        %2744 = vrot.lane.b32.xlu0 %v2708, 64
        %v2745 = vpop.permute.xlu0 %2744
        %2746 = vrot.lane.b32.xlu0 %v2709, 64
        %v2747 = vpop.permute.xlu0 %2746
        %2748 = vrot.lane.b32.xlu0 %v2710, 64
        %v2749 = vpop.permute.xlu0 %2748
        %2750 = vrot.lane.b32.xlu0 %v2711, 64
        %v2751 = vpop.permute.xlu0 %2750
        %2752 = vrot.lane.b32.xlu0 %v2712, 64
        %v2753 = vpop.permute.xlu0 %2752
        %2754 = vrot.lane.b32.xlu0 %v2713, 64
        %v2755 = vpop.permute.xlu0 %2754
        %2756 = vrot.lane.b32.xlu0 %v2714, 64
        %v2757 = vpop.permute.xlu0 %2756
        %2758 = vrot.lane.b32.xlu0 %v2715, 64
        %v2759 = vpop.permute.xlu0 %2758
        %2760 = vrot.lane.b32.xlu0 %v2716, 64
        %v2761 = vpop.permute.xlu0 %2760
        %2762 = vrot.lane.b32.xlu0 %v2717, 64
        %v2763 = vpop.permute.xlu0 %2762
        %2764 = vrot.lane.b32.xlu0 %v2718, 64
        %v2765 = vpop.permute.xlu0 %2764
        %2766 = vrot.lane.b32.xlu0 %v2719, 64
        %v2767 = vpop.permute.xlu0 %2766
        %v2784 = vsel %vm1231, %v2737, 0.0
        %2785 = vadd.xlane.f32.xlu0 %v2784
        %v2786 = vpop.xlane.xlu0 %2785
        %v2787 = vsel %vm1231, %v2739, 0.0
        %2788 = vadd.xlane.f32.xlu0 %v2787
        %v2789 = vpop.xlane.xlu0 %2788
        %v2790 = vsel %vm1231, %v2741, 0.0
        %2791 = vadd.xlane.f32.xlu0 %v2790
        %v2792 = vpop.xlane.xlu0 %2791
        %v2793 = vsel %vm1231, %v2743, 0.0
        %2794 = vadd.xlane.f32.xlu0 %v2793
        %v2795 = vpop.xlane.xlu0 %2794
        %v2796 = vsel %vm1231, %v2745, 0.0
        %2797 = vadd.xlane.f32.xlu0 %v2796
        %v2798 = vpop.xlane.xlu0 %2797
        %v2799 = vsel %vm1231, %v2747, 0.0
        %2800 = vadd.xlane.f32.xlu0 %v2799
        %v2801 = vpop.xlane.xlu0 %2800
        %v2802 = vsel %vm1231, %v2749, 0.0
        %2803 = vadd.xlane.f32.xlu0 %v2802
        %v2804 = vpop.xlane.xlu0 %2803
        %v2805 = vsel %vm1231, %v2751, 0.0
        %2806 = vadd.xlane.f32.xlu0 %v2805
        %v2807 = vpop.xlane.xlu0 %2806
        %v2808 = vsel %vm1231, %v2753, 0.0
        %2809 = vadd.xlane.f32.xlu0 %v2808
        %v2810 = vpop.xlane.xlu0 %2809
        %v2811 = vsel %vm1231, %v2755, 0.0
        %2812 = vadd.xlane.f32.xlu0 %v2811
        %v2813 = vpop.xlane.xlu0 %2812
        %v2814 = vsel %vm1231, %v2757, 0.0
        %2815 = vadd.xlane.f32.xlu0 %v2814
        %v2816 = vpop.xlane.xlu0 %2815
        %v2817 = vsel %vm1231, %v2759, 0.0
        %2818 = vadd.xlane.f32.xlu0 %v2817
        %v2819 = vpop.xlane.xlu0 %2818
        %v2820 = vsel %vm1231, %v2761, 0.0
        %2821 = vadd.xlane.f32.xlu0 %v2820
        %v2822 = vpop.xlane.xlu0 %2821
        %v2823 = vsel %vm1231, %v2763, 0.0
        %2824 = vadd.xlane.f32.xlu0 %v2823
        %v2825 = vpop.xlane.xlu0 %2824
        %v2826 = vsel %vm1231, %v2765, 0.0
        %2827 = vadd.xlane.f32.xlu0 %v2826
        %v2828 = vpop.xlane.xlu0 %2827
        %v2829 = vsel %vm1231, %v2767, 0.0
        %2830 = vadd.xlane.f32.xlu0 %v2829
        %v2831 = vpop.xlane.xlu0 %2830
        %v2832 = vmul.f32 %v2786, 0.125
        %v2833 = vmul.f32 %v2789, 0.125
        %v2834 = vmul.f32 %v2792, 0.125
        %v2835 = vmul.f32 %v2795, 0.125
        %v2836 = vmul.f32 %v2798, 0.125
        %v2837 = vmul.f32 %v2801, 0.125
        %v2838 = vmul.f32 %v2804, 0.125
        %v2839 = vmul.f32 %v2807, 0.125
        %v2840 = vmul.f32 %v2810, 0.125
        %v2841 = vmul.f32 %v2813, 0.125
        %v2842 = vmul.f32 %v2816, 0.125
        %v2843 = vmul.f32 %v2819, 0.125
        %v2844 = vmul.f32 %v2822, 0.125
        %v2845 = vmul.f32 %v2825, 0.125
        %v2846 = vmul.f32 %v2828, 0.125
        %v2847 = vmul.f32 %v2831, 0.125
        %v2848 = vmax.f32 %v2208, %v2416
        %v2849 = vmax.f32 %v2209, %v2417
        %v2850 = vmax.f32 %v2210, %v2418
        %v2851 = vmax.f32 %v2211, %v2419
        %v2852 = vmax.f32 %v2212, %v2420
        %v2853 = vmax.f32 %v2213, %v2421
        %v2854 = vmax.f32 %v2214, %v2422
        %v2855 = vmax.f32 %v2215, %v2423
        %v2856 = vmax.f32 %v2216, %v2424
        %v2857 = vmax.f32 %v2217, %v2425
        %v2858 = vmax.f32 %v2218, %v2426
        %v2859 = vmax.f32 %v2219, %v2427
        %v2860 = vmax.f32 %v2220, %v2428
        %v2861 = vmax.f32 %v2221, %v2429
        %v2862 = vmax.f32 %v2222, %v2430
        %v2863 = vmax.f32 %v2223, %v2431
        %v2864 = vmax.f32 %v2848, %v2624
        %v2865 = vmax.f32 %v2849, %v2625
        %v2866 = vmax.f32 %v2850, %v2626
        %v2867 = vmax.f32 %v2851, %v2627
        %v2868 = vmax.f32 %v2852, %v2628
        %v2869 = vmax.f32 %v2853, %v2629
        %v2870 = vmax.f32 %v2854, %v2630
        %v2871 = vmax.f32 %v2855, %v2631
        %v2872 = vmax.f32 %v2856, %v2632
        %v2873 = vmax.f32 %v2857, %v2633
        %v2874 = vmax.f32 %v2858, %v2634
        %v2875 = vmax.f32 %v2859, %v2635
        %v2876 = vmax.f32 %v2860, %v2636
        %v2877 = vmax.f32 %v2861, %v2637
        %v2878 = vmax.f32 %v2862, %v2638
        %v2879 = vmax.f32 %v2863, %v2639
        %v2880 = vmax.f32 %v2864, %v2832
        %v2881 = vmax.f32 %v2865, %v2833
        %v2882 = vmax.f32 %v2866, %v2834
        %v2883 = vmax.f32 %v2867, %v2835
        %v2884 = vmax.f32 %v2868, %v2836
        %v2885 = vmax.f32 %v2869, %v2837
        %v2886 = vmax.f32 %v2870, %v2838
        %v2887 = vmax.f32 %v2871, %v2839
        %v2888 = vmax.f32 %v2872, %v2840
        %v2889 = vmax.f32 %v2873, %v2841
        %v2890 = vmax.f32 %v2874, %v2842
        %v2891 = vmax.f32 %v2875, %v2843
        %v2892 = vmax.f32 %v2876, %v2844
        %v2893 = vmax.f32 %v2877, %v2845
        %v2894 = vmax.f32 %v2878, %v2846
        %v2895 = vmax.f32 %v2879, %v2847
        %v2896 = vsub.f32 %v2208, %v2880
        %v2897 = vsub.f32 %v2209, %v2881
        %v2898 = vsub.f32 %v2210, %v2882
        %v2899 = vsub.f32 %v2211, %v2883
        %v2900 = vsub.f32 %v2212, %v2884
        %v2901 = vsub.f32 %v2213, %v2885
        %v2902 = vsub.f32 %v2214, %v2886
        %v2903 = vsub.f32 %v2215, %v2887
        %v2904 = vsub.f32 %v2216, %v2888
        %v2905 = vsub.f32 %v2217, %v2889
        %v2906 = vsub.f32 %v2218, %v2890
        %v2907 = vsub.f32 %v2219, %v2891
        %v2908 = vsub.f32 %v2220, %v2892
        %v2909 = vsub.f32 %v2221, %v2893
        %v2910 = vsub.f32 %v2222, %v2894
        %v2911 = vsub.f32 %v2223, %v2895
        %v2912 = vmul.f32 %v2896, 1.442695
        %v2913 = vpow.pop %v2912
        %v2914 = vmul.f32 %v2897, 1.442695
        %v2915 = vpow.pop %v2914
        %v2916 = vmul.f32 %v2898, 1.442695
        %v2917 = vpow.pop %v2916
        %v2918 = vmul.f32 %v2899, 1.442695
        %v2919 = vpow.pop %v2918
        %v2920 = vmul.f32 %v2900, 1.442695
        %v2921 = vpow.pop %v2920
        %v2922 = vmul.f32 %v2901, 1.442695
        %v2923 = vpow.pop %v2922
        %v2924 = vmul.f32 %v2902, 1.442695
        %v2925 = vpow.pop %v2924
        %v2926 = vmul.f32 %v2903, 1.442695
        %v2927 = vpow.pop %v2926
        %v2928 = vmul.f32 %v2904, 1.442695
        %v2929 = vpow.pop %v2928
        %v2930 = vmul.f32 %v2905, 1.442695
        %v2931 = vpow.pop %v2930
        %v2932 = vmul.f32 %v2906, 1.442695
        %v2933 = vpow.pop %v2932
        %v2934 = vmul.f32 %v2907, 1.442695
        %v2935 = vpow.pop %v2934
        %v2936 = vmul.f32 %v2908, 1.442695
        %v2937 = vpow.pop %v2936
        %v2938 = vmul.f32 %v2909, 1.442695
        %v2939 = vpow.pop %v2938
        %v2940 = vmul.f32 %v2910, 1.442695
        %v2941 = vpow.pop %v2940
        %v2942 = vmul.f32 %v2911, 1.442695
        %v2943 = vpow.pop %v2942
        %v2944 = vsub.f32 %v2416, %v2880
        %v2945 = vsub.f32 %v2417, %v2881
        %v2946 = vsub.f32 %v2418, %v2882
        %v2947 = vsub.f32 %v2419, %v2883
        %v2948 = vsub.f32 %v2420, %v2884
        %v2949 = vsub.f32 %v2421, %v2885
        %v2950 = vsub.f32 %v2422, %v2886
        %v2951 = vsub.f32 %v2423, %v2887
        %v2952 = vsub.f32 %v2424, %v2888
        %v2953 = vsub.f32 %v2425, %v2889
        %v2954 = vsub.f32 %v2426, %v2890
        %v2955 = vsub.f32 %v2427, %v2891
        %v2956 = vsub.f32 %v2428, %v2892
        %v2957 = vsub.f32 %v2429, %v2893
        %v2958 = vsub.f32 %v2430, %v2894
        %v2959 = vsub.f32 %v2431, %v2895
        %v2960 = vmul.f32 %v2944, 1.442695
        %v2961 = vpow.pop %v2960
        %v2962 = vmul.f32 %v2945, 1.442695
        %v2963 = vpow.pop %v2962
        %v2964 = vmul.f32 %v2946, 1.442695
        %v2965 = vpow.pop %v2964
        %v2966 = vmul.f32 %v2947, 1.442695
        %v2967 = vpow.pop %v2966
        %v2968 = vmul.f32 %v2948, 1.442695
        %v2969 = vpow.pop %v2968
        %v2970 = vmul.f32 %v2949, 1.442695
        %v2971 = vpow.pop %v2970
        %v2972 = vmul.f32 %v2950, 1.442695
        %v2973 = vpow.pop %v2972
        %v2974 = vmul.f32 %v2951, 1.442695
        %v2975 = vpow.pop %v2974
        %v2976 = vmul.f32 %v2952, 1.442695
        %v2977 = vpow.pop %v2976
        %v2978 = vmul.f32 %v2953, 1.442695
        %v2979 = vpow.pop %v2978
        %v2980 = vmul.f32 %v2954, 1.442695
        %v2981 = vpow.pop %v2980
        %v2982 = vmul.f32 %v2955, 1.442695
        %v2983 = vpow.pop %v2982
        %v2984 = vmul.f32 %v2956, 1.442695
        %v2985 = vpow.pop %v2984
        %v2986 = vmul.f32 %v2957, 1.442695
        %v2987 = vpow.pop %v2986
        %v2988 = vmul.f32 %v2958, 1.442695
        %v2989 = vpow.pop %v2988
        %v2990 = vmul.f32 %v2959, 1.442695
        %v2991 = vpow.pop %v2990
        %v2992 = vsub.f32 %v2624, %v2880
        %v2993 = vsub.f32 %v2625, %v2881
        %v2994 = vsub.f32 %v2626, %v2882
        %v2995 = vsub.f32 %v2627, %v2883
        %v2996 = vsub.f32 %v2628, %v2884
        %v2997 = vsub.f32 %v2629, %v2885
        %v2998 = vsub.f32 %v2630, %v2886
        %v2999 = vsub.f32 %v2631, %v2887
        %v3000 = vsub.f32 %v2632, %v2888
        %v3001 = vsub.f32 %v2633, %v2889
        %v3002 = vsub.f32 %v2634, %v2890
        %v3003 = vsub.f32 %v2635, %v2891
        %v3004 = vsub.f32 %v2636, %v2892
        %v3005 = vsub.f32 %v2637, %v2893
        %v3006 = vsub.f32 %v2638, %v2894
        %v3007 = vsub.f32 %v2639, %v2895
        %v3008 = vmul.f32 %v2992, 1.442695
        %v3009 = vpow.pop %v3008
        %v3010 = vmul.f32 %v2993, 1.442695
        %v3011 = vpow.pop %v3010
        %v3012 = vmul.f32 %v2994, 1.442695
        %v3013 = vpow.pop %v3012
        %v3014 = vmul.f32 %v2995, 1.442695
        %v3015 = vpow.pop %v3014
        %v3016 = vmul.f32 %v2996, 1.442695
        %v3017 = vpow.pop %v3016
        %v3018 = vmul.f32 %v2997, 1.442695
        %v3019 = vpow.pop %v3018
        %v3020 = vmul.f32 %v2998, 1.442695
        %v3021 = vpow.pop %v3020
        %v3022 = vmul.f32 %v2999, 1.442695
        %v3023 = vpow.pop %v3022
        %v3024 = vmul.f32 %v3000, 1.442695
        %v3025 = vpow.pop %v3024
        %v3026 = vmul.f32 %v3001, 1.442695
        %v3027 = vpow.pop %v3026
        %v3028 = vmul.f32 %v3002, 1.442695
        %v3029 = vpow.pop %v3028
        %v3030 = vmul.f32 %v3003, 1.442695
        %v3031 = vpow.pop %v3030
        %v3032 = vmul.f32 %v3004, 1.442695
        %v3033 = vpow.pop %v3032
        %v3034 = vmul.f32 %v3005, 1.442695
        %v3035 = vpow.pop %v3034
        %v3036 = vmul.f32 %v3006, 1.442695
        %v3037 = vpow.pop %v3036
        %v3038 = vmul.f32 %v3007, 1.442695
        %v3039 = vpow.pop %v3038
        %v3040 = vsub.f32 %v2832, %v2880
        %v3041 = vsub.f32 %v2833, %v2881
        %v3042 = vsub.f32 %v2834, %v2882
        %v3043 = vsub.f32 %v2835, %v2883
        %v3044 = vsub.f32 %v2836, %v2884
        %v3045 = vsub.f32 %v2837, %v2885
        %v3046 = vsub.f32 %v2838, %v2886
        %v3047 = vsub.f32 %v2839, %v2887
        %v3048 = vsub.f32 %v2840, %v2888
        %v3049 = vsub.f32 %v2841, %v2889
        %v3050 = vsub.f32 %v2842, %v2890
        %v3051 = vsub.f32 %v2843, %v2891
        %v3052 = vsub.f32 %v2844, %v2892
        %v3053 = vsub.f32 %v2845, %v2893
        %v3054 = vsub.f32 %v2846, %v2894
        %v3055 = vsub.f32 %v2847, %v2895
        %v3056 = vmul.f32 %v3040, 1.442695
        %v3057 = vpow.pop %v3056
        %v3058 = vmul.f32 %v3041, 1.442695
        %v3059 = vpow.pop %v3058
        %v3060 = vmul.f32 %v3042, 1.442695
        %v3061 = vpow.pop %v3060
        %v3062 = vmul.f32 %v3043, 1.442695
        %v3063 = vpow.pop %v3062
        %v3064 = vmul.f32 %v3044, 1.442695
        %v3065 = vpow.pop %v3064
        %v3066 = vmul.f32 %v3045, 1.442695
        %v3067 = vpow.pop %v3066
        %v3068 = vmul.f32 %v3046, 1.442695
        %v3069 = vpow.pop %v3068
        %v3070 = vmul.f32 %v3047, 1.442695
        %v3071 = vpow.pop %v3070
        %v3072 = vmul.f32 %v3048, 1.442695
        %v3073 = vpow.pop %v3072
        %v3074 = vmul.f32 %v3049, 1.442695
        %v3075 = vpow.pop %v3074
        %v3076 = vmul.f32 %v3050, 1.442695
        %v3077 = vpow.pop %v3076
        %v3078 = vmul.f32 %v3051, 1.442695
        %v3079 = vpow.pop %v3078
        %v3080 = vmul.f32 %v3052, 1.442695
        %v3081 = vpow.pop %v3080
        %v3082 = vmul.f32 %v3053, 1.442695
        %v3083 = vpow.pop %v3082
        %v3084 = vmul.f32 %v3054, 1.442695
        %v3085 = vpow.pop %v3084
        %v3086 = vmul.f32 %v3055, 1.442695
        %v3087 = vpow.pop %v3086
        %v3088 = vadd.f32 %v2913, %v2961
        %v3089 = vadd.f32 %v2915, %v2963
        %v3090 = vadd.f32 %v2917, %v2965
        %v3091 = vadd.f32 %v2919, %v2967
        %v3092 = vadd.f32 %v2921, %v2969
        %v3093 = vadd.f32 %v2923, %v2971
        %v3094 = vadd.f32 %v2925, %v2973
        %v3095 = vadd.f32 %v2927, %v2975
        %v3096 = vadd.f32 %v2929, %v2977
        %v3097 = vadd.f32 %v2931, %v2979
        %v3098 = vadd.f32 %v2933, %v2981
        %v3099 = vadd.f32 %v2935, %v2983
        %v3100 = vadd.f32 %v2937, %v2985
        %v3101 = vadd.f32 %v2939, %v2987
        %v3102 = vadd.f32 %v2941, %v2989
        %v3103 = vadd.f32 %v2943, %v2991
        %v3104 = vadd.f32 %v3088, %v3009
        %v3105 = vadd.f32 %v3089, %v3011
        %v3106 = vadd.f32 %v3090, %v3013
        %v3107 = vadd.f32 %v3091, %v3015
        %v3108 = vadd.f32 %v3092, %v3017
        %v3109 = vadd.f32 %v3093, %v3019
        %v3110 = vadd.f32 %v3094, %v3021
        %v3111 = vadd.f32 %v3095, %v3023
        %v3112 = vadd.f32 %v3096, %v3025
        %v3113 = vadd.f32 %v3097, %v3027
        %v3114 = vadd.f32 %v3098, %v3029
        %v3115 = vadd.f32 %v3099, %v3031
        %v3116 = vadd.f32 %v3100, %v3033
        %v3117 = vadd.f32 %v3101, %v3035
        %v3118 = vadd.f32 %v3102, %v3037
        %v3119 = vadd.f32 %v3103, %v3039
        %v3120 = vadd.f32 %v3104, %v3057
        %v3121 = vadd.f32 %v3105, %v3059
        %v3122 = vadd.f32 %v3106, %v3061
        %v3123 = vadd.f32 %v3107, %v3063
        %v3124 = vadd.f32 %v3108, %v3065
        %v3125 = vadd.f32 %v3109, %v3067
        %v3126 = vadd.f32 %v3110, %v3069
        %v3127 = vadd.f32 %v3111, %v3071
        %v3128 = vadd.f32 %v3112, %v3073
        %v3129 = vadd.f32 %v3113, %v3075
        %v3130 = vadd.f32 %v3114, %v3077
        %v3131 = vadd.f32 %v3115, %v3079
        %v3132 = vadd.f32 %v3116, %v3081
        %v3133 = vadd.f32 %v3117, %v3083
        %v3134 = vadd.f32 %v3118, %v3085
        %v3135 = vadd.f32 %v3119, %v3087
        %v3136 = vrcp.pop %v3120
        %v3137 = vrcp.pop %v3121
        %v3138 = vrcp.pop %v3122
        %v3139 = vrcp.pop %v3123
        %v3140 = vrcp.pop %v3124
        %v3141 = vrcp.pop %v3125
        %v3142 = vrcp.pop %v3126
        %v3143 = vrcp.pop %v3127
        %v3144 = vrcp.pop %v3128
        %v3145 = vrcp.pop %v3129
        %v3146 = vrcp.pop %v3130
        %v3147 = vrcp.pop %v3131
        %v3148 = vrcp.pop %v3132
        %v3149 = vrcp.pop %v3133
        %v3150 = vrcp.pop %v3134
        %v3151 = vrcp.pop %v3135
        %v3152 = vmul.f32 %v2913, %v3136
        %v3153 = vmul.f32 %v2915, %v3137
        %v3154 = vmul.f32 %v2917, %v3138
        %v3155 = vmul.f32 %v2919, %v3139
        %v3156 = vmul.f32 %v2921, %v3140
        %v3157 = vmul.f32 %v2923, %v3141
        %v3158 = vmul.f32 %v2925, %v3142
        %v3159 = vmul.f32 %v2927, %v3143
        %v3160 = vmul.f32 %v2929, %v3144
        %v3161 = vmul.f32 %v2931, %v3145
        %v3162 = vmul.f32 %v2933, %v3146
        %v3163 = vmul.f32 %v2935, %v3147
        %v3164 = vmul.f32 %v2937, %v3148
        %v3165 = vmul.f32 %v2939, %v3149
        %v3166 = vmul.f32 %v2941, %v3150
        %v3167 = vmul.f32 %v2943, %v3151
        %v3168 = vmul.f32 %v3152, %v774
        %v3169 = vmul.f32 %v3153, %v778
        %v3170 = vmul.f32 %v3154, %v784
        %v3171 = vmul.f32 %v3155, %v788
        %v3172 = vmul.f32 %v3156, %v794
        %v3173 = vmul.f32 %v3157, %v798
        %v3174 = vmul.f32 %v3158, %v804
        %v3175 = vmul.f32 %v3159, %v808
        %v3176 = vmul.f32 %v3160, %v814
        %v3177 = vmul.f32 %v3161, %v818
        %v3178 = vmul.f32 %v3162, %v824
        %v3179 = vmul.f32 %v3163, %v828
        %v3180 = vmul.f32 %v3164, %v834
        %v3181 = vmul.f32 %v3165, %v838
        %v3182 = vmul.f32 %v3166, %v844
        %v3183 = vmul.f32 %v3167, %v848
        %v3184 = vmul.f32 %v2961, %v3136
        %v3185 = vmul.f32 %v2963, %v3137
        %v3186 = vmul.f32 %v2965, %v3138
        %v3187 = vmul.f32 %v2967, %v3139
        %v3188 = vmul.f32 %v2969, %v3140
        %v3189 = vmul.f32 %v2971, %v3141
        %v3190 = vmul.f32 %v2973, %v3142
        %v3191 = vmul.f32 %v2975, %v3143
        %v3192 = vmul.f32 %v2977, %v3144
        %v3193 = vmul.f32 %v2979, %v3145
        %v3194 = vmul.f32 %v2981, %v3146
        %v3195 = vmul.f32 %v2983, %v3147
        %v3196 = vmul.f32 %v2985, %v3148
        %v3197 = vmul.f32 %v2987, %v3149
        %v3198 = vmul.f32 %v2989, %v3150
        %v3199 = vmul.f32 %v2991, %v3151
        %v3200 = vmul.f32 %v3184, %v776
        %v3201 = vmul.f32 %v3185, %v780
        %v3202 = vmul.f32 %v3186, %v786
        %v3203 = vmul.f32 %v3187, %v790
        %v3204 = vmul.f32 %v3188, %v796
        %v3205 = vmul.f32 %v3189, %v800
        %v3206 = vmul.f32 %v3190, %v806
        %v3207 = vmul.f32 %v3191, %v810
        %v3208 = vmul.f32 %v3192, %v816
        %v3209 = vmul.f32 %v3193, %v820
        %v3210 = vmul.f32 %v3194, %v826
        %v3211 = vmul.f32 %v3195, %v830
        %v3212 = vmul.f32 %v3196, %v836
        %v3213 = vmul.f32 %v3197, %v840
        %v3214 = vmul.f32 %v3198, %v846
        %v3215 = vmul.f32 %v3199, %v850
        %v3216 = vadd.f32 %v3168, %v3200
        %v3217 = vadd.f32 %v3169, %v3201
        %v3218 = vadd.f32 %v3170, %v3202
        %v3219 = vadd.f32 %v3171, %v3203
        %v3220 = vadd.f32 %v3172, %v3204
        %v3221 = vadd.f32 %v3173, %v3205
        %v3222 = vadd.f32 %v3174, %v3206
        %v3223 = vadd.f32 %v3175, %v3207
        %v3224 = vadd.f32 %v3176, %v3208
        %v3225 = vadd.f32 %v3177, %v3209
        %v3226 = vadd.f32 %v3178, %v3210
        %v3227 = vadd.f32 %v3179, %v3211
        %v3228 = vadd.f32 %v3180, %v3212
        %v3229 = vadd.f32 %v3181, %v3213
        %v3230 = vadd.f32 %v3182, %v3214
        %v3231 = vadd.f32 %v3183, %v3215
        %v3232 = vmul.f32 %v3009, %v3136
        %v3233 = vmul.f32 %v3011, %v3137
        %v3234 = vmul.f32 %v3013, %v3138
        %v3235 = vmul.f32 %v3015, %v3139
        %v3236 = vmul.f32 %v3017, %v3140
        %v3237 = vmul.f32 %v3019, %v3141
        %v3238 = vmul.f32 %v3021, %v3142
        %v3239 = vmul.f32 %v3023, %v3143
        %v3240 = vmul.f32 %v3025, %v3144
        %v3241 = vmul.f32 %v3027, %v3145
        %v3242 = vmul.f32 %v3029, %v3146
        %v3243 = vmul.f32 %v3031, %v3147
        %v3244 = vmul.f32 %v3033, %v3148
        %v3245 = vmul.f32 %v3035, %v3149
        %v3246 = vmul.f32 %v3037, %v3150
        %v3247 = vmul.f32 %v3039, %v3151
        %v3248 = vmul.f32 %v3232, %v895
        %v3249 = vmul.f32 %v3233, %v899
        %v3250 = vmul.f32 %v3234, %v905
        %v3251 = vmul.f32 %v3235, %v909
        %v3252 = vmul.f32 %v3236, %v915
        %v3253 = vmul.f32 %v3237, %v919
        %v3254 = vmul.f32 %v3238, %v925
        %v3255 = vmul.f32 %v3239, %v929
        %v3256 = vmul.f32 %v3240, %v935
        %v3257 = vmul.f32 %v3241, %v939
        %v3258 = vmul.f32 %v3242, %v945
        %v3259 = vmul.f32 %v3243, %v949
        %v3260 = vmul.f32 %v3244, %v955
        %v3261 = vmul.f32 %v3245, %v959
        %v3262 = vmul.f32 %v3246, %v965
        %v3263 = vmul.f32 %v3247, %v969
        %v3264 = vadd.f32 %v3216, %v3248
        %v3265 = vadd.f32 %v3217, %v3249
        %v3266 = vadd.f32 %v3218, %v3250
        %v3267 = vadd.f32 %v3219, %v3251
        %v3268 = vadd.f32 %v3220, %v3252
        %v3269 = vadd.f32 %v3221, %v3253
        %v3270 = vadd.f32 %v3222, %v3254
        %v3271 = vadd.f32 %v3223, %v3255
        %v3272 = vadd.f32 %v3224, %v3256
        %v3273 = vadd.f32 %v3225, %v3257
        %v3274 = vadd.f32 %v3226, %v3258
        %v3275 = vadd.f32 %v3227, %v3259
        %v3276 = vadd.f32 %v3228, %v3260
        %v3277 = vadd.f32 %v3229, %v3261
        %v3278 = vadd.f32 %v3230, %v3262
        %v3279 = vadd.f32 %v3231, %v3263
        %v3280 = vmul.f32 %v3057, %v3136
        %v3281 = vmul.f32 %v3059, %v3137
        %v3282 = vmul.f32 %v3061, %v3138
        %v3283 = vmul.f32 %v3063, %v3139
        %v3284 = vmul.f32 %v3065, %v3140
        %v3285 = vmul.f32 %v3067, %v3141
        %v3286 = vmul.f32 %v3069, %v3142
        %v3287 = vmul.f32 %v3071, %v3143
        %v3288 = vmul.f32 %v3073, %v3144
        %v3289 = vmul.f32 %v3075, %v3145
        %v3290 = vmul.f32 %v3077, %v3146
        %v3291 = vmul.f32 %v3079, %v3147
        %v3292 = vmul.f32 %v3081, %v3148
        %v3293 = vmul.f32 %v3083, %v3149
        %v3294 = vmul.f32 %v3085, %v3150
        %v3295 = vmul.f32 %v3087, %v3151
        %v3296 = vmul.f32 %v3280, %v897
        %v3297 = vmul.f32 %v3281, %v901
        %v3298 = vmul.f32 %v3282, %v907
        %v3299 = vmul.f32 %v3283, %v911
        %v3300 = vmul.f32 %v3284, %v917
        %v3301 = vmul.f32 %v3285, %v921
        %v3302 = vmul.f32 %v3286, %v927
        %v3303 = vmul.f32 %v3287, %v931
        %v3304 = vmul.f32 %v3288, %v937
        %v3305 = vmul.f32 %v3289, %v941
        %v3306 = vmul.f32 %v3290, %v947
        %v3307 = vmul.f32 %v3291, %v951
        %v3308 = vmul.f32 %v3292, %v957
        %v3309 = vmul.f32 %v3293, %v961
        %v3310 = vmul.f32 %v3294, %v967
        %v3311 = vmul.f32 %v3295, %v971
        %v3312 = vadd.f32 %v3264, %v3296
        %v3313 = vadd.f32 %v3265, %v3297
        %v3314 = vadd.f32 %v3266, %v3298
        %v3315 = vadd.f32 %v3267, %v3299
        %v3316 = vadd.f32 %v3268, %v3300
        %v3317 = vadd.f32 %v3269, %v3301
        %v3318 = vadd.f32 %v3270, %v3302
        %v3319 = vadd.f32 %v3271, %v3303
        %v3320 = vadd.f32 %v3272, %v3304
        %v3321 = vadd.f32 %v3273, %v3305
        %v3322 = vadd.f32 %v3274, %v3306
        %v3323 = vadd.f32 %v3275, %v3307
        %v3324 = vadd.f32 %v3276, %v3308
        %v3325 = vadd.f32 %v3277, %v3309
        %v3326 = vadd.f32 %v3278, %v3310
        %v3327 = vadd.f32 %v3279, %v3311
        %v3328 = vmul.f32 %v603, %v1016
        %v3329 = vmul.f32 %v607, %v1020
        %v3330 = vmul.f32 %v613, %v1026
        %v3331 = vmul.f32 %v617, %v1030
        %v3332 = vmul.f32 %v623, %v1036
        %v3333 = vmul.f32 %v627, %v1040
        %v3334 = vmul.f32 %v633, %v1046
        %v3335 = vmul.f32 %v637, %v1050
        %v3336 = vmul.f32 %v643, %v1056
        %v3337 = vmul.f32 %v647, %v1060
        %v3338 = vmul.f32 %v653, %v1066
        %v3339 = vmul.f32 %v657, %v1070
        %v3340 = vmul.f32 %v663, %v1076
        %v3341 = vmul.f32 %v667, %v1080
        %v3342 = vmul.f32 %v673, %v1086
        %v3343 = vmul.f32 %v677, %v1090
        %v3344 = vsel %vm1231, %v3328, 0.0
        %3345 = vadd.xlane.f32.xlu0 %v3344
        %v3346 = vpop.xlane.xlu0 %3345
        %v3347 = vsel %vm1231, %v3329, 0.0
        %3348 = vadd.xlane.f32.xlu0 %v3347
        %v3349 = vpop.xlane.xlu0 %3348
        %v3350 = vsel %vm1231, %v3330, 0.0
        %3351 = vadd.xlane.f32.xlu0 %v3350
        %v3352 = vpop.xlane.xlu0 %3351
        %v3353 = vsel %vm1231, %v3331, 0.0
        %3354 = vadd.xlane.f32.xlu0 %v3353
        %v3355 = vpop.xlane.xlu0 %3354
        %v3356 = vsel %vm1231, %v3332, 0.0
        %3357 = vadd.xlane.f32.xlu0 %v3356
        %v3358 = vpop.xlane.xlu0 %3357
        %v3359 = vsel %vm1231, %v3333, 0.0
        %3360 = vadd.xlane.f32.xlu0 %v3359
        %v3361 = vpop.xlane.xlu0 %3360
        %v3362 = vsel %vm1231, %v3334, 0.0
        %3363 = vadd.xlane.f32.xlu0 %v3362
        %v3364 = vpop.xlane.xlu0 %3363
        %v3365 = vsel %vm1231, %v3335, 0.0
        %3366 = vadd.xlane.f32.xlu0 %v3365
        %v3367 = vpop.xlane.xlu0 %3366
        %v3368 = vsel %vm1231, %v3336, 0.0
        %3369 = vadd.xlane.f32.xlu0 %v3368
        %v3370 = vpop.xlane.xlu0 %3369
        %v3371 = vsel %vm1231, %v3337, 0.0
        %3372 = vadd.xlane.f32.xlu0 %v3371
        %v3373 = vpop.xlane.xlu0 %3372
        %v3374 = vsel %vm1231, %v3338, 0.0
        %3375 = vadd.xlane.f32.xlu0 %v3374
        %v3376 = vpop.xlane.xlu0 %3375
        %v3377 = vsel %vm1231, %v3339, 0.0
        %3378 = vadd.xlane.f32.xlu0 %v3377
        %v3379 = vpop.xlane.xlu0 %3378
        %v3380 = vsel %vm1231, %v3340, 0.0
        %3381 = vadd.xlane.f32.xlu0 %v3380
        %v3382 = vpop.xlane.xlu0 %3381
        %v3383 = vsel %vm1231, %v3341, 0.0
        %3384 = vadd.xlane.f32.xlu0 %v3383
        %v3385 = vpop.xlane.xlu0 %3384
        %v3386 = vsel %vm1231, %v3342, 0.0
        %3387 = vadd.xlane.f32.xlu0 %v3386
        %v3388 = vpop.xlane.xlu0 %3387
        %v3389 = vsel %vm1231, %v3343, 0.0
        %3390 = vadd.xlane.f32.xlu0 %v3389
        %v3391 = vpop.xlane.xlu0 %3390
        %v3392 = vmul.f32 %v3346, 0.125
        %v3393 = vmul.f32 %v3349, 0.125
        %v3394 = vmul.f32 %v3352, 0.125
        %v3395 = vmul.f32 %v3355, 0.125
        %v3396 = vmul.f32 %v3358, 0.125
        %v3397 = vmul.f32 %v3361, 0.125
        %v3398 = vmul.f32 %v3364, 0.125
        %v3399 = vmul.f32 %v3367, 0.125
        %v3400 = vmul.f32 %v3370, 0.125
        %v3401 = vmul.f32 %v3373, 0.125
        %v3402 = vmul.f32 %v3376, 0.125
        %v3403 = vmul.f32 %v3379, 0.125
        %v3404 = vmul.f32 %v3382, 0.125
        %v3405 = vmul.f32 %v3385, 0.125
        %v3406 = vmul.f32 %v3388, 0.125
        %v3407 = vmul.f32 %v3391, 0.125
        %v3408 = vmul.f32 %v603, %v1018
        %v3409 = vmul.f32 %v607, %v1022
        %v3410 = vmul.f32 %v613, %v1028
        %v3411 = vmul.f32 %v617, %v1032
        %v3412 = vmul.f32 %v623, %v1038
        %v3413 = vmul.f32 %v627, %v1042
        %v3414 = vmul.f32 %v633, %v1048
        %v3415 = vmul.f32 %v637, %v1052
        %v3416 = vmul.f32 %v643, %v1058
        %v3417 = vmul.f32 %v647, %v1062
        %v3418 = vmul.f32 %v653, %v1068
        %v3419 = vmul.f32 %v657, %v1072
        %v3420 = vmul.f32 %v663, %v1078
        %v3421 = vmul.f32 %v667, %v1082
        %v3422 = vmul.f32 %v673, %v1088
        %v3423 = vmul.f32 %v677, %v1092
        %v3424 = vsel %vm1231, %v3408, 0.0
        %3425 = vadd.xlane.f32.xlu0 %v3424
        %v3426 = vpop.xlane.xlu0 %3425
        %v3427 = vsel %vm1231, %v3409, 0.0
        %3428 = vadd.xlane.f32.xlu0 %v3427
        %v3429 = vpop.xlane.xlu0 %3428
        %v3430 = vsel %vm1231, %v3410, 0.0
        %3431 = vadd.xlane.f32.xlu0 %v3430
        %v3432 = vpop.xlane.xlu0 %3431
        %v3433 = vsel %vm1231, %v3411, 0.0
        %3434 = vadd.xlane.f32.xlu0 %v3433
        %v3435 = vpop.xlane.xlu0 %3434
        %v3436 = vsel %vm1231, %v3412, 0.0
        %3437 = vadd.xlane.f32.xlu0 %v3436
        %v3438 = vpop.xlane.xlu0 %3437
        %v3439 = vsel %vm1231, %v3413, 0.0
        %3440 = vadd.xlane.f32.xlu0 %v3439
        %v3441 = vpop.xlane.xlu0 %3440
        %v3442 = vsel %vm1231, %v3414, 0.0
        %3443 = vadd.xlane.f32.xlu0 %v3442
        %v3444 = vpop.xlane.xlu0 %3443
        %v3445 = vsel %vm1231, %v3415, 0.0
        %3446 = vadd.xlane.f32.xlu0 %v3445
        %v3447 = vpop.xlane.xlu0 %3446
        %v3448 = vsel %vm1231, %v3416, 0.0
        %3449 = vadd.xlane.f32.xlu0 %v3448
        %v3450 = vpop.xlane.xlu0 %3449
        %v3451 = vsel %vm1231, %v3417, 0.0
        %3452 = vadd.xlane.f32.xlu0 %v3451
        %v3453 = vpop.xlane.xlu0 %3452
        %v3454 = vsel %vm1231, %v3418, 0.0
        %3455 = vadd.xlane.f32.xlu0 %v3454
        %v3456 = vpop.xlane.xlu0 %3455
        %v3457 = vsel %vm1231, %v3419, 0.0
        %3458 = vadd.xlane.f32.xlu0 %v3457
        %v3459 = vpop.xlane.xlu0 %3458
        %v3460 = vsel %vm1231, %v3420, 0.0
        %3461 = vadd.xlane.f32.xlu0 %v3460
        %v3462 = vpop.xlane.xlu0 %3461
        %v3463 = vsel %vm1231, %v3421, 0.0
        %3464 = vadd.xlane.f32.xlu0 %v3463
        %v3465 = vpop.xlane.xlu0 %3464
        %v3466 = vsel %vm1231, %v3422, 0.0
        %3467 = vadd.xlane.f32.xlu0 %v3466
        %v3468 = vpop.xlane.xlu0 %3467
        %v3469 = vsel %vm1231, %v3423, 0.0
        %3470 = vadd.xlane.f32.xlu0 %v3469
        %v3471 = vpop.xlane.xlu0 %3470
        %v3472 = vmul.f32 %v3426, 0.125
        %v3473 = vmul.f32 %v3429, 0.125
        %v3474 = vmul.f32 %v3432, 0.125
        %v3475 = vmul.f32 %v3435, 0.125
        %v3476 = vmul.f32 %v3438, 0.125
        %v3477 = vmul.f32 %v3441, 0.125
        %v3478 = vmul.f32 %v3444, 0.125
        %v3479 = vmul.f32 %v3447, 0.125
        %v3480 = vmul.f32 %v3450, 0.125
        %v3481 = vmul.f32 %v3453, 0.125
        %v3482 = vmul.f32 %v3456, 0.125
        %v3483 = vmul.f32 %v3459, 0.125
        %v3484 = vmul.f32 %v3462, 0.125
        %v3485 = vmul.f32 %v3465, 0.125
        %v3486 = vmul.f32 %v3468, 0.125
        %v3487 = vmul.f32 %v3471, 0.125
        %v3488 = vmul.f32 %v603, %v1137
        %v3489 = vmul.f32 %v607, %v1141
        %v3490 = vmul.f32 %v613, %v1147
        %v3491 = vmul.f32 %v617, %v1151
        %v3492 = vmul.f32 %v623, %v1157
        %v3493 = vmul.f32 %v627, %v1161
        %v3494 = vmul.f32 %v633, %v1167
        %v3495 = vmul.f32 %v637, %v1171
        %v3496 = vmul.f32 %v643, %v1177
        %v3497 = vmul.f32 %v647, %v1181
        %v3498 = vmul.f32 %v653, %v1187
        %v3499 = vmul.f32 %v657, %v1191
        %v3500 = vmul.f32 %v663, %v1197
        %v3501 = vmul.f32 %v667, %v1201
        %v3502 = vmul.f32 %v673, %v1207
        %v3503 = vmul.f32 %v677, %v1211
        %v3504 = vsel %vm1231, %v3488, 0.0
        %3505 = vadd.xlane.f32.xlu0 %v3504
        %v3506 = vpop.xlane.xlu0 %3505
        %v3507 = vsel %vm1231, %v3489, 0.0
        %3508 = vadd.xlane.f32.xlu0 %v3507
        %v3509 = vpop.xlane.xlu0 %3508
        %v3510 = vsel %vm1231, %v3490, 0.0
        %3511 = vadd.xlane.f32.xlu0 %v3510
        %v3512 = vpop.xlane.xlu0 %3511
        %v3513 = vsel %vm1231, %v3491, 0.0
        %3514 = vadd.xlane.f32.xlu0 %v3513
        %v3515 = vpop.xlane.xlu0 %3514
        %v3516 = vsel %vm1231, %v3492, 0.0
        %3517 = vadd.xlane.f32.xlu0 %v3516
        %v3518 = vpop.xlane.xlu0 %3517
        %v3519 = vsel %vm1231, %v3493, 0.0
        %3520 = vadd.xlane.f32.xlu0 %v3519
        %v3521 = vpop.xlane.xlu0 %3520
        %v3522 = vsel %vm1231, %v3494, 0.0
        %3523 = vadd.xlane.f32.xlu0 %v3522
        %v3524 = vpop.xlane.xlu0 %3523
        %v3525 = vsel %vm1231, %v3495, 0.0
        %3526 = vadd.xlane.f32.xlu0 %v3525
        %v3527 = vpop.xlane.xlu0 %3526
        %v3528 = vsel %vm1231, %v3496, 0.0
        %3529 = vadd.xlane.f32.xlu0 %v3528
        %v3530 = vpop.xlane.xlu0 %3529
        %v3531 = vsel %vm1231, %v3497, 0.0
        %3532 = vadd.xlane.f32.xlu0 %v3531
        %v3533 = vpop.xlane.xlu0 %3532
        %v3534 = vsel %vm1231, %v3498, 0.0
        %3535 = vadd.xlane.f32.xlu0 %v3534
        %v3536 = vpop.xlane.xlu0 %3535
        %v3537 = vsel %vm1231, %v3499, 0.0
        %3538 = vadd.xlane.f32.xlu0 %v3537
        %v3539 = vpop.xlane.xlu0 %3538
        %v3540 = vsel %vm1231, %v3500, 0.0
        %3541 = vadd.xlane.f32.xlu0 %v3540
        %v3542 = vpop.xlane.xlu0 %3541
        %v3543 = vsel %vm1231, %v3501, 0.0
        %3544 = vadd.xlane.f32.xlu0 %v3543
        %v3545 = vpop.xlane.xlu0 %3544
        %v3546 = vsel %vm1231, %v3502, 0.0
        %3547 = vadd.xlane.f32.xlu0 %v3546
        %v3548 = vpop.xlane.xlu0 %3547
        %v3549 = vsel %vm1231, %v3503, 0.0
        %3550 = vadd.xlane.f32.xlu0 %v3549
        %v3551 = vpop.xlane.xlu0 %3550
        %v3552 = vmul.f32 %v3506, 0.125
        %v3553 = vmul.f32 %v3509, 0.125
        %v3554 = vmul.f32 %v3512, 0.125
        %v3555 = vmul.f32 %v3515, 0.125
        %v3556 = vmul.f32 %v3518, 0.125
        %v3557 = vmul.f32 %v3521, 0.125
        %v3558 = vmul.f32 %v3524, 0.125
        %v3559 = vmul.f32 %v3527, 0.125
        %v3560 = vmul.f32 %v3530, 0.125
        %v3561 = vmul.f32 %v3533, 0.125
        %v3562 = vmul.f32 %v3536, 0.125
        %v3563 = vmul.f32 %v3539, 0.125
        %v3564 = vmul.f32 %v3542, 0.125
        %v3565 = vmul.f32 %v3545, 0.125
        %v3566 = vmul.f32 %v3548, 0.125
        %v3567 = vmul.f32 %v3551, 0.125
        %v3568 = vmul.f32 %v603, %v1139
        %v3569 = vmul.f32 %v607, %v1143
        %v3570 = vmul.f32 %v613, %v1149
        %v3571 = vmul.f32 %v617, %v1153
        %v3572 = vmul.f32 %v623, %v1159
        %v3573 = vmul.f32 %v627, %v1163
        %v3574 = vmul.f32 %v633, %v1169
        %v3575 = vmul.f32 %v637, %v1173
        %v3576 = vmul.f32 %v643, %v1179
        %v3577 = vmul.f32 %v647, %v1183
        %v3578 = vmul.f32 %v653, %v1189
        %v3579 = vmul.f32 %v657, %v1193
        %v3580 = vmul.f32 %v663, %v1199
        %v3581 = vmul.f32 %v667, %v1203
        %v3582 = vmul.f32 %v673, %v1209
        %v3583 = vmul.f32 %v677, %v1213
        %v3584 = vsel %vm1231, %v3568, 0.0
        %3585 = vadd.xlane.f32.xlu0 %v3584
        %v3586 = vpop.xlane.xlu0 %3585
        %v3587 = vsel %vm1231, %v3569, 0.0
        %3588 = vadd.xlane.f32.xlu0 %v3587
        %v3589 = vpop.xlane.xlu0 %3588
        %v3590 = vsel %vm1231, %v3570, 0.0
        %3591 = vadd.xlane.f32.xlu0 %v3590
        %v3592 = vpop.xlane.xlu0 %3591
        %v3593 = vsel %vm1231, %v3571, 0.0
        %3594 = vadd.xlane.f32.xlu0 %v3593
        %v3595 = vpop.xlane.xlu0 %3594
        %v3596 = vsel %vm1231, %v3572, 0.0
        %3597 = vadd.xlane.f32.xlu0 %v3596
        %v3598 = vpop.xlane.xlu0 %3597
        %v3599 = vsel %vm1231, %v3573, 0.0
        %3600 = vadd.xlane.f32.xlu0 %v3599
        %v3601 = vpop.xlane.xlu0 %3600
        %v3602 = vsel %vm1231, %v3574, 0.0
        %3603 = vadd.xlane.f32.xlu0 %v3602
        %v3604 = vpop.xlane.xlu0 %3603
        %v3605 = vsel %vm1231, %v3575, 0.0
        %3606 = vadd.xlane.f32.xlu0 %v3605
        %v3607 = vpop.xlane.xlu0 %3606
        %v3608 = vsel %vm1231, %v3576, 0.0
        %3609 = vadd.xlane.f32.xlu0 %v3608
        %v3610 = vpop.xlane.xlu0 %3609
        %v3611 = vsel %vm1231, %v3577, 0.0
        %3612 = vadd.xlane.f32.xlu0 %v3611
        %v3613 = vpop.xlane.xlu0 %3612
        %v3614 = vsel %vm1231, %v3578, 0.0
        %3615 = vadd.xlane.f32.xlu0 %v3614
        %v3616 = vpop.xlane.xlu0 %3615
        %v3617 = vsel %vm1231, %v3579, 0.0
        %3618 = vadd.xlane.f32.xlu0 %v3617
        %v3619 = vpop.xlane.xlu0 %3618
        %v3620 = vsel %vm1231, %v3580, 0.0
        %3621 = vadd.xlane.f32.xlu0 %v3620
        %v3622 = vpop.xlane.xlu0 %3621
        %v3623 = vsel %vm1231, %v3581, 0.0
        %3624 = vadd.xlane.f32.xlu0 %v3623
        %v3625 = vpop.xlane.xlu0 %3624
        %v3626 = vsel %vm1231, %v3582, 0.0
        %3627 = vadd.xlane.f32.xlu0 %v3626
        %v3628 = vpop.xlane.xlu0 %3627
        %v3629 = vsel %vm1231, %v3583, 0.0
        %3630 = vadd.xlane.f32.xlu0 %v3629
        %v3631 = vpop.xlane.xlu0 %3630
        %v3632 = vmul.f32 %v3586, 0.125
        %v3633 = vmul.f32 %v3589, 0.125
        %v3634 = vmul.f32 %v3592, 0.125
        %v3635 = vmul.f32 %v3595, 0.125
        %v3636 = vmul.f32 %v3598, 0.125
        %v3637 = vmul.f32 %v3601, 0.125
        %v3638 = vmul.f32 %v3604, 0.125
        %v3639 = vmul.f32 %v3607, 0.125
        %v3640 = vmul.f32 %v3610, 0.125
        %v3641 = vmul.f32 %v3613, 0.125
        %v3642 = vmul.f32 %v3616, 0.125
        %v3643 = vmul.f32 %v3619, 0.125
        %v3644 = vmul.f32 %v3622, 0.125
        %v3645 = vmul.f32 %v3625, 0.125
        %v3646 = vmul.f32 %v3628, 0.125
        %v3647 = vmul.f32 %v3631, 0.125
        %v3648 = vmax.f32 %v3392, %v3472
        %v3649 = vmax.f32 %v3393, %v3473
        %v3650 = vmax.f32 %v3394, %v3474
        %v3651 = vmax.f32 %v3395, %v3475
        %v3652 = vmax.f32 %v3396, %v3476
        %v3653 = vmax.f32 %v3397, %v3477
        %v3654 = vmax.f32 %v3398, %v3478
        %v3655 = vmax.f32 %v3399, %v3479
        %v3656 = vmax.f32 %v3400, %v3480
        %v3657 = vmax.f32 %v3401, %v3481
        %v3658 = vmax.f32 %v3402, %v3482
        %v3659 = vmax.f32 %v3403, %v3483
        %v3660 = vmax.f32 %v3404, %v3484
        %v3661 = vmax.f32 %v3405, %v3485
        %v3662 = vmax.f32 %v3406, %v3486
        %v3663 = vmax.f32 %v3407, %v3487
        %v3664 = vmax.f32 %v3648, %v3552
        %v3665 = vmax.f32 %v3649, %v3553
        %v3666 = vmax.f32 %v3650, %v3554
        %v3667 = vmax.f32 %v3651, %v3555
        %v3668 = vmax.f32 %v3652, %v3556
        %v3669 = vmax.f32 %v3653, %v3557
        %v3670 = vmax.f32 %v3654, %v3558
        %v3671 = vmax.f32 %v3655, %v3559
        %v3672 = vmax.f32 %v3656, %v3560
        %v3673 = vmax.f32 %v3657, %v3561
        %v3674 = vmax.f32 %v3658, %v3562
        %v3675 = vmax.f32 %v3659, %v3563
        %v3676 = vmax.f32 %v3660, %v3564
        %v3677 = vmax.f32 %v3661, %v3565
        %v3678 = vmax.f32 %v3662, %v3566
        %v3679 = vmax.f32 %v3663, %v3567
        %v3680 = vmax.f32 %v3664, %v3632
        %v3681 = vmax.f32 %v3665, %v3633
        %v3682 = vmax.f32 %v3666, %v3634
        %v3683 = vmax.f32 %v3667, %v3635
        %v3684 = vmax.f32 %v3668, %v3636
        %v3685 = vmax.f32 %v3669, %v3637
        %v3686 = vmax.f32 %v3670, %v3638
        %v3687 = vmax.f32 %v3671, %v3639
        %v3688 = vmax.f32 %v3672, %v3640
        %v3689 = vmax.f32 %v3673, %v3641
        %v3690 = vmax.f32 %v3674, %v3642
        %v3691 = vmax.f32 %v3675, %v3643
        %v3692 = vmax.f32 %v3676, %v3644
        %v3693 = vmax.f32 %v3677, %v3645
        %v3694 = vmax.f32 %v3678, %v3646
        %v3695 = vmax.f32 %v3679, %v3647
        %v3696 = vsub.f32 %v3392, %v3680
        %v3697 = vsub.f32 %v3393, %v3681
        %v3698 = vsub.f32 %v3394, %v3682
        %v3699 = vsub.f32 %v3395, %v3683
        %v3700 = vsub.f32 %v3396, %v3684
        %v3701 = vsub.f32 %v3397, %v3685
        %v3702 = vsub.f32 %v3398, %v3686
        %v3703 = vsub.f32 %v3399, %v3687
        %v3704 = vsub.f32 %v3400, %v3688
        %v3705 = vsub.f32 %v3401, %v3689
        %v3706 = vsub.f32 %v3402, %v3690
        %v3707 = vsub.f32 %v3403, %v3691
        %v3708 = vsub.f32 %v3404, %v3692
        %v3709 = vsub.f32 %v3405, %v3693
        %v3710 = vsub.f32 %v3406, %v3694
        %v3711 = vsub.f32 %v3407, %v3695
        %v3712 = vmul.f32 %v3696, 1.442695
        %v3713 = vpow.pop %v3712
        %v3714 = vmul.f32 %v3697, 1.442695
        %v3715 = vpow.pop %v3714
        %v3716 = vmul.f32 %v3698, 1.442695
        %v3717 = vpow.pop %v3716
        %v3718 = vmul.f32 %v3699, 1.442695
        %v3719 = vpow.pop %v3718
        %v3720 = vmul.f32 %v3700, 1.442695
        %v3721 = vpow.pop %v3720
        %v3722 = vmul.f32 %v3701, 1.442695
        %v3723 = vpow.pop %v3722
        %v3724 = vmul.f32 %v3702, 1.442695
        %v3725 = vpow.pop %v3724
        %v3726 = vmul.f32 %v3703, 1.442695
        %v3727 = vpow.pop %v3726
        %v3728 = vmul.f32 %v3704, 1.442695
        %v3729 = vpow.pop %v3728
        %v3730 = vmul.f32 %v3705, 1.442695
        %v3731 = vpow.pop %v3730
        %v3732 = vmul.f32 %v3706, 1.442695
        %v3733 = vpow.pop %v3732
        %v3734 = vmul.f32 %v3707, 1.442695
        %v3735 = vpow.pop %v3734
        %v3736 = vmul.f32 %v3708, 1.442695
        %v3737 = vpow.pop %v3736
        %v3738 = vmul.f32 %v3709, 1.442695
        %v3739 = vpow.pop %v3738
        %v3740 = vmul.f32 %v3710, 1.442695
        %v3741 = vpow.pop %v3740
        %v3742 = vmul.f32 %v3711, 1.442695
        %v3743 = vpow.pop %v3742
        %v3744 = vsub.f32 %v3472, %v3680
        %v3745 = vsub.f32 %v3473, %v3681
        %v3746 = vsub.f32 %v3474, %v3682
        %v3747 = vsub.f32 %v3475, %v3683
        %v3748 = vsub.f32 %v3476, %v3684
        %v3749 = vsub.f32 %v3477, %v3685
        %v3750 = vsub.f32 %v3478, %v3686
        %v3751 = vsub.f32 %v3479, %v3687
        %v3752 = vsub.f32 %v3480, %v3688
        %v3753 = vsub.f32 %v3481, %v3689
        %v3754 = vsub.f32 %v3482, %v3690
        %v3755 = vsub.f32 %v3483, %v3691
        %v3756 = vsub.f32 %v3484, %v3692
        %v3757 = vsub.f32 %v3485, %v3693
        %v3758 = vsub.f32 %v3486, %v3694
        %v3759 = vsub.f32 %v3487, %v3695
        %v3760 = vmul.f32 %v3744, 1.442695
        %v3761 = vpow.pop %v3760
        %v3762 = vmul.f32 %v3745, 1.442695
        %v3763 = vpow.pop %v3762
        %v3764 = vmul.f32 %v3746, 1.442695
        %v3765 = vpow.pop %v3764
        %v3766 = vmul.f32 %v3747, 1.442695
        %v3767 = vpow.pop %v3766
        %v3768 = vmul.f32 %v3748, 1.442695
        %v3769 = vpow.pop %v3768
        %v3770 = vmul.f32 %v3749, 1.442695
        %v3771 = vpow.pop %v3770
        %v3772 = vmul.f32 %v3750, 1.442695
        %v3773 = vpow.pop %v3772
        %v3774 = vmul.f32 %v3751, 1.442695
        %v3775 = vpow.pop %v3774
        %v3776 = vmul.f32 %v3752, 1.442695
        %v3777 = vpow.pop %v3776
        %v3778 = vmul.f32 %v3753, 1.442695
        %v3779 = vpow.pop %v3778
        %v3780 = vmul.f32 %v3754, 1.442695
        %v3781 = vpow.pop %v3780
        %v3782 = vmul.f32 %v3755, 1.442695
        %v3783 = vpow.pop %v3782
        %v3784 = vmul.f32 %v3756, 1.442695
        %v3785 = vpow.pop %v3784
        %v3786 = vmul.f32 %v3757, 1.442695
        %v3787 = vpow.pop %v3786
        %v3788 = vmul.f32 %v3758, 1.442695
        %v3789 = vpow.pop %v3788
        %v3790 = vmul.f32 %v3759, 1.442695
        %v3791 = vpow.pop %v3790
        %v3792 = vsub.f32 %v3552, %v3680
        %v3793 = vsub.f32 %v3553, %v3681
        %v3794 = vsub.f32 %v3554, %v3682
        %v3795 = vsub.f32 %v3555, %v3683
        %v3796 = vsub.f32 %v3556, %v3684
        %v3797 = vsub.f32 %v3557, %v3685
        %v3798 = vsub.f32 %v3558, %v3686
        %v3799 = vsub.f32 %v3559, %v3687
        %v3800 = vsub.f32 %v3560, %v3688
        %v3801 = vsub.f32 %v3561, %v3689
        %v3802 = vsub.f32 %v3562, %v3690
        %v3803 = vsub.f32 %v3563, %v3691
        %v3804 = vsub.f32 %v3564, %v3692
        %v3805 = vsub.f32 %v3565, %v3693
        %v3806 = vsub.f32 %v3566, %v3694
        %v3807 = vsub.f32 %v3567, %v3695
        %v3808 = vmul.f32 %v3792, 1.442695
        %v3809 = vpow.pop %v3808
        %v3810 = vmul.f32 %v3793, 1.442695
        %v3811 = vpow.pop %v3810
        %v3812 = vmul.f32 %v3794, 1.442695
        %v3813 = vpow.pop %v3812
        %v3814 = vmul.f32 %v3795, 1.442695
        %v3815 = vpow.pop %v3814
        %v3816 = vmul.f32 %v3796, 1.442695
        %v3817 = vpow.pop %v3816
        %v3818 = vmul.f32 %v3797, 1.442695
        %v3819 = vpow.pop %v3818
        %v3820 = vmul.f32 %v3798, 1.442695
        %v3821 = vpow.pop %v3820
        %v3822 = vmul.f32 %v3799, 1.442695
        %v3823 = vpow.pop %v3822
        %v3824 = vmul.f32 %v3800, 1.442695
        %v3825 = vpow.pop %v3824
        %v3826 = vmul.f32 %v3801, 1.442695
        %v3827 = vpow.pop %v3826
        %v3828 = vmul.f32 %v3802, 1.442695
        %v3829 = vpow.pop %v3828
        %v3830 = vmul.f32 %v3803, 1.442695
        %v3831 = vpow.pop %v3830
        %v3832 = vmul.f32 %v3804, 1.442695
        %v3833 = vpow.pop %v3832
        %v3834 = vmul.f32 %v3805, 1.442695
        %v3835 = vpow.pop %v3834
        %v3836 = vmul.f32 %v3806, 1.442695
        %v3837 = vpow.pop %v3836
        %v3838 = vmul.f32 %v3807, 1.442695
        %v3839 = vpow.pop %v3838
        %v3840 = vsub.f32 %v3632, %v3680
        %v3841 = vsub.f32 %v3633, %v3681
        %v3842 = vsub.f32 %v3634, %v3682
        %v3843 = vsub.f32 %v3635, %v3683
        %v3844 = vsub.f32 %v3636, %v3684
        %v3845 = vsub.f32 %v3637, %v3685
        %v3846 = vsub.f32 %v3638, %v3686
        %v3847 = vsub.f32 %v3639, %v3687
        %v3848 = vsub.f32 %v3640, %v3688
        %v3849 = vsub.f32 %v3641, %v3689
        %v3850 = vsub.f32 %v3642, %v3690
        %v3851 = vsub.f32 %v3643, %v3691
        %v3852 = vsub.f32 %v3644, %v3692
        %v3853 = vsub.f32 %v3645, %v3693
        %v3854 = vsub.f32 %v3646, %v3694
        %v3855 = vsub.f32 %v3647, %v3695
        %v3856 = vmul.f32 %v3840, 1.442695
        %v3857 = vpow.pop %v3856
        %v3858 = vmul.f32 %v3841, 1.442695
        %v3859 = vpow.pop %v3858
        %v3860 = vmul.f32 %v3842, 1.442695
        %v3861 = vpow.pop %v3860
        %v3862 = vmul.f32 %v3843, 1.442695
        %v3863 = vpow.pop %v3862
        %v3864 = vmul.f32 %v3844, 1.442695
        %v3865 = vpow.pop %v3864
        %v3866 = vmul.f32 %v3845, 1.442695
        %v3867 = vpow.pop %v3866
        %v3868 = vmul.f32 %v3846, 1.442695
        %v3869 = vpow.pop %v3868
        %v3870 = vmul.f32 %v3847, 1.442695
        %v3871 = vpow.pop %v3870
        %v3872 = vmul.f32 %v3848, 1.442695
        %v3873 = vpow.pop %v3872
        %v3874 = vmul.f32 %v3849, 1.442695
        %v3875 = vpow.pop %v3874
        %v3876 = vmul.f32 %v3850, 1.442695
        %v3877 = vpow.pop %v3876
        %v3878 = vmul.f32 %v3851, 1.442695
        %v3879 = vpow.pop %v3878
        %v3880 = vmul.f32 %v3852, 1.442695
        %v3881 = vpow.pop %v3880
        %v3882 = vmul.f32 %v3853, 1.442695
        %v3883 = vpow.pop %v3882
        %v3884 = vmul.f32 %v3854, 1.442695
        %v3885 = vpow.pop %v3884
        %v3886 = vmul.f32 %v3855, 1.442695
        %v3887 = vpow.pop %v3886
        %v3888 = vadd.f32 %v3713, %v3761
        %v3889 = vadd.f32 %v3715, %v3763
        %v3890 = vadd.f32 %v3717, %v3765
        %v3891 = vadd.f32 %v3719, %v3767
        %v3892 = vadd.f32 %v3721, %v3769
        %v3893 = vadd.f32 %v3723, %v3771
        %v3894 = vadd.f32 %v3725, %v3773
        %v3895 = vadd.f32 %v3727, %v3775
        %v3896 = vadd.f32 %v3729, %v3777
        %v3897 = vadd.f32 %v3731, %v3779
        %v3898 = vadd.f32 %v3733, %v3781
        %v3899 = vadd.f32 %v3735, %v3783
        %v3900 = vadd.f32 %v3737, %v3785
        %v3901 = vadd.f32 %v3739, %v3787
        %v3902 = vadd.f32 %v3741, %v3789
        %v3903 = vadd.f32 %v3743, %v3791
        %v3904 = vadd.f32 %v3888, %v3809
        %v3905 = vadd.f32 %v3889, %v3811
        %v3906 = vadd.f32 %v3890, %v3813
        %v3907 = vadd.f32 %v3891, %v3815
        %v3908 = vadd.f32 %v3892, %v3817
        %v3909 = vadd.f32 %v3893, %v3819
        %v3910 = vadd.f32 %v3894, %v3821
        %v3911 = vadd.f32 %v3895, %v3823
        %v3912 = vadd.f32 %v3896, %v3825
        %v3913 = vadd.f32 %v3897, %v3827
        %v3914 = vadd.f32 %v3898, %v3829
        %v3915 = vadd.f32 %v3899, %v3831
        %v3916 = vadd.f32 %v3900, %v3833
        %v3917 = vadd.f32 %v3901, %v3835
        %v3918 = vadd.f32 %v3902, %v3837
        %v3919 = vadd.f32 %v3903, %v3839
        %v3920 = vadd.f32 %v3904, %v3857
        %v3921 = vadd.f32 %v3905, %v3859
        %v3922 = vadd.f32 %v3906, %v3861
        %v3923 = vadd.f32 %v3907, %v3863
        %v3924 = vadd.f32 %v3908, %v3865
        %v3925 = vadd.f32 %v3909, %v3867
        %v3926 = vadd.f32 %v3910, %v3869
        %v3927 = vadd.f32 %v3911, %v3871
        %v3928 = vadd.f32 %v3912, %v3873
        %v3929 = vadd.f32 %v3913, %v3875
        %v3930 = vadd.f32 %v3914, %v3877
        %v3931 = vadd.f32 %v3915, %v3879
        %v3932 = vadd.f32 %v3916, %v3881
        %v3933 = vadd.f32 %v3917, %v3883
        %v3934 = vadd.f32 %v3918, %v3885
        %v3935 = vadd.f32 %v3919, %v3887
        %v3936 = vrcp.pop %v3920
        %v3937 = vrcp.pop %v3921
        %v3938 = vrcp.pop %v3922
        %v3939 = vrcp.pop %v3923
        %v3940 = vrcp.pop %v3924
        %v3941 = vrcp.pop %v3925
        %v3942 = vrcp.pop %v3926
        %v3943 = vrcp.pop %v3927
        %v3944 = vrcp.pop %v3928
        %v3945 = vrcp.pop %v3929
        %v3946 = vrcp.pop %v3930
        %v3947 = vrcp.pop %v3931
        %v3948 = vrcp.pop %v3932
        %v3949 = vrcp.pop %v3933
        %v3950 = vrcp.pop %v3934
        %v3951 = vrcp.pop %v3935
        %v3952 = vmul.f32 %v3713, %v3936
        %v3953 = vmul.f32 %v3715, %v3937
        %v3954 = vmul.f32 %v3717, %v3938
        %v3955 = vmul.f32 %v3719, %v3939
        %v3956 = vmul.f32 %v3721, %v3940
        %v3957 = vmul.f32 %v3723, %v3941
        %v3958 = vmul.f32 %v3725, %v3942
        %v3959 = vmul.f32 %v3727, %v3943
        %v3960 = vmul.f32 %v3729, %v3944
        %v3961 = vmul.f32 %v3731, %v3945
        %v3962 = vmul.f32 %v3733, %v3946
        %v3963 = vmul.f32 %v3735, %v3947
        %v3964 = vmul.f32 %v3737, %v3948
        %v3965 = vmul.f32 %v3739, %v3949
        %v3966 = vmul.f32 %v3741, %v3950
        %v3967 = vmul.f32 %v3743, %v3951
        %v3968 = vmul.f32 %v3952, %v1016
        %v3969 = vmul.f32 %v3953, %v1020
        %v3970 = vmul.f32 %v3954, %v1026
        %v3971 = vmul.f32 %v3955, %v1030
        %v3972 = vmul.f32 %v3956, %v1036
        %v3973 = vmul.f32 %v3957, %v1040
        %v3974 = vmul.f32 %v3958, %v1046
        %v3975 = vmul.f32 %v3959, %v1050
        %v3976 = vmul.f32 %v3960, %v1056
        %v3977 = vmul.f32 %v3961, %v1060
        %v3978 = vmul.f32 %v3962, %v1066
        %v3979 = vmul.f32 %v3963, %v1070
        %v3980 = vmul.f32 %v3964, %v1076
        %v3981 = vmul.f32 %v3965, %v1080
        %v3982 = vmul.f32 %v3966, %v1086
        %v3983 = vmul.f32 %v3967, %v1090
        %v3984 = vmul.f32 %v3761, %v3936
        %v3985 = vmul.f32 %v3763, %v3937
        %v3986 = vmul.f32 %v3765, %v3938
        %v3987 = vmul.f32 %v3767, %v3939
        %v3988 = vmul.f32 %v3769, %v3940
        %v3989 = vmul.f32 %v3771, %v3941
        %v3990 = vmul.f32 %v3773, %v3942
        %v3991 = vmul.f32 %v3775, %v3943
        %v3992 = vmul.f32 %v3777, %v3944
        %v3993 = vmul.f32 %v3779, %v3945
        %v3994 = vmul.f32 %v3781, %v3946
        %v3995 = vmul.f32 %v3783, %v3947
        %v3996 = vmul.f32 %v3785, %v3948
        %v3997 = vmul.f32 %v3787, %v3949
        %v3998 = vmul.f32 %v3789, %v3950
        %v3999 = vmul.f32 %v3791, %v3951
        %v4000 = vmul.f32 %v3984, %v1018
        %v4001 = vmul.f32 %v3985, %v1022
        %v4002 = vmul.f32 %v3986, %v1028
        %v4003 = vmul.f32 %v3987, %v1032
        %v4004 = vmul.f32 %v3988, %v1038
        %v4005 = vmul.f32 %v3989, %v1042
        %v4006 = vmul.f32 %v3990, %v1048
        %v4007 = vmul.f32 %v3991, %v1052
        %v4008 = vmul.f32 %v3992, %v1058
        %v4009 = vmul.f32 %v3993, %v1062
        %v4010 = vmul.f32 %v3994, %v1068
        %v4011 = vmul.f32 %v3995, %v1072
        %v4012 = vmul.f32 %v3996, %v1078
        %v4013 = vmul.f32 %v3997, %v1082
        %v4014 = vmul.f32 %v3998, %v1088
        %v4015 = vmul.f32 %v3999, %v1092
        %v4016 = vadd.f32 %v3968, %v4000
        %v4017 = vadd.f32 %v3969, %v4001
        %v4018 = vadd.f32 %v3970, %v4002
        %v4019 = vadd.f32 %v3971, %v4003
        %v4020 = vadd.f32 %v3972, %v4004
        %v4021 = vadd.f32 %v3973, %v4005
        %v4022 = vadd.f32 %v3974, %v4006
        %v4023 = vadd.f32 %v3975, %v4007
        %v4024 = vadd.f32 %v3976, %v4008
        %v4025 = vadd.f32 %v3977, %v4009
        %v4026 = vadd.f32 %v3978, %v4010
        %v4027 = vadd.f32 %v3979, %v4011
        %v4028 = vadd.f32 %v3980, %v4012
        %v4029 = vadd.f32 %v3981, %v4013
        %v4030 = vadd.f32 %v3982, %v4014
        %v4031 = vadd.f32 %v3983, %v4015
        %v4032 = vmul.f32 %v3809, %v3936
        %v4033 = vmul.f32 %v3811, %v3937
        %v4034 = vmul.f32 %v3813, %v3938
        %v4035 = vmul.f32 %v3815, %v3939
        %v4036 = vmul.f32 %v3817, %v3940
        %v4037 = vmul.f32 %v3819, %v3941
        %v4038 = vmul.f32 %v3821, %v3942
        %v4039 = vmul.f32 %v3823, %v3943
        %v4040 = vmul.f32 %v3825, %v3944
        %v4041 = vmul.f32 %v3827, %v3945
        %v4042 = vmul.f32 %v3829, %v3946
        %v4043 = vmul.f32 %v3831, %v3947
        %v4044 = vmul.f32 %v3833, %v3948
        %v4045 = vmul.f32 %v3835, %v3949
        %v4046 = vmul.f32 %v3837, %v3950
        %v4047 = vmul.f32 %v3839, %v3951
        %v4048 = vmul.f32 %v4032, %v1137
        %v4049 = vmul.f32 %v4033, %v1141
        %v4050 = vmul.f32 %v4034, %v1147
        %v4051 = vmul.f32 %v4035, %v1151
        %v4052 = vmul.f32 %v4036, %v1157
        %v4053 = vmul.f32 %v4037, %v1161
        %v4054 = vmul.f32 %v4038, %v1167
        %v4055 = vmul.f32 %v4039, %v1171
        %v4056 = vmul.f32 %v4040, %v1177
        %v4057 = vmul.f32 %v4041, %v1181
        %v4058 = vmul.f32 %v4042, %v1187
        %v4059 = vmul.f32 %v4043, %v1191
        %v4060 = vmul.f32 %v4044, %v1197
        %v4061 = vmul.f32 %v4045, %v1201
        %v4062 = vmul.f32 %v4046, %v1207
        %v4063 = vmul.f32 %v4047, %v1211
        %v4064 = vadd.f32 %v4016, %v4048
        %v4065 = vadd.f32 %v4017, %v4049
        %v4066 = vadd.f32 %v4018, %v4050
        %v4067 = vadd.f32 %v4019, %v4051
        %v4068 = vadd.f32 %v4020, %v4052
        %v4069 = vadd.f32 %v4021, %v4053
        %v4070 = vadd.f32 %v4022, %v4054
        %v4071 = vadd.f32 %v4023, %v4055
        %v4072 = vadd.f32 %v4024, %v4056
        %v4073 = vadd.f32 %v4025, %v4057
        %v4074 = vadd.f32 %v4026, %v4058
        %v4075 = vadd.f32 %v4027, %v4059
        %v4076 = vadd.f32 %v4028, %v4060
        %v4077 = vadd.f32 %v4029, %v4061
        %v4078 = vadd.f32 %v4030, %v4062
        %v4079 = vadd.f32 %v4031, %v4063
        %v4080 = vmul.f32 %v3857, %v3936
        %v4081 = vmul.f32 %v3859, %v3937
        %v4082 = vmul.f32 %v3861, %v3938
        %v4083 = vmul.f32 %v3863, %v3939
        %v4084 = vmul.f32 %v3865, %v3940
        %v4085 = vmul.f32 %v3867, %v3941
        %v4086 = vmul.f32 %v3869, %v3942
        %v4087 = vmul.f32 %v3871, %v3943
        %v4088 = vmul.f32 %v3873, %v3944
        %v4089 = vmul.f32 %v3875, %v3945
        %v4090 = vmul.f32 %v3877, %v3946
        %v4091 = vmul.f32 %v3879, %v3947
        %v4092 = vmul.f32 %v3881, %v3948
        %v4093 = vmul.f32 %v3883, %v3949
        %v4094 = vmul.f32 %v3885, %v3950
        %v4095 = vmul.f32 %v3887, %v3951
        %v4096 = vmul.f32 %v4080, %v1139
        %v4097 = vmul.f32 %v4081, %v1143
        %v4098 = vmul.f32 %v4082, %v1149
        %v4099 = vmul.f32 %v4083, %v1153
        %v4100 = vmul.f32 %v4084, %v1159
        %v4101 = vmul.f32 %v4085, %v1163
        %v4102 = vmul.f32 %v4086, %v1169
        %v4103 = vmul.f32 %v4087, %v1173
        %v4104 = vmul.f32 %v4088, %v1179
        %v4105 = vmul.f32 %v4089, %v1183
        %v4106 = vmul.f32 %v4090, %v1189
        %v4107 = vmul.f32 %v4091, %v1193
        %v4108 = vmul.f32 %v4092, %v1199
        %v4109 = vmul.f32 %v4093, %v1203
        %v4110 = vmul.f32 %v4094, %v1209
        %v4111 = vmul.f32 %v4095, %v1213
        %v4112 = vadd.f32 %v4064, %v4096
        %v4113 = vadd.f32 %v4065, %v4097
        %v4114 = vadd.f32 %v4066, %v4098
        %v4115 = vadd.f32 %v4067, %v4099
        %v4116 = vadd.f32 %v4068, %v4100
        %v4117 = vadd.f32 %v4069, %v4101
        %v4118 = vadd.f32 %v4070, %v4102
        %v4119 = vadd.f32 %v4071, %v4103
        %v4120 = vadd.f32 %v4072, %v4104
        %v4121 = vadd.f32 %v4073, %v4105
        %v4122 = vadd.f32 %v4074, %v4106
        %v4123 = vadd.f32 %v4075, %v4107
        %v4124 = vadd.f32 %v4076, %v4108
        %v4125 = vadd.f32 %v4077, %v4109
        %v4126 = vadd.f32 %v4078, %v4110
        %v4127 = vadd.f32 %v4079, %v4111
        %4144 = vrot.lane.b32.xlu0 %v1016, 64
        %v4145 = vpop.permute.xlu0 %4144
        %4146 = vrot.lane.b32.xlu0 %v1020, 64
        %v4147 = vpop.permute.xlu0 %4146
        %4148 = vrot.lane.b32.xlu0 %v1026, 64
        %v4149 = vpop.permute.xlu0 %4148
        %4150 = vrot.lane.b32.xlu0 %v1030, 64
        %v4151 = vpop.permute.xlu0 %4150
        %4152 = vrot.lane.b32.xlu0 %v1036, 64
        %v4153 = vpop.permute.xlu0 %4152
        %4154 = vrot.lane.b32.xlu0 %v1040, 64
        %v4155 = vpop.permute.xlu0 %4154
        %4156 = vrot.lane.b32.xlu0 %v1046, 64
        %v4157 = vpop.permute.xlu0 %4156
        %4158 = vrot.lane.b32.xlu0 %v1050, 64
        %v4159 = vpop.permute.xlu0 %4158
        %4160 = vrot.lane.b32.xlu0 %v1056, 64
        %v4161 = vpop.permute.xlu0 %4160
        %4162 = vrot.lane.b32.xlu0 %v1060, 64
        %v4163 = vpop.permute.xlu0 %4162
        %4164 = vrot.lane.b32.xlu0 %v1066, 64
        %v4165 = vpop.permute.xlu0 %4164
        %4166 = vrot.lane.b32.xlu0 %v1070, 64
        %v4167 = vpop.permute.xlu0 %4166
        %4168 = vrot.lane.b32.xlu0 %v1076, 64
        %v4169 = vpop.permute.xlu0 %4168
        %4170 = vrot.lane.b32.xlu0 %v1080, 64
        %v4171 = vpop.permute.xlu0 %4170
        %4172 = vrot.lane.b32.xlu0 %v1086, 64
        %v4173 = vpop.permute.xlu0 %4172
        %4174 = vrot.lane.b32.xlu0 %v1090, 64
        %v4175 = vpop.permute.xlu0 %4174
        %v4192 = vmul.f32 %v603, %v4145
        %v4193 = vmul.f32 %v607, %v4147
        %v4194 = vmul.f32 %v613, %v4149
        %v4195 = vmul.f32 %v617, %v4151
        %v4196 = vmul.f32 %v623, %v4153
        %v4197 = vmul.f32 %v627, %v4155
        %v4198 = vmul.f32 %v633, %v4157
        %v4199 = vmul.f32 %v637, %v4159
        %v4200 = vmul.f32 %v643, %v4161
        %v4201 = vmul.f32 %v647, %v4163
        %v4202 = vmul.f32 %v653, %v4165
        %v4203 = vmul.f32 %v657, %v4167
        %v4204 = vmul.f32 %v663, %v4169
        %v4205 = vmul.f32 %v667, %v4171
        %v4206 = vmul.f32 %v673, %v4173
        %v4207 = vmul.f32 %v677, %v4175
        %4224 = vrot.lane.b32.xlu0 %v4192, 64
        %v4225 = vpop.permute.xlu0 %4224
        %4226 = vrot.lane.b32.xlu0 %v4193, 64
        %v4227 = vpop.permute.xlu0 %4226
        %4228 = vrot.lane.b32.xlu0 %v4194, 64
        %v4229 = vpop.permute.xlu0 %4228
        %4230 = vrot.lane.b32.xlu0 %v4195, 64
        %v4231 = vpop.permute.xlu0 %4230
        %4232 = vrot.lane.b32.xlu0 %v4196, 64
        %v4233 = vpop.permute.xlu0 %4232
        %4234 = vrot.lane.b32.xlu0 %v4197, 64
        %v4235 = vpop.permute.xlu0 %4234
        %4236 = vrot.lane.b32.xlu0 %v4198, 64
        %v4237 = vpop.permute.xlu0 %4236
        %4238 = vrot.lane.b32.xlu0 %v4199, 64
        %v4239 = vpop.permute.xlu0 %4238
        %4240 = vrot.lane.b32.xlu0 %v4200, 64
        %v4241 = vpop.permute.xlu0 %4240
        %4242 = vrot.lane.b32.xlu0 %v4201, 64
        %v4243 = vpop.permute.xlu0 %4242
        %4244 = vrot.lane.b32.xlu0 %v4202, 64
        %v4245 = vpop.permute.xlu0 %4244
        %4246 = vrot.lane.b32.xlu0 %v4203, 64
        %v4247 = vpop.permute.xlu0 %4246
        %4248 = vrot.lane.b32.xlu0 %v4204, 64
        %v4249 = vpop.permute.xlu0 %4248
        %4250 = vrot.lane.b32.xlu0 %v4205, 64
        %v4251 = vpop.permute.xlu0 %4250
        %4252 = vrot.lane.b32.xlu0 %v4206, 64
        %v4253 = vpop.permute.xlu0 %4252
        %4254 = vrot.lane.b32.xlu0 %v4207, 64
        %v4255 = vpop.permute.xlu0 %4254
        %v4272 = vsel %vm1231, %v4225, 0.0
        %4273 = vadd.xlane.f32.xlu0 %v4272
        %v4274 = vpop.xlane.xlu0 %4273
        %v4275 = vsel %vm1231, %v4227, 0.0
        %4276 = vadd.xlane.f32.xlu0 %v4275
        %v4277 = vpop.xlane.xlu0 %4276
        %v4278 = vsel %vm1231, %v4229, 0.0
        %4279 = vadd.xlane.f32.xlu0 %v4278
        %v4280 = vpop.xlane.xlu0 %4279
        %v4281 = vsel %vm1231, %v4231, 0.0
        %4282 = vadd.xlane.f32.xlu0 %v4281
        %v4283 = vpop.xlane.xlu0 %4282
        %v4284 = vsel %vm1231, %v4233, 0.0
        %4285 = vadd.xlane.f32.xlu0 %v4284
        %v4286 = vpop.xlane.xlu0 %4285
        %v4287 = vsel %vm1231, %v4235, 0.0
        %4288 = vadd.xlane.f32.xlu0 %v4287
        %v4289 = vpop.xlane.xlu0 %4288
        %v4290 = vsel %vm1231, %v4237, 0.0
        %4291 = vadd.xlane.f32.xlu0 %v4290
        %v4292 = vpop.xlane.xlu0 %4291
        %v4293 = vsel %vm1231, %v4239, 0.0
        %4294 = vadd.xlane.f32.xlu0 %v4293
        %v4295 = vpop.xlane.xlu0 %4294
        %v4296 = vsel %vm1231, %v4241, 0.0
        %4297 = vadd.xlane.f32.xlu0 %v4296
        %v4298 = vpop.xlane.xlu0 %4297
        %v4299 = vsel %vm1231, %v4243, 0.0
        %4300 = vadd.xlane.f32.xlu0 %v4299
        %v4301 = vpop.xlane.xlu0 %4300
        %v4302 = vsel %vm1231, %v4245, 0.0
        %4303 = vadd.xlane.f32.xlu0 %v4302
        %v4304 = vpop.xlane.xlu0 %4303
        %v4305 = vsel %vm1231, %v4247, 0.0
        %4306 = vadd.xlane.f32.xlu0 %v4305
        %v4307 = vpop.xlane.xlu0 %4306
        %v4308 = vsel %vm1231, %v4249, 0.0
        %4309 = vadd.xlane.f32.xlu0 %v4308
        %v4310 = vpop.xlane.xlu0 %4309
        %v4311 = vsel %vm1231, %v4251, 0.0
        %4312 = vadd.xlane.f32.xlu0 %v4311
        %v4313 = vpop.xlane.xlu0 %4312
        %v4314 = vsel %vm1231, %v4253, 0.0
        %4315 = vadd.xlane.f32.xlu0 %v4314
        %v4316 = vpop.xlane.xlu0 %4315
        %v4317 = vsel %vm1231, %v4255, 0.0
        %4318 = vadd.xlane.f32.xlu0 %v4317
        %v4319 = vpop.xlane.xlu0 %4318
        %v4320 = vmul.f32 %v4274, 0.125
        %v4321 = vmul.f32 %v4277, 0.125
        %v4322 = vmul.f32 %v4280, 0.125
        %v4323 = vmul.f32 %v4283, 0.125
        %v4324 = vmul.f32 %v4286, 0.125
        %v4325 = vmul.f32 %v4289, 0.125
        %v4326 = vmul.f32 %v4292, 0.125
        %v4327 = vmul.f32 %v4295, 0.125
        %v4328 = vmul.f32 %v4298, 0.125
        %v4329 = vmul.f32 %v4301, 0.125
        %v4330 = vmul.f32 %v4304, 0.125
        %v4331 = vmul.f32 %v4307, 0.125
        %v4332 = vmul.f32 %v4310, 0.125
        %v4333 = vmul.f32 %v4313, 0.125
        %v4334 = vmul.f32 %v4316, 0.125
        %v4335 = vmul.f32 %v4319, 0.125
        %4352 = vrot.lane.b32.xlu0 %v1018, 64
        %v4353 = vpop.permute.xlu0 %4352
        %4354 = vrot.lane.b32.xlu0 %v1022, 64
        %v4355 = vpop.permute.xlu0 %4354
        %4356 = vrot.lane.b32.xlu0 %v1028, 64
        %v4357 = vpop.permute.xlu0 %4356
        %4358 = vrot.lane.b32.xlu0 %v1032, 64
        %v4359 = vpop.permute.xlu0 %4358
        %4360 = vrot.lane.b32.xlu0 %v1038, 64
        %v4361 = vpop.permute.xlu0 %4360
        %4362 = vrot.lane.b32.xlu0 %v1042, 64
        %v4363 = vpop.permute.xlu0 %4362
        %4364 = vrot.lane.b32.xlu0 %v1048, 64
        %v4365 = vpop.permute.xlu0 %4364
        %4366 = vrot.lane.b32.xlu0 %v1052, 64
        %v4367 = vpop.permute.xlu0 %4366
        %4368 = vrot.lane.b32.xlu0 %v1058, 64
        %v4369 = vpop.permute.xlu0 %4368
        %4370 = vrot.lane.b32.xlu0 %v1062, 64
        %v4371 = vpop.permute.xlu0 %4370
        %4372 = vrot.lane.b32.xlu0 %v1068, 64
        %v4373 = vpop.permute.xlu0 %4372
        %4374 = vrot.lane.b32.xlu0 %v1072, 64
        %v4375 = vpop.permute.xlu0 %4374
        %4376 = vrot.lane.b32.xlu0 %v1078, 64
        %v4377 = vpop.permute.xlu0 %4376
        %4378 = vrot.lane.b32.xlu0 %v1082, 64
        %v4379 = vpop.permute.xlu0 %4378
        %4380 = vrot.lane.b32.xlu0 %v1088, 64
        %v4381 = vpop.permute.xlu0 %4380
        %4382 = vrot.lane.b32.xlu0 %v1092, 64
        %v4383 = vpop.permute.xlu0 %4382
        %v4400 = vmul.f32 %v603, %v4353
        %v4401 = vmul.f32 %v607, %v4355
        %v4402 = vmul.f32 %v613, %v4357
        %v4403 = vmul.f32 %v617, %v4359
        %v4404 = vmul.f32 %v623, %v4361
        %v4405 = vmul.f32 %v627, %v4363
        %v4406 = vmul.f32 %v633, %v4365
        %v4407 = vmul.f32 %v637, %v4367
        %v4408 = vmul.f32 %v643, %v4369
        %v4409 = vmul.f32 %v647, %v4371
        %v4410 = vmul.f32 %v653, %v4373
        %v4411 = vmul.f32 %v657, %v4375
        %v4412 = vmul.f32 %v663, %v4377
        %v4413 = vmul.f32 %v667, %v4379
        %v4414 = vmul.f32 %v673, %v4381
        %v4415 = vmul.f32 %v677, %v4383
        %4432 = vrot.lane.b32.xlu0 %v4400, 64
        %v4433 = vpop.permute.xlu0 %4432
        %4434 = vrot.lane.b32.xlu0 %v4401, 64
        %v4435 = vpop.permute.xlu0 %4434
        %4436 = vrot.lane.b32.xlu0 %v4402, 64
        %v4437 = vpop.permute.xlu0 %4436
        %4438 = vrot.lane.b32.xlu0 %v4403, 64
        %v4439 = vpop.permute.xlu0 %4438
        %4440 = vrot.lane.b32.xlu0 %v4404, 64
        %v4441 = vpop.permute.xlu0 %4440
        %4442 = vrot.lane.b32.xlu0 %v4405, 64
        %v4443 = vpop.permute.xlu0 %4442
        %4444 = vrot.lane.b32.xlu0 %v4406, 64
        %v4445 = vpop.permute.xlu0 %4444
        %4446 = vrot.lane.b32.xlu0 %v4407, 64
        %v4447 = vpop.permute.xlu0 %4446
        %4448 = vrot.lane.b32.xlu0 %v4408, 64
        %v4449 = vpop.permute.xlu0 %4448
        %4450 = vrot.lane.b32.xlu0 %v4409, 64
        %v4451 = vpop.permute.xlu0 %4450
        %4452 = vrot.lane.b32.xlu0 %v4410, 64
        %v4453 = vpop.permute.xlu0 %4452
        %4454 = vrot.lane.b32.xlu0 %v4411, 64
        %v4455 = vpop.permute.xlu0 %4454
        %4456 = vrot.lane.b32.xlu0 %v4412, 64
        %v4457 = vpop.permute.xlu0 %4456
        %4458 = vrot.lane.b32.xlu0 %v4413, 64
        %v4459 = vpop.permute.xlu0 %4458
        %4460 = vrot.lane.b32.xlu0 %v4414, 64
        %v4461 = vpop.permute.xlu0 %4460
        %4462 = vrot.lane.b32.xlu0 %v4415, 64
        %v4463 = vpop.permute.xlu0 %4462
        %v4480 = vsel %vm1231, %v4433, 0.0
        %4481 = vadd.xlane.f32.xlu0 %v4480
        %v4482 = vpop.xlane.xlu0 %4481
        %v4483 = vsel %vm1231, %v4435, 0.0
        %4484 = vadd.xlane.f32.xlu0 %v4483
        %v4485 = vpop.xlane.xlu0 %4484
        %v4486 = vsel %vm1231, %v4437, 0.0
        %4487 = vadd.xlane.f32.xlu0 %v4486
        %v4488 = vpop.xlane.xlu0 %4487
        %v4489 = vsel %vm1231, %v4439, 0.0
        %4490 = vadd.xlane.f32.xlu0 %v4489
        %v4491 = vpop.xlane.xlu0 %4490
        %v4492 = vsel %vm1231, %v4441, 0.0
        %4493 = vadd.xlane.f32.xlu0 %v4492
        %v4494 = vpop.xlane.xlu0 %4493
        %v4495 = vsel %vm1231, %v4443, 0.0
        %4496 = vadd.xlane.f32.xlu0 %v4495
        %v4497 = vpop.xlane.xlu0 %4496
        %v4498 = vsel %vm1231, %v4445, 0.0
        %4499 = vadd.xlane.f32.xlu0 %v4498
        %v4500 = vpop.xlane.xlu0 %4499
        %v4501 = vsel %vm1231, %v4447, 0.0
        %4502 = vadd.xlane.f32.xlu0 %v4501
        %v4503 = vpop.xlane.xlu0 %4502
        %v4504 = vsel %vm1231, %v4449, 0.0
        %4505 = vadd.xlane.f32.xlu0 %v4504
        %v4506 = vpop.xlane.xlu0 %4505
        %v4507 = vsel %vm1231, %v4451, 0.0
        %4508 = vadd.xlane.f32.xlu0 %v4507
        %v4509 = vpop.xlane.xlu0 %4508
        %v4510 = vsel %vm1231, %v4453, 0.0
        %4511 = vadd.xlane.f32.xlu0 %v4510
        %v4512 = vpop.xlane.xlu0 %4511
        %v4513 = vsel %vm1231, %v4455, 0.0
        %4514 = vadd.xlane.f32.xlu0 %v4513
        %v4515 = vpop.xlane.xlu0 %4514
        %v4516 = vsel %vm1231, %v4457, 0.0
        %4517 = vadd.xlane.f32.xlu0 %v4516
        %v4518 = vpop.xlane.xlu0 %4517
        %v4519 = vsel %vm1231, %v4459, 0.0
        %4520 = vadd.xlane.f32.xlu0 %v4519
        %v4521 = vpop.xlane.xlu0 %4520
        %v4522 = vsel %vm1231, %v4461, 0.0
        %4523 = vadd.xlane.f32.xlu0 %v4522
        %v4524 = vpop.xlane.xlu0 %4523
        %v4525 = vsel %vm1231, %v4463, 0.0
        %4526 = vadd.xlane.f32.xlu0 %v4525
        %v4527 = vpop.xlane.xlu0 %4526
        %v4528 = vmul.f32 %v4482, 0.125
        %v4529 = vmul.f32 %v4485, 0.125
        %v4530 = vmul.f32 %v4488, 0.125
        %v4531 = vmul.f32 %v4491, 0.125
        %v4532 = vmul.f32 %v4494, 0.125
        %v4533 = vmul.f32 %v4497, 0.125
        %v4534 = vmul.f32 %v4500, 0.125
        %v4535 = vmul.f32 %v4503, 0.125
        %v4536 = vmul.f32 %v4506, 0.125
        %v4537 = vmul.f32 %v4509, 0.125
        %v4538 = vmul.f32 %v4512, 0.125
        %v4539 = vmul.f32 %v4515, 0.125
        %v4540 = vmul.f32 %v4518, 0.125
        %v4541 = vmul.f32 %v4521, 0.125
        %v4542 = vmul.f32 %v4524, 0.125
        %v4543 = vmul.f32 %v4527, 0.125
        %4560 = vrot.lane.b32.xlu0 %v1137, 64
        %v4561 = vpop.permute.xlu0 %4560
        %4562 = vrot.lane.b32.xlu0 %v1141, 64
        %v4563 = vpop.permute.xlu0 %4562
        %4564 = vrot.lane.b32.xlu0 %v1147, 64
        %v4565 = vpop.permute.xlu0 %4564
        %4566 = vrot.lane.b32.xlu0 %v1151, 64
        %v4567 = vpop.permute.xlu0 %4566
        %4568 = vrot.lane.b32.xlu0 %v1157, 64
        %v4569 = vpop.permute.xlu0 %4568
        %4570 = vrot.lane.b32.xlu0 %v1161, 64
        %v4571 = vpop.permute.xlu0 %4570
        %4572 = vrot.lane.b32.xlu0 %v1167, 64
        %v4573 = vpop.permute.xlu0 %4572
        %4574 = vrot.lane.b32.xlu0 %v1171, 64
        %v4575 = vpop.permute.xlu0 %4574
        %4576 = vrot.lane.b32.xlu0 %v1177, 64
        %v4577 = vpop.permute.xlu0 %4576
        %4578 = vrot.lane.b32.xlu0 %v1181, 64
        %v4579 = vpop.permute.xlu0 %4578
        %4580 = vrot.lane.b32.xlu0 %v1187, 64
        %v4581 = vpop.permute.xlu0 %4580
        %4582 = vrot.lane.b32.xlu0 %v1191, 64
        %v4583 = vpop.permute.xlu0 %4582
        %4584 = vrot.lane.b32.xlu0 %v1197, 64
        %v4585 = vpop.permute.xlu0 %4584
        %4586 = vrot.lane.b32.xlu0 %v1201, 64
        %v4587 = vpop.permute.xlu0 %4586
        %4588 = vrot.lane.b32.xlu0 %v1207, 64
        %v4589 = vpop.permute.xlu0 %4588
        %4590 = vrot.lane.b32.xlu0 %v1211, 64
        %v4591 = vpop.permute.xlu0 %4590
        %v4608 = vmul.f32 %v603, %v4561
        %v4609 = vmul.f32 %v607, %v4563
        %v4610 = vmul.f32 %v613, %v4565
        %v4611 = vmul.f32 %v617, %v4567
        %v4612 = vmul.f32 %v623, %v4569
        %v4613 = vmul.f32 %v627, %v4571
        %v4614 = vmul.f32 %v633, %v4573
        %v4615 = vmul.f32 %v637, %v4575
        %v4616 = vmul.f32 %v643, %v4577
        %v4617 = vmul.f32 %v647, %v4579
        %v4618 = vmul.f32 %v653, %v4581
        %v4619 = vmul.f32 %v657, %v4583
        %v4620 = vmul.f32 %v663, %v4585
        %v4621 = vmul.f32 %v667, %v4587
        %v4622 = vmul.f32 %v673, %v4589
        %v4623 = vmul.f32 %v677, %v4591
        %4640 = vrot.lane.b32.xlu0 %v4608, 64
        %v4641 = vpop.permute.xlu0 %4640
        %4642 = vrot.lane.b32.xlu0 %v4609, 64
        %v4643 = vpop.permute.xlu0 %4642
        %4644 = vrot.lane.b32.xlu0 %v4610, 64
        %v4645 = vpop.permute.xlu0 %4644
        %4646 = vrot.lane.b32.xlu0 %v4611, 64
        %v4647 = vpop.permute.xlu0 %4646
        %4648 = vrot.lane.b32.xlu0 %v4612, 64
        %v4649 = vpop.permute.xlu0 %4648
        %4650 = vrot.lane.b32.xlu0 %v4613, 64
        %v4651 = vpop.permute.xlu0 %4650
        %4652 = vrot.lane.b32.xlu0 %v4614, 64
        %v4653 = vpop.permute.xlu0 %4652
        %4654 = vrot.lane.b32.xlu0 %v4615, 64
        %v4655 = vpop.permute.xlu0 %4654
        %4656 = vrot.lane.b32.xlu0 %v4616, 64
        %v4657 = vpop.permute.xlu0 %4656
        %4658 = vrot.lane.b32.xlu0 %v4617, 64
        %v4659 = vpop.permute.xlu0 %4658
        %4660 = vrot.lane.b32.xlu0 %v4618, 64
        %v4661 = vpop.permute.xlu0 %4660
        %4662 = vrot.lane.b32.xlu0 %v4619, 64
        %v4663 = vpop.permute.xlu0 %4662
        %4664 = vrot.lane.b32.xlu0 %v4620, 64
        %v4665 = vpop.permute.xlu0 %4664
        %4666 = vrot.lane.b32.xlu0 %v4621, 64
        %v4667 = vpop.permute.xlu0 %4666
        %4668 = vrot.lane.b32.xlu0 %v4622, 64
        %v4669 = vpop.permute.xlu0 %4668
        %4670 = vrot.lane.b32.xlu0 %v4623, 64
        %v4671 = vpop.permute.xlu0 %4670
        %v4688 = vsel %vm1231, %v4641, 0.0
        %4689 = vadd.xlane.f32.xlu0 %v4688
        %v4690 = vpop.xlane.xlu0 %4689
        %v4691 = vsel %vm1231, %v4643, 0.0
        %4692 = vadd.xlane.f32.xlu0 %v4691
        %v4693 = vpop.xlane.xlu0 %4692
        %v4694 = vsel %vm1231, %v4645, 0.0
        %4695 = vadd.xlane.f32.xlu0 %v4694
        %v4696 = vpop.xlane.xlu0 %4695
        %v4697 = vsel %vm1231, %v4647, 0.0
        %4698 = vadd.xlane.f32.xlu0 %v4697
        %v4699 = vpop.xlane.xlu0 %4698
        %v4700 = vsel %vm1231, %v4649, 0.0
        %4701 = vadd.xlane.f32.xlu0 %v4700
        %v4702 = vpop.xlane.xlu0 %4701
        %v4703 = vsel %vm1231, %v4651, 0.0
        %4704 = vadd.xlane.f32.xlu0 %v4703
        %v4705 = vpop.xlane.xlu0 %4704
        %v4706 = vsel %vm1231, %v4653, 0.0
        %4707 = vadd.xlane.f32.xlu0 %v4706
        %v4708 = vpop.xlane.xlu0 %4707
        %v4709 = vsel %vm1231, %v4655, 0.0
        %4710 = vadd.xlane.f32.xlu0 %v4709
        %v4711 = vpop.xlane.xlu0 %4710
        %v4712 = vsel %vm1231, %v4657, 0.0
        %4713 = vadd.xlane.f32.xlu0 %v4712
        %v4714 = vpop.xlane.xlu0 %4713
        %v4715 = vsel %vm1231, %v4659, 0.0
        %4716 = vadd.xlane.f32.xlu0 %v4715
        %v4717 = vpop.xlane.xlu0 %4716
        %v4718 = vsel %vm1231, %v4661, 0.0
        %4719 = vadd.xlane.f32.xlu0 %v4718
        %v4720 = vpop.xlane.xlu0 %4719
        %v4721 = vsel %vm1231, %v4663, 0.0
        %4722 = vadd.xlane.f32.xlu0 %v4721
        %v4723 = vpop.xlane.xlu0 %4722
        %v4724 = vsel %vm1231, %v4665, 0.0
        %4725 = vadd.xlane.f32.xlu0 %v4724
        %v4726 = vpop.xlane.xlu0 %4725
        %v4727 = vsel %vm1231, %v4667, 0.0
        %4728 = vadd.xlane.f32.xlu0 %v4727
        %v4729 = vpop.xlane.xlu0 %4728
        %v4730 = vsel %vm1231, %v4669, 0.0
        %4731 = vadd.xlane.f32.xlu0 %v4730
        %v4732 = vpop.xlane.xlu0 %4731
        %v4733 = vsel %vm1231, %v4671, 0.0
        %4734 = vadd.xlane.f32.xlu0 %v4733
        %v4735 = vpop.xlane.xlu0 %4734
        %v4736 = vmul.f32 %v4690, 0.125
        %v4737 = vmul.f32 %v4693, 0.125
        %v4738 = vmul.f32 %v4696, 0.125
        %v4739 = vmul.f32 %v4699, 0.125
        %v4740 = vmul.f32 %v4702, 0.125
        %v4741 = vmul.f32 %v4705, 0.125
        %v4742 = vmul.f32 %v4708, 0.125
        %v4743 = vmul.f32 %v4711, 0.125
        %v4744 = vmul.f32 %v4714, 0.125
        %v4745 = vmul.f32 %v4717, 0.125
        %v4746 = vmul.f32 %v4720, 0.125
        %v4747 = vmul.f32 %v4723, 0.125
        %v4748 = vmul.f32 %v4726, 0.125
        %v4749 = vmul.f32 %v4729, 0.125
        %v4750 = vmul.f32 %v4732, 0.125
        %v4751 = vmul.f32 %v4735, 0.125
        %4768 = vrot.lane.b32.xlu0 %v1139, 64
        %v4769 = vpop.permute.xlu0 %4768
        %4770 = vrot.lane.b32.xlu0 %v1143, 64
        %v4771 = vpop.permute.xlu0 %4770
        %4772 = vrot.lane.b32.xlu0 %v1149, 64
        %v4773 = vpop.permute.xlu0 %4772
        %4774 = vrot.lane.b32.xlu0 %v1153, 64
        %v4775 = vpop.permute.xlu0 %4774
        %4776 = vrot.lane.b32.xlu0 %v1159, 64
        %v4777 = vpop.permute.xlu0 %4776
        %4778 = vrot.lane.b32.xlu0 %v1163, 64
        %v4779 = vpop.permute.xlu0 %4778
        %4780 = vrot.lane.b32.xlu0 %v1169, 64
        %v4781 = vpop.permute.xlu0 %4780
        %4782 = vrot.lane.b32.xlu0 %v1173, 64
        %v4783 = vpop.permute.xlu0 %4782
        %4784 = vrot.lane.b32.xlu0 %v1179, 64
        %v4785 = vpop.permute.xlu0 %4784
        %4786 = vrot.lane.b32.xlu0 %v1183, 64
        %v4787 = vpop.permute.xlu0 %4786
        %4788 = vrot.lane.b32.xlu0 %v1189, 64
        %v4789 = vpop.permute.xlu0 %4788
        %4790 = vrot.lane.b32.xlu0 %v1193, 64
        %v4791 = vpop.permute.xlu0 %4790
        %4792 = vrot.lane.b32.xlu0 %v1199, 64
        %v4793 = vpop.permute.xlu0 %4792
        %4794 = vrot.lane.b32.xlu0 %v1203, 64
        %v4795 = vpop.permute.xlu0 %4794
        %4796 = vrot.lane.b32.xlu0 %v1209, 64
        %v4797 = vpop.permute.xlu0 %4796
        %4798 = vrot.lane.b32.xlu0 %v1213, 64
        %v4799 = vpop.permute.xlu0 %4798
        %v4816 = vmul.f32 %v603, %v4769
        %v4817 = vmul.f32 %v607, %v4771
        %v4818 = vmul.f32 %v613, %v4773
        %v4819 = vmul.f32 %v617, %v4775
        %v4820 = vmul.f32 %v623, %v4777
        %v4821 = vmul.f32 %v627, %v4779
        %v4822 = vmul.f32 %v633, %v4781
        %v4823 = vmul.f32 %v637, %v4783
        %v4824 = vmul.f32 %v643, %v4785
        %v4825 = vmul.f32 %v647, %v4787
        %v4826 = vmul.f32 %v653, %v4789
        %v4827 = vmul.f32 %v657, %v4791
        %v4828 = vmul.f32 %v663, %v4793
        %v4829 = vmul.f32 %v667, %v4795
        %v4830 = vmul.f32 %v673, %v4797
        %v4831 = vmul.f32 %v677, %v4799
        %4848 = vrot.lane.b32.xlu0 %v4816, 64
        %v4849 = vpop.permute.xlu0 %4848
        %4850 = vrot.lane.b32.xlu0 %v4817, 64
        %v4851 = vpop.permute.xlu0 %4850
        %4852 = vrot.lane.b32.xlu0 %v4818, 64
        %v4853 = vpop.permute.xlu0 %4852
        %4854 = vrot.lane.b32.xlu0 %v4819, 64
        %v4855 = vpop.permute.xlu0 %4854
        %4856 = vrot.lane.b32.xlu0 %v4820, 64
        %v4857 = vpop.permute.xlu0 %4856
        %4858 = vrot.lane.b32.xlu0 %v4821, 64
        %v4859 = vpop.permute.xlu0 %4858
        %4860 = vrot.lane.b32.xlu0 %v4822, 64
        %v4861 = vpop.permute.xlu0 %4860
        %4862 = vrot.lane.b32.xlu0 %v4823, 64
        %v4863 = vpop.permute.xlu0 %4862
        %4864 = vrot.lane.b32.xlu0 %v4824, 64
        %v4865 = vpop.permute.xlu0 %4864
        %4866 = vrot.lane.b32.xlu0 %v4825, 64
        %v4867 = vpop.permute.xlu0 %4866
        %4868 = vrot.lane.b32.xlu0 %v4826, 64
        %v4869 = vpop.permute.xlu0 %4868
        %4870 = vrot.lane.b32.xlu0 %v4827, 64
        %v4871 = vpop.permute.xlu0 %4870
        %4872 = vrot.lane.b32.xlu0 %v4828, 64
        %v4873 = vpop.permute.xlu0 %4872
        %4874 = vrot.lane.b32.xlu0 %v4829, 64
        %v4875 = vpop.permute.xlu0 %4874
        %4876 = vrot.lane.b32.xlu0 %v4830, 64
        %v4877 = vpop.permute.xlu0 %4876
        %4878 = vrot.lane.b32.xlu0 %v4831, 64
        %v4879 = vpop.permute.xlu0 %4878
        %v4896 = vsel %vm1231, %v4849, 0.0
        %4897 = vadd.xlane.f32.xlu0 %v4896
        %v4898 = vpop.xlane.xlu0 %4897
        %v4899 = vsel %vm1231, %v4851, 0.0
        %4900 = vadd.xlane.f32.xlu0 %v4899
        %v4901 = vpop.xlane.xlu0 %4900
        %v4902 = vsel %vm1231, %v4853, 0.0
        %4903 = vadd.xlane.f32.xlu0 %v4902
        %v4904 = vpop.xlane.xlu0 %4903
        %v4905 = vsel %vm1231, %v4855, 0.0
        %4906 = vadd.xlane.f32.xlu0 %v4905
        %v4907 = vpop.xlane.xlu0 %4906
        %v4908 = vsel %vm1231, %v4857, 0.0
        %4909 = vadd.xlane.f32.xlu0 %v4908
        %v4910 = vpop.xlane.xlu0 %4909
        %v4911 = vsel %vm1231, %v4859, 0.0
        %4912 = vadd.xlane.f32.xlu0 %v4911
        %v4913 = vpop.xlane.xlu0 %4912
        %v4914 = vsel %vm1231, %v4861, 0.0
        %4915 = vadd.xlane.f32.xlu0 %v4914
        %v4916 = vpop.xlane.xlu0 %4915
        %v4917 = vsel %vm1231, %v4863, 0.0
        %4918 = vadd.xlane.f32.xlu0 %v4917
        %v4919 = vpop.xlane.xlu0 %4918
        %v4920 = vsel %vm1231, %v4865, 0.0
        %4921 = vadd.xlane.f32.xlu0 %v4920
        %v4922 = vpop.xlane.xlu0 %4921
        %v4923 = vsel %vm1231, %v4867, 0.0
        %4924 = vadd.xlane.f32.xlu0 %v4923
        %v4925 = vpop.xlane.xlu0 %4924
        %v4926 = vsel %vm1231, %v4869, 0.0
        %4927 = vadd.xlane.f32.xlu0 %v4926
        %v4928 = vpop.xlane.xlu0 %4927
        %v4929 = vsel %vm1231, %v4871, 0.0
        %4930 = vadd.xlane.f32.xlu0 %v4929
        %v4931 = vpop.xlane.xlu0 %4930
        %v4932 = vsel %vm1231, %v4873, 0.0
        %4933 = vadd.xlane.f32.xlu0 %v4932
        %v4934 = vpop.xlane.xlu0 %4933
        %v4935 = vsel %vm1231, %v4875, 0.0
        %4936 = vadd.xlane.f32.xlu0 %v4935
        %v4937 = vpop.xlane.xlu0 %4936
        %v4938 = vsel %vm1231, %v4877, 0.0
        %4939 = vadd.xlane.f32.xlu0 %v4938
        %v4940 = vpop.xlane.xlu0 %4939
        %v4941 = vsel %vm1231, %v4879, 0.0
        %4942 = vadd.xlane.f32.xlu0 %v4941
        %v4943 = vpop.xlane.xlu0 %4942
        %v4944 = vmul.f32 %v4898, 0.125
        %v4945 = vmul.f32 %v4901, 0.125
        %v4946 = vmul.f32 %v4904, 0.125
        %v4947 = vmul.f32 %v4907, 0.125
        %v4948 = vmul.f32 %v4910, 0.125
        %v4949 = vmul.f32 %v4913, 0.125
        %v4950 = vmul.f32 %v4916, 0.125
        %v4951 = vmul.f32 %v4919, 0.125
        %v4952 = vmul.f32 %v4922, 0.125
        %v4953 = vmul.f32 %v4925, 0.125
        %v4954 = vmul.f32 %v4928, 0.125
        %v4955 = vmul.f32 %v4931, 0.125
        %v4956 = vmul.f32 %v4934, 0.125
        %v4957 = vmul.f32 %v4937, 0.125
        %v4958 = vmul.f32 %v4940, 0.125
        %v4959 = vmul.f32 %v4943, 0.125
        %v4960 = vmax.f32 %v4320, %v4528
        %v4961 = vmax.f32 %v4321, %v4529
        %v4962 = vmax.f32 %v4322, %v4530
        %v4963 = vmax.f32 %v4323, %v4531
        %v4964 = vmax.f32 %v4324, %v4532
        %v4965 = vmax.f32 %v4325, %v4533
        %v4966 = vmax.f32 %v4326, %v4534
        %v4967 = vmax.f32 %v4327, %v4535
        %v4968 = vmax.f32 %v4328, %v4536
        %v4969 = vmax.f32 %v4329, %v4537
        %v4970 = vmax.f32 %v4330, %v4538
        %v4971 = vmax.f32 %v4331, %v4539
        %v4972 = vmax.f32 %v4332, %v4540
        %v4973 = vmax.f32 %v4333, %v4541
        %v4974 = vmax.f32 %v4334, %v4542
        %v4975 = vmax.f32 %v4335, %v4543
        %v4976 = vmax.f32 %v4960, %v4736
        %v4977 = vmax.f32 %v4961, %v4737
        %v4978 = vmax.f32 %v4962, %v4738
        %v4979 = vmax.f32 %v4963, %v4739
        %v4980 = vmax.f32 %v4964, %v4740
        %v4981 = vmax.f32 %v4965, %v4741
        %v4982 = vmax.f32 %v4966, %v4742
        %v4983 = vmax.f32 %v4967, %v4743
        %v4984 = vmax.f32 %v4968, %v4744
        %v4985 = vmax.f32 %v4969, %v4745
        %v4986 = vmax.f32 %v4970, %v4746
        %v4987 = vmax.f32 %v4971, %v4747
        %v4988 = vmax.f32 %v4972, %v4748
        %v4989 = vmax.f32 %v4973, %v4749
        %v4990 = vmax.f32 %v4974, %v4750
        %v4991 = vmax.f32 %v4975, %v4751
        %v4992 = vmax.f32 %v4976, %v4944
        %v4993 = vmax.f32 %v4977, %v4945
        %v4994 = vmax.f32 %v4978, %v4946
        %v4995 = vmax.f32 %v4979, %v4947
        %v4996 = vmax.f32 %v4980, %v4948
        %v4997 = vmax.f32 %v4981, %v4949
        %v4998 = vmax.f32 %v4982, %v4950
        %v4999 = vmax.f32 %v4983, %v4951
        %v5000 = vmax.f32 %v4984, %v4952
        %v5001 = vmax.f32 %v4985, %v4953
        %v5002 = vmax.f32 %v4986, %v4954
        %v5003 = vmax.f32 %v4987, %v4955
        %v5004 = vmax.f32 %v4988, %v4956
        %v5005 = vmax.f32 %v4989, %v4957
        %v5006 = vmax.f32 %v4990, %v4958
        %v5007 = vmax.f32 %v4991, %v4959
        %v5008 = vsub.f32 %v4320, %v4992
        %v5009 = vsub.f32 %v4321, %v4993
        %v5010 = vsub.f32 %v4322, %v4994
        %v5011 = vsub.f32 %v4323, %v4995
        %v5012 = vsub.f32 %v4324, %v4996
        %v5013 = vsub.f32 %v4325, %v4997
        %v5014 = vsub.f32 %v4326, %v4998
        %v5015 = vsub.f32 %v4327, %v4999
        %v5016 = vsub.f32 %v4328, %v5000
        %v5017 = vsub.f32 %v4329, %v5001
        %v5018 = vsub.f32 %v4330, %v5002
        %v5019 = vsub.f32 %v4331, %v5003
        %v5020 = vsub.f32 %v4332, %v5004
        %v5021 = vsub.f32 %v4333, %v5005
        %v5022 = vsub.f32 %v4334, %v5006
        %v5023 = vsub.f32 %v4335, %v5007
        %v5024 = vmul.f32 %v5008, 1.442695
        %v5025 = vpow.pop %v5024
        %v5026 = vmul.f32 %v5009, 1.442695
        %v5027 = vpow.pop %v5026
        %v5028 = vmul.f32 %v5010, 1.442695
        %v5029 = vpow.pop %v5028
        %v5030 = vmul.f32 %v5011, 1.442695
        %v5031 = vpow.pop %v5030
        %v5032 = vmul.f32 %v5012, 1.442695
        %v5033 = vpow.pop %v5032
        %v5034 = vmul.f32 %v5013, 1.442695
        %v5035 = vpow.pop %v5034
        %v5036 = vmul.f32 %v5014, 1.442695
        %v5037 = vpow.pop %v5036
        %v5038 = vmul.f32 %v5015, 1.442695
        %v5039 = vpow.pop %v5038
        %v5040 = vmul.f32 %v5016, 1.442695
        %v5041 = vpow.pop %v5040
        %v5042 = vmul.f32 %v5017, 1.442695
        %v5043 = vpow.pop %v5042
        %v5044 = vmul.f32 %v5018, 1.442695
        %v5045 = vpow.pop %v5044
        %v5046 = vmul.f32 %v5019, 1.442695
        %v5047 = vpow.pop %v5046
        %v5048 = vmul.f32 %v5020, 1.442695
        %v5049 = vpow.pop %v5048
        %v5050 = vmul.f32 %v5021, 1.442695
        %v5051 = vpow.pop %v5050
        %v5052 = vmul.f32 %v5022, 1.442695
        %v5053 = vpow.pop %v5052
        %v5054 = vmul.f32 %v5023, 1.442695
        %v5055 = vpow.pop %v5054
        %v5056 = vsub.f32 %v4528, %v4992
        %v5057 = vsub.f32 %v4529, %v4993
        %v5058 = vsub.f32 %v4530, %v4994
        %v5059 = vsub.f32 %v4531, %v4995
        %v5060 = vsub.f32 %v4532, %v4996
        %v5061 = vsub.f32 %v4533, %v4997
        %v5062 = vsub.f32 %v4534, %v4998
        %v5063 = vsub.f32 %v4535, %v4999
        %v5064 = vsub.f32 %v4536, %v5000
        %v5065 = vsub.f32 %v4537, %v5001
        %v5066 = vsub.f32 %v4538, %v5002
        %v5067 = vsub.f32 %v4539, %v5003
        %v5068 = vsub.f32 %v4540, %v5004
        %v5069 = vsub.f32 %v4541, %v5005
        %v5070 = vsub.f32 %v4542, %v5006
        %v5071 = vsub.f32 %v4543, %v5007
        %v5072 = vmul.f32 %v5056, 1.442695
        %v5073 = vpow.pop %v5072
        %v5074 = vmul.f32 %v5057, 1.442695
        %v5075 = vpow.pop %v5074
        %v5076 = vmul.f32 %v5058, 1.442695
        %v5077 = vpow.pop %v5076
        %v5078 = vmul.f32 %v5059, 1.442695
        %v5079 = vpow.pop %v5078
        %v5080 = vmul.f32 %v5060, 1.442695
        %v5081 = vpow.pop %v5080
        %v5082 = vmul.f32 %v5061, 1.442695
        %v5083 = vpow.pop %v5082
        %v5084 = vmul.f32 %v5062, 1.442695
        %v5085 = vpow.pop %v5084
        %v5086 = vmul.f32 %v5063, 1.442695
        %v5087 = vpow.pop %v5086
        %v5088 = vmul.f32 %v5064, 1.442695
        %v5089 = vpow.pop %v5088
        %v5090 = vmul.f32 %v5065, 1.442695
        %v5091 = vpow.pop %v5090
        %v5092 = vmul.f32 %v5066, 1.442695
        %v5093 = vpow.pop %v5092
        %v5094 = vmul.f32 %v5067, 1.442695
        %v5095 = vpow.pop %v5094
        %v5096 = vmul.f32 %v5068, 1.442695
        %v5097 = vpow.pop %v5096
        %v5098 = vmul.f32 %v5069, 1.442695
        %v5099 = vpow.pop %v5098
        %v5100 = vmul.f32 %v5070, 1.442695
        %v5101 = vpow.pop %v5100
        %v5102 = vmul.f32 %v5071, 1.442695
        %v5103 = vpow.pop %v5102
        %v5104 = vsub.f32 %v4736, %v4992
        %v5105 = vsub.f32 %v4737, %v4993
        %v5106 = vsub.f32 %v4738, %v4994
        %v5107 = vsub.f32 %v4739, %v4995
        %v5108 = vsub.f32 %v4740, %v4996
        %v5109 = vsub.f32 %v4741, %v4997
        %v5110 = vsub.f32 %v4742, %v4998
        %v5111 = vsub.f32 %v4743, %v4999
        %v5112 = vsub.f32 %v4744, %v5000
        %v5113 = vsub.f32 %v4745, %v5001
        %v5114 = vsub.f32 %v4746, %v5002
        %v5115 = vsub.f32 %v4747, %v5003
        %v5116 = vsub.f32 %v4748, %v5004
        %v5117 = vsub.f32 %v4749, %v5005
        %v5118 = vsub.f32 %v4750, %v5006
        %v5119 = vsub.f32 %v4751, %v5007
        %v5120 = vmul.f32 %v5104, 1.442695
        %v5121 = vpow.pop %v5120
        %v5122 = vmul.f32 %v5105, 1.442695
        %v5123 = vpow.pop %v5122
        %v5124 = vmul.f32 %v5106, 1.442695
        %v5125 = vpow.pop %v5124
        %v5126 = vmul.f32 %v5107, 1.442695
        %v5127 = vpow.pop %v5126
        %v5128 = vmul.f32 %v5108, 1.442695
        %v5129 = vpow.pop %v5128
        %v5130 = vmul.f32 %v5109, 1.442695
        %v5131 = vpow.pop %v5130
        %v5132 = vmul.f32 %v5110, 1.442695
        %v5133 = vpow.pop %v5132
        %v5134 = vmul.f32 %v5111, 1.442695
        %v5135 = vpow.pop %v5134
        %v5136 = vmul.f32 %v5112, 1.442695
        %v5137 = vpow.pop %v5136
        %v5138 = vmul.f32 %v5113, 1.442695
        %v5139 = vpow.pop %v5138
        %v5140 = vmul.f32 %v5114, 1.442695
        %v5141 = vpow.pop %v5140
        %v5142 = vmul.f32 %v5115, 1.442695
        %v5143 = vpow.pop %v5142
        %v5144 = vmul.f32 %v5116, 1.442695
        %v5145 = vpow.pop %v5144
        %v5146 = vmul.f32 %v5117, 1.442695
        %v5147 = vpow.pop %v5146
        %v5148 = vmul.f32 %v5118, 1.442695
        %v5149 = vpow.pop %v5148
        %v5150 = vmul.f32 %v5119, 1.442695
        %v5151 = vpow.pop %v5150
        %v5152 = vsub.f32 %v4944, %v4992
        %v5153 = vsub.f32 %v4945, %v4993
        %v5154 = vsub.f32 %v4946, %v4994
        %v5155 = vsub.f32 %v4947, %v4995
        %v5156 = vsub.f32 %v4948, %v4996
        %v5157 = vsub.f32 %v4949, %v4997
        %v5158 = vsub.f32 %v4950, %v4998
        %v5159 = vsub.f32 %v4951, %v4999
        %v5160 = vsub.f32 %v4952, %v5000
        %v5161 = vsub.f32 %v4953, %v5001
        %v5162 = vsub.f32 %v4954, %v5002
        %v5163 = vsub.f32 %v4955, %v5003
        %v5164 = vsub.f32 %v4956, %v5004
        %v5165 = vsub.f32 %v4957, %v5005
        %v5166 = vsub.f32 %v4958, %v5006
        %v5167 = vsub.f32 %v4959, %v5007
        %v5168 = vmul.f32 %v5152, 1.442695
        %v5169 = vpow.pop %v5168
        %v5170 = vmul.f32 %v5153, 1.442695
        %v5171 = vpow.pop %v5170
        %v5172 = vmul.f32 %v5154, 1.442695
        %v5173 = vpow.pop %v5172
        %v5174 = vmul.f32 %v5155, 1.442695
        %v5175 = vpow.pop %v5174
        %v5176 = vmul.f32 %v5156, 1.442695
        %v5177 = vpow.pop %v5176
        %v5178 = vmul.f32 %v5157, 1.442695
        %v5179 = vpow.pop %v5178
        %v5180 = vmul.f32 %v5158, 1.442695
        %v5181 = vpow.pop %v5180
        %v5182 = vmul.f32 %v5159, 1.442695
        %v5183 = vpow.pop %v5182
        %v5184 = vmul.f32 %v5160, 1.442695
        %v5185 = vpow.pop %v5184
        %v5186 = vmul.f32 %v5161, 1.442695
        %v5187 = vpow.pop %v5186
        %v5188 = vmul.f32 %v5162, 1.442695
        %v5189 = vpow.pop %v5188
        %v5190 = vmul.f32 %v5163, 1.442695
        %v5191 = vpow.pop %v5190
        %v5192 = vmul.f32 %v5164, 1.442695
        %v5193 = vpow.pop %v5192
        %v5194 = vmul.f32 %v5165, 1.442695
        %v5195 = vpow.pop %v5194
        %v5196 = vmul.f32 %v5166, 1.442695
        %v5197 = vpow.pop %v5196
        %v5198 = vmul.f32 %v5167, 1.442695
        %v5199 = vpow.pop %v5198
        %v5200 = vadd.f32 %v5025, %v5073
        %v5201 = vadd.f32 %v5027, %v5075
        %v5202 = vadd.f32 %v5029, %v5077
        %v5203 = vadd.f32 %v5031, %v5079
        %v5204 = vadd.f32 %v5033, %v5081
        %v5205 = vadd.f32 %v5035, %v5083
        %v5206 = vadd.f32 %v5037, %v5085
        %v5207 = vadd.f32 %v5039, %v5087
        %v5208 = vadd.f32 %v5041, %v5089
        %v5209 = vadd.f32 %v5043, %v5091
        %v5210 = vadd.f32 %v5045, %v5093
        %v5211 = vadd.f32 %v5047, %v5095
        %v5212 = vadd.f32 %v5049, %v5097
        %v5213 = vadd.f32 %v5051, %v5099
        %v5214 = vadd.f32 %v5053, %v5101
        %v5215 = vadd.f32 %v5055, %v5103
        %v5216 = vadd.f32 %v5200, %v5121
        %v5217 = vadd.f32 %v5201, %v5123
        %v5218 = vadd.f32 %v5202, %v5125
        %v5219 = vadd.f32 %v5203, %v5127
        %v5220 = vadd.f32 %v5204, %v5129
        %v5221 = vadd.f32 %v5205, %v5131
        %v5222 = vadd.f32 %v5206, %v5133
        %v5223 = vadd.f32 %v5207, %v5135
        %v5224 = vadd.f32 %v5208, %v5137
        %v5225 = vadd.f32 %v5209, %v5139
        %v5226 = vadd.f32 %v5210, %v5141
        %v5227 = vadd.f32 %v5211, %v5143
        %v5228 = vadd.f32 %v5212, %v5145
        %v5229 = vadd.f32 %v5213, %v5147
        %v5230 = vadd.f32 %v5214, %v5149
        %v5231 = vadd.f32 %v5215, %v5151
        %v5232 = vadd.f32 %v5216, %v5169
        %v5233 = vadd.f32 %v5217, %v5171
        %v5234 = vadd.f32 %v5218, %v5173
        %v5235 = vadd.f32 %v5219, %v5175
        %v5236 = vadd.f32 %v5220, %v5177
        %v5237 = vadd.f32 %v5221, %v5179
        %v5238 = vadd.f32 %v5222, %v5181
        %v5239 = vadd.f32 %v5223, %v5183
        %v5240 = vadd.f32 %v5224, %v5185
        %v5241 = vadd.f32 %v5225, %v5187
        %v5242 = vadd.f32 %v5226, %v5189
        %v5243 = vadd.f32 %v5227, %v5191
        %v5244 = vadd.f32 %v5228, %v5193
        %v5245 = vadd.f32 %v5229, %v5195
        %v5246 = vadd.f32 %v5230, %v5197
        %v5247 = vadd.f32 %v5231, %v5199
        %v5248 = vrcp.pop %v5232
        %v5249 = vrcp.pop %v5233
        %v5250 = vrcp.pop %v5234
        %v5251 = vrcp.pop %v5235
        %v5252 = vrcp.pop %v5236
        %v5253 = vrcp.pop %v5237
        %v5254 = vrcp.pop %v5238
        %v5255 = vrcp.pop %v5239
        %v5256 = vrcp.pop %v5240
        %v5257 = vrcp.pop %v5241
        %v5258 = vrcp.pop %v5242
        %v5259 = vrcp.pop %v5243
        %v5260 = vrcp.pop %v5244
        %v5261 = vrcp.pop %v5245
        %v5262 = vrcp.pop %v5246
        %v5263 = vrcp.pop %v5247
        %v5264 = vmul.f32 %v5025, %v5248
        %v5265 = vmul.f32 %v5027, %v5249
        %v5266 = vmul.f32 %v5029, %v5250
        %v5267 = vmul.f32 %v5031, %v5251
        %v5268 = vmul.f32 %v5033, %v5252
        %v5269 = vmul.f32 %v5035, %v5253
        %v5270 = vmul.f32 %v5037, %v5254
        %v5271 = vmul.f32 %v5039, %v5255
        %v5272 = vmul.f32 %v5041, %v5256
        %v5273 = vmul.f32 %v5043, %v5257
        %v5274 = vmul.f32 %v5045, %v5258
        %v5275 = vmul.f32 %v5047, %v5259
        %v5276 = vmul.f32 %v5049, %v5260
        %v5277 = vmul.f32 %v5051, %v5261
        %v5278 = vmul.f32 %v5053, %v5262
        %v5279 = vmul.f32 %v5055, %v5263
        %v5280 = vmul.f32 %v5264, %v1016
        %v5281 = vmul.f32 %v5265, %v1020
        %v5282 = vmul.f32 %v5266, %v1026
        %v5283 = vmul.f32 %v5267, %v1030
        %v5284 = vmul.f32 %v5268, %v1036
        %v5285 = vmul.f32 %v5269, %v1040
        %v5286 = vmul.f32 %v5270, %v1046
        %v5287 = vmul.f32 %v5271, %v1050
        %v5288 = vmul.f32 %v5272, %v1056
        %v5289 = vmul.f32 %v5273, %v1060
        %v5290 = vmul.f32 %v5274, %v1066
        %v5291 = vmul.f32 %v5275, %v1070
        %v5292 = vmul.f32 %v5276, %v1076
        %v5293 = vmul.f32 %v5277, %v1080
        %v5294 = vmul.f32 %v5278, %v1086
        %v5295 = vmul.f32 %v5279, %v1090
        %v5296 = vmul.f32 %v5073, %v5248
        %v5297 = vmul.f32 %v5075, %v5249
        %v5298 = vmul.f32 %v5077, %v5250
        %v5299 = vmul.f32 %v5079, %v5251
        %v5300 = vmul.f32 %v5081, %v5252
        %v5301 = vmul.f32 %v5083, %v5253
        %v5302 = vmul.f32 %v5085, %v5254
        %v5303 = vmul.f32 %v5087, %v5255
        %v5304 = vmul.f32 %v5089, %v5256
        %v5305 = vmul.f32 %v5091, %v5257
        %v5306 = vmul.f32 %v5093, %v5258
        %v5307 = vmul.f32 %v5095, %v5259
        %v5308 = vmul.f32 %v5097, %v5260
        %v5309 = vmul.f32 %v5099, %v5261
        %v5310 = vmul.f32 %v5101, %v5262
        %v5311 = vmul.f32 %v5103, %v5263
        %v5312 = vmul.f32 %v5296, %v1018
        %v5313 = vmul.f32 %v5297, %v1022
        %v5314 = vmul.f32 %v5298, %v1028
        %v5315 = vmul.f32 %v5299, %v1032
        %v5316 = vmul.f32 %v5300, %v1038
        %v5317 = vmul.f32 %v5301, %v1042
        %v5318 = vmul.f32 %v5302, %v1048
        %v5319 = vmul.f32 %v5303, %v1052
        %v5320 = vmul.f32 %v5304, %v1058
        %v5321 = vmul.f32 %v5305, %v1062
        %v5322 = vmul.f32 %v5306, %v1068
        %v5323 = vmul.f32 %v5307, %v1072
        %v5324 = vmul.f32 %v5308, %v1078
        %v5325 = vmul.f32 %v5309, %v1082
        %v5326 = vmul.f32 %v5310, %v1088
        %v5327 = vmul.f32 %v5311, %v1092
        %v5328 = vadd.f32 %v5280, %v5312
        %v5329 = vadd.f32 %v5281, %v5313
        %v5330 = vadd.f32 %v5282, %v5314
        %v5331 = vadd.f32 %v5283, %v5315
        %v5332 = vadd.f32 %v5284, %v5316
        %v5333 = vadd.f32 %v5285, %v5317
        %v5334 = vadd.f32 %v5286, %v5318
        %v5335 = vadd.f32 %v5287, %v5319
        %v5336 = vadd.f32 %v5288, %v5320
        %v5337 = vadd.f32 %v5289, %v5321
        %v5338 = vadd.f32 %v5290, %v5322
        %v5339 = vadd.f32 %v5291, %v5323
        %v5340 = vadd.f32 %v5292, %v5324
        %v5341 = vadd.f32 %v5293, %v5325
        %v5342 = vadd.f32 %v5294, %v5326
        %v5343 = vadd.f32 %v5295, %v5327
        %v5344 = vmul.f32 %v5121, %v5248
        %v5345 = vmul.f32 %v5123, %v5249
        %v5346 = vmul.f32 %v5125, %v5250
        %v5347 = vmul.f32 %v5127, %v5251
        %v5348 = vmul.f32 %v5129, %v5252
        %v5349 = vmul.f32 %v5131, %v5253
        %v5350 = vmul.f32 %v5133, %v5254
        %v5351 = vmul.f32 %v5135, %v5255
        %v5352 = vmul.f32 %v5137, %v5256
        %v5353 = vmul.f32 %v5139, %v5257
        %v5354 = vmul.f32 %v5141, %v5258
        %v5355 = vmul.f32 %v5143, %v5259
        %v5356 = vmul.f32 %v5145, %v5260
        %v5357 = vmul.f32 %v5147, %v5261
        %v5358 = vmul.f32 %v5149, %v5262
        %v5359 = vmul.f32 %v5151, %v5263
        %v5360 = vmul.f32 %v5344, %v1137
        %v5361 = vmul.f32 %v5345, %v1141
        %v5362 = vmul.f32 %v5346, %v1147
        %v5363 = vmul.f32 %v5347, %v1151
        %v5364 = vmul.f32 %v5348, %v1157
        %v5365 = vmul.f32 %v5349, %v1161
        %v5366 = vmul.f32 %v5350, %v1167
        %v5367 = vmul.f32 %v5351, %v1171
        %v5368 = vmul.f32 %v5352, %v1177
        %v5369 = vmul.f32 %v5353, %v1181
        %v5370 = vmul.f32 %v5354, %v1187
        %v5371 = vmul.f32 %v5355, %v1191
        %v5372 = vmul.f32 %v5356, %v1197
        %v5373 = vmul.f32 %v5357, %v1201
        %v5374 = vmul.f32 %v5358, %v1207
        %v5375 = vmul.f32 %v5359, %v1211
        %v5376 = vadd.f32 %v5328, %v5360
        %v5377 = vadd.f32 %v5329, %v5361
        %v5378 = vadd.f32 %v5330, %v5362
        %v5379 = vadd.f32 %v5331, %v5363
        %v5380 = vadd.f32 %v5332, %v5364
        %v5381 = vadd.f32 %v5333, %v5365
        %v5382 = vadd.f32 %v5334, %v5366
        %v5383 = vadd.f32 %v5335, %v5367
        %v5384 = vadd.f32 %v5336, %v5368
        %v5385 = vadd.f32 %v5337, %v5369
        %v5386 = vadd.f32 %v5338, %v5370
        %v5387 = vadd.f32 %v5339, %v5371
        %v5388 = vadd.f32 %v5340, %v5372
        %v5389 = vadd.f32 %v5341, %v5373
        %v5390 = vadd.f32 %v5342, %v5374
        %v5391 = vadd.f32 %v5343, %v5375
        %v5392 = vmul.f32 %v5169, %v5248
        %v5393 = vmul.f32 %v5171, %v5249
        %v5394 = vmul.f32 %v5173, %v5250
        %v5395 = vmul.f32 %v5175, %v5251
        %v5396 = vmul.f32 %v5177, %v5252
        %v5397 = vmul.f32 %v5179, %v5253
        %v5398 = vmul.f32 %v5181, %v5254
        %v5399 = vmul.f32 %v5183, %v5255
        %v5400 = vmul.f32 %v5185, %v5256
        %v5401 = vmul.f32 %v5187, %v5257
        %v5402 = vmul.f32 %v5189, %v5258
        %v5403 = vmul.f32 %v5191, %v5259
        %v5404 = vmul.f32 %v5193, %v5260
        %v5405 = vmul.f32 %v5195, %v5261
        %v5406 = vmul.f32 %v5197, %v5262
        %v5407 = vmul.f32 %v5199, %v5263
        %v5408 = vmul.f32 %v5392, %v1139
        %v5409 = vmul.f32 %v5393, %v1143
        %v5410 = vmul.f32 %v5394, %v1149
        %v5411 = vmul.f32 %v5395, %v1153
        %v5412 = vmul.f32 %v5396, %v1159
        %v5413 = vmul.f32 %v5397, %v1163
        %v5414 = vmul.f32 %v5398, %v1169
        %v5415 = vmul.f32 %v5399, %v1173
        %v5416 = vmul.f32 %v5400, %v1179
        %v5417 = vmul.f32 %v5401, %v1183
        %v5418 = vmul.f32 %v5402, %v1189
        %v5419 = vmul.f32 %v5403, %v1193
        %v5420 = vmul.f32 %v5404, %v1199
        %v5421 = vmul.f32 %v5405, %v1203
        %v5422 = vmul.f32 %v5406, %v1209
        %v5423 = vmul.f32 %v5407, %v1213
        %v5424 = vadd.f32 %v5376, %v5408
        %v5425 = vadd.f32 %v5377, %v5409
        %v5426 = vadd.f32 %v5378, %v5410
        %v5427 = vadd.f32 %v5379, %v5411
        %v5428 = vadd.f32 %v5380, %v5412
        %v5429 = vadd.f32 %v5381, %v5413
        %v5430 = vadd.f32 %v5382, %v5414
        %v5431 = vadd.f32 %v5383, %v5415
        %v5432 = vadd.f32 %v5384, %v5416
        %v5433 = vadd.f32 %v5385, %v5417
        %v5434 = vadd.f32 %v5386, %v5418
        %v5435 = vadd.f32 %v5387, %v5419
        %v5436 = vadd.f32 %v5388, %v5420
        %v5437 = vadd.f32 %v5389, %v5421
        %v5438 = vadd.f32 %v5390, %v5422
        %v5439 = vadd.f32 %v5391, %v5423
        %5456 = vrot.lane.b32.xlu0 %v2000, 64
        %v5457 = vpop.permute.xlu0 %5456
        %5458 = vrot.lane.b32.xlu0 %v2001, 64
        %v5459 = vpop.permute.xlu0 %5458
        %5460 = vrot.lane.b32.xlu0 %v2002, 64
        %v5461 = vpop.permute.xlu0 %5460
        %5462 = vrot.lane.b32.xlu0 %v2003, 64
        %v5463 = vpop.permute.xlu0 %5462
        %5464 = vrot.lane.b32.xlu0 %v2004, 64
        %v5465 = vpop.permute.xlu0 %5464
        %5466 = vrot.lane.b32.xlu0 %v2005, 64
        %v5467 = vpop.permute.xlu0 %5466
        %5468 = vrot.lane.b32.xlu0 %v2006, 64
        %v5469 = vpop.permute.xlu0 %5468
        %5470 = vrot.lane.b32.xlu0 %v2007, 64
        %v5471 = vpop.permute.xlu0 %5470
        %5472 = vrot.lane.b32.xlu0 %v2008, 64
        %v5473 = vpop.permute.xlu0 %5472
        %5474 = vrot.lane.b32.xlu0 %v2009, 64
        %v5475 = vpop.permute.xlu0 %5474
        %5476 = vrot.lane.b32.xlu0 %v2010, 64
        %v5477 = vpop.permute.xlu0 %5476
        %5478 = vrot.lane.b32.xlu0 %v2011, 64
        %v5479 = vpop.permute.xlu0 %5478
        %5480 = vrot.lane.b32.xlu0 %v2012, 64
        %v5481 = vpop.permute.xlu0 %5480
        %5482 = vrot.lane.b32.xlu0 %v2013, 64
        %v5483 = vpop.permute.xlu0 %5482
        %5484 = vrot.lane.b32.xlu0 %v2014, 64
        %v5485 = vpop.permute.xlu0 %5484
        %5486 = vrot.lane.b32.xlu0 %v2015, 64
        %v5487 = vpop.permute.xlu0 %5486
        %5520 = vrot.lane.b32.xlu0 %v4112, 64
        %v5521 = vpop.permute.xlu0 %5520
        %5522 = vrot.lane.b32.xlu0 %v4113, 64
        %v5523 = vpop.permute.xlu0 %5522
        %5524 = vrot.lane.b32.xlu0 %v4114, 64
        %v5525 = vpop.permute.xlu0 %5524
        %5526 = vrot.lane.b32.xlu0 %v4115, 64
        %v5527 = vpop.permute.xlu0 %5526
        %5528 = vrot.lane.b32.xlu0 %v4116, 64
        %v5529 = vpop.permute.xlu0 %5528
        %5530 = vrot.lane.b32.xlu0 %v4117, 64
        %v5531 = vpop.permute.xlu0 %5530
        %5532 = vrot.lane.b32.xlu0 %v4118, 64
        %v5533 = vpop.permute.xlu0 %5532
        %5534 = vrot.lane.b32.xlu0 %v4119, 64
        %v5535 = vpop.permute.xlu0 %5534
        %5536 = vrot.lane.b32.xlu0 %v4120, 64
        %v5537 = vpop.permute.xlu0 %5536
        %5538 = vrot.lane.b32.xlu0 %v4121, 64
        %v5539 = vpop.permute.xlu0 %5538
        %5540 = vrot.lane.b32.xlu0 %v4122, 64
        %v5541 = vpop.permute.xlu0 %5540
        %5542 = vrot.lane.b32.xlu0 %v4123, 64
        %v5543 = vpop.permute.xlu0 %5542
        %5544 = vrot.lane.b32.xlu0 %v4124, 64
        %v5545 = vpop.permute.xlu0 %5544
        %5546 = vrot.lane.b32.xlu0 %v4125, 64
        %v5547 = vpop.permute.xlu0 %5546
        %5548 = vrot.lane.b32.xlu0 %v4126, 64
        %v5549 = vpop.permute.xlu0 %5548
        %5550 = vrot.lane.b32.xlu0 %v4127, 64
        %v5551 = vpop.permute.xlu0 %5550
        %v5568 = vsel %vm1231, %v5457, %v3312
        %v5569 = vsel %vm1231, %v5459, %v3313
        %v5570 = vsel %vm1231, %v5461, %v3314
        %v5571 = vsel %vm1231, %v5463, %v3315
        %v5572 = vsel %vm1231, %v5465, %v3316
        %v5573 = vsel %vm1231, %v5467, %v3317
        %v5574 = vsel %vm1231, %v5469, %v3318
        %v5575 = vsel %vm1231, %v5471, %v3319
        %v5576 = vsel %vm1231, %v5473, %v3320
        %v5577 = vsel %vm1231, %v5475, %v3321
        %v5578 = vsel %vm1231, %v5477, %v3322
        %v5579 = vsel %vm1231, %v5479, %v3323
        %v5580 = vsel %vm1231, %v5481, %v3324
        %v5581 = vsel %vm1231, %v5483, %v3325
        %v5582 = vsel %vm1231, %v5485, %v3326
        %v5583 = vsel %vm1231, %v5487, %v3327
        %v5584 = vsel %vm1231, %v5521, %v5424
        %v5585 = vsel %vm1231, %v5523, %v5425
        %v5586 = vsel %vm1231, %v5525, %v5426
        %v5587 = vsel %vm1231, %v5527, %v5427
        %v5588 = vsel %vm1231, %v5529, %v5428
        %v5589 = vsel %vm1231, %v5531, %v5429
        %v5590 = vsel %vm1231, %v5533, %v5430
        %v5591 = vsel %vm1231, %v5535, %v5431
        %v5592 = vsel %vm1231, %v5537, %v5432
        %v5593 = vsel %vm1231, %v5539, %v5433
        %v5594 = vsel %vm1231, %v5541, %v5434
        %v5595 = vsel %vm1231, %v5543, %v5435
        %v5596 = vsel %vm1231, %v5545, %v5436
        %v5597 = vsel %vm1231, %v5547, %v5437
        %v5598 = vsel %vm1231, %v5549, %v5438
        %v5599 = vsel %vm1231, %v5551, %v5439
        %v5600 = vld [vmem:[#allocation8] sm:$0xff]
        %v5601 = vld [vmem:[#allocation8 + $0x8] sm:$0xff]
        %v5602 = vld [vmem:[#allocation8 + $0x10] sm:$0xff]
        %v5603 = vld [vmem:[#allocation8 + $0x18] sm:$0xff]
        %v5604 = vld [vmem:[#allocation8 + $0x20] sm:$0xff]
        %v5605 = vld [vmem:[#allocation8 + $0x28] sm:$0xff]
        %v5606 = vld [vmem:[#allocation8 + $0x30] sm:$0xff]
        %v5607 = vld [vmem:[#allocation8 + $0x38] sm:$0xff]
        %v5608 = vld [vmem:[#allocation8 + $0x40] sm:$0xff]
        %v5609 = vld [vmem:[#allocation8 + $0x48] sm:$0xff]
        %v5610 = vld [vmem:[#allocation8 + $0x50] sm:$0xff]
        %v5611 = vld [vmem:[#allocation8 + $0x58] sm:$0xff]
        %v5612 = vld [vmem:[#allocation8 + $0x60] sm:$0xff]
        %v5613 = vld [vmem:[#allocation8 + $0x68] sm:$0xff]
        %v5614 = vld [vmem:[#allocation8 + $0x70] sm:$0xff]
        %v5615 = vld [vmem:[#allocation8 + $0x78] sm:$0xff]
        %v5616 = vld [vmem:[#allocation8 + $0x80] sm:$0xff]
        %v5617 = vld [vmem:[#allocation8 + $0x88] sm:$0xff]
        %v5618 = vld [vmem:[#allocation8 + $0x90] sm:$0xff]
        %v5619 = vld [vmem:[#allocation8 + $0x98] sm:$0xff]
        %v5620 = vld [vmem:[#allocation8 + $0xa0] sm:$0xff]
        %v5621 = vld [vmem:[#allocation8 + $0xa8] sm:$0xff]
        %v5622 = vld [vmem:[#allocation8 + $0xb0] sm:$0xff]
        %v5623 = vld [vmem:[#allocation8 + $0xb8] sm:$0xff]
        %v5624 = vld [vmem:[#allocation8 + $0xc0] sm:$0xff]
        %v5625 = vld [vmem:[#allocation8 + $0xc8] sm:$0xff]
        %v5626 = vld [vmem:[#allocation8 + $0xd0] sm:$0xff]
        %v5627 = vld [vmem:[#allocation8 + $0xd8] sm:$0xff]
        %v5628 = vld [vmem:[#allocation8 + $0xe0] sm:$0xff]
        %v5629 = vld [vmem:[#allocation8 + $0xe8] sm:$0xff]
        %v5630 = vld [vmem:[#allocation8 + $0xf0] sm:$0xff]
        %v5631 = vld [vmem:[#allocation8 + $0xf8] sm:$0xff]
        %v5632 = vpack.c.bf16 %v5601, %v5600
        %v5633 = vpack.c.bf16 %v5603, %v5602
        %v5634 = vpack.c.bf16 %v5605, %v5604
        %v5635 = vpack.c.bf16 %v5607, %v5606
        %v5636 = vpack.c.bf16 %v5609, %v5608
        %v5637 = vpack.c.bf16 %v5611, %v5610
        %v5638 = vpack.c.bf16 %v5613, %v5612
        %v5639 = vpack.c.bf16 %v5615, %v5614
        %v5640 = vpack.c.bf16 %v5617, %v5616
        %v5641 = vpack.c.bf16 %v5619, %v5618
        %v5642 = vpack.c.bf16 %v5621, %v5620
        %v5643 = vpack.c.bf16 %v5623, %v5622
        %v5644 = vpack.c.bf16 %v5625, %v5624
        %v5645 = vpack.c.bf16 %v5627, %v5626
        %v5646 = vpack.c.bf16 %v5629, %v5628
        %v5647 = vpack.c.bf16 %v5631, %v5630
        %v5648 = vpack.c.bf16 %v5569, %v5568
        %v5649 = vpack.c.bf16 %v5585, %v5584
        %v5650 = vpack.c.bf16 %v5571, %v5570
        %v5651 = vpack.c.bf16 %v5587, %v5586
        %v5652 = vpack.c.bf16 %v5573, %v5572
        %v5653 = vpack.c.bf16 %v5589, %v5588
        %v5654 = vpack.c.bf16 %v5575, %v5574
        %v5655 = vpack.c.bf16 %v5591, %v5590
        %v5656 = vpack.c.bf16 %v5577, %v5576
        %v5657 = vpack.c.bf16 %v5593, %v5592
        %v5658 = vpack.c.bf16 %v5579, %v5578
        %v5659 = vpack.c.bf16 %v5595, %v5594
        %v5660 = vpack.c.bf16 %v5581, %v5580
        %v5661 = vpack.c.bf16 %v5597, %v5596
        %v5662 = vpack.c.bf16 %v5583, %v5582
        %v5663 = vpack.c.bf16 %v5599, %v5598
        %v5664 = vld [vmem:[%s6] sm:$0x1]
        %v5666 = vlaneseq
        %v5667 = vshrl.u32 %v5666, 7
        %v5668 = vsub.s32 0, %v5667
        %v5669 = vrot.slane %v5664, %v5668
        %5671 = vmatprep.subr.bf16.mxu0 0
        %5672 = vmatpush1.bf16.msra.mxu0 %v5639
        %5673 = vmatprep.subr.bf16.mxu0 0
        %5674 = vmatpush1.bf16.msra.mxu0 %v5638
        %5675 = vmatprep.subr.bf16.mxu0 0
        %5676 = vmatpush1.bf16.msra.mxu0 %v5637
        %5677 = vmatprep.subr.bf16.mxu0 0
        %5678 = vmatpush1.bf16.msra.mxu0 %v5636
        %5679 = vmatprep.subr.bf16.mxu0 0
        %5680 = vmatpush1.bf16.msra.mxu0 %v5635
        %5681 = vmatprep.subr.bf16.mxu0 0
        %5682 = vmatpush1.bf16.msra.mxu0 %v5634
        %5683 = vmatprep.subr.bf16.mxu0 0
        %5684 = vmatpush1.bf16.msra.mxu0 %v5633
        %5685 = vmatprep.subr.bf16.mxu0 0
        %5686 = vmatpush1.bf16.msra.mxu0 %v5632
        %5687 = vmatprep.subr.bf16.mxu0 0
        %5688 = vmatpush2.bf16.msra.mxu0 %v5647
        %5689 = vmatprep.subr.bf16.mxu0 0
        %5690 = vmatpush2.bf16.msra.mxu0 %v5646
        %5691 = vmatprep.subr.bf16.mxu0 0
        %5692 = vmatpush2.bf16.msra.mxu0 %v5645
        %5693 = vmatprep.subr.bf16.mxu0 0
        %5694 = vmatpush2.bf16.msra.mxu0 %v5644
        %5695 = vmatprep.subr.bf16.mxu0 0
        %5696 = vmatpush2.bf16.msra.mxu0 %v5643
        %5697 = vmatprep.subr.bf16.mxu0 0
        %5698 = vmatpush2.bf16.msra.mxu0 %v5642
        %5699 = vmatprep.subr.bf16.mxu0 0
        %5700 = vmatpush2.bf16.msra.mxu0 %v5641
        %5701 = vmatprep.subr.bf16.mxu0 0
        %5702 = vmatpush2.bf16.msra.mxu0 %v5640
        %5703 = vmatprep.mubr.bf16.mxu0 %v5649
        %5704 = vmatmul.mubr.bf16.gmra.mxu0 %v5648
        %v5705 = vpop.f32.mrf.mxu0
        %v5706 = vadd.f32 %v5669, %v5705
        %v5707 = vpop.f32.mrf.mxu0
        %v5708 = vpop.f32.mrf.mxu0
        %v5709 = vadd.f32 %v5669, %v5708
        %v5710 = vpop.f32.mrf.mxu0
        %5711 = vmatprep.mubr.bf16.mxu0 %v5651
        %5712 = vmatmul.mubr.bf16.gmra.mxu0 %v5650
        %v5713 = vpop.f32.mrf.mxu0
        %v5714 = vadd.f32 %v5669, %v5713
        %v5715 = vpop.f32.mrf.mxu0
        %v5716 = vpop.f32.mrf.mxu0
        %v5717 = vadd.f32 %v5669, %v5716
        %v5718 = vpop.f32.mrf.mxu0
        %5719 = vmatprep.mubr.bf16.mxu0 %v5653
        %5720 = vmatmul.mubr.bf16.gmra.mxu0 %v5652
        %v5721 = vpop.f32.mrf.mxu0
        %v5722 = vadd.f32 %v5669, %v5721
        %v5723 = vpop.f32.mrf.mxu0
        %v5724 = vpop.f32.mrf.mxu0
        %v5725 = vadd.f32 %v5669, %v5724
        %v5726 = vpop.f32.mrf.mxu0
        %5727 = vmatprep.mubr.bf16.mxu0 %v5655
        %5728 = vmatmul.mubr.bf16.gmra.mxu0 %v5654
        %v5729 = vpop.f32.mrf.mxu0
        %v5730 = vadd.f32 %v5669, %v5729
        %v5731 = vpop.f32.mrf.mxu0
        %v5732 = vpop.f32.mrf.mxu0
        %v5733 = vadd.f32 %v5669, %v5732
        %v5734 = vpop.f32.mrf.mxu0
        %5735 = vmatprep.mubr.bf16.mxu0 %v5657
        %5736 = vmatmul.mubr.bf16.gmra.mxu0 %v5656
        %v5737 = vpop.f32.mrf.mxu0
        %v5738 = vadd.f32 %v5669, %v5737
        %v5739 = vpop.f32.mrf.mxu0
        %v5740 = vpop.f32.mrf.mxu0
        %v5741 = vadd.f32 %v5669, %v5740
        %v5742 = vpop.f32.mrf.mxu0
        %5743 = vmatprep.mubr.bf16.mxu0 %v5659
        %5744 = vmatmul.mubr.bf16.gmra.mxu0 %v5658
        %v5745 = vpop.f32.mrf.mxu0
        %v5746 = vadd.f32 %v5669, %v5745
        %v5747 = vpop.f32.mrf.mxu0
        %v5748 = vpop.f32.mrf.mxu0
        %v5749 = vadd.f32 %v5669, %v5748
        %v5750 = vpop.f32.mrf.mxu0
        %5751 = vmatprep.mubr.bf16.mxu0 %v5661
        %5752 = vmatmul.mubr.bf16.gmra.mxu0 %v5660
        %v5753 = vpop.f32.mrf.mxu0
        %v5754 = vadd.f32 %v5669, %v5753
        %v5755 = vpop.f32.mrf.mxu0
        %v5756 = vpop.f32.mrf.mxu0
        %v5757 = vadd.f32 %v5669, %v5756
        %v5758 = vpop.f32.mrf.mxu0
        %5759 = vmatprep.mubr.bf16.mxu0 %v5663
        %5760 = vmatmul.mubr.bf16.gmra.mxu0 %v5662
        %v5761 = vpop.f32.mrf.mxu0
        %v5762 = vadd.f32 %v5669, %v5761
        %v5763 = vpop.f32.mrf.mxu0
        %v5764 = vpop.f32.mrf.mxu0
        %v5765 = vadd.f32 %v5669, %v5764
        %v5766 = vpop.f32.mrf.mxu0
        %5767 = vdwg.mxu0
        %v5768 = vadd.f32 %v5706, %v371
        %v5769 = vadd.f32 %v5709, %v373
        %v5770 = vadd.f32 %v5714, %v375
        %v5771 = vadd.f32 %v5717, %v377
        %v5772 = vadd.f32 %v5722, %v379
        %v5773 = vadd.f32 %v5725, %v381
        %v5774 = vadd.f32 %v5730, %v383
        %v5775 = vadd.f32 %v5733, %v385
        %v5776 = vadd.f32 %v5738, %v387
        %v5777 = vadd.f32 %v5741, %v389
        %v5778 = vadd.f32 %v5746, %v391
        %v5779 = vadd.f32 %v5749, %v393
        %v5780 = vadd.f32 %v5754, %v395
        %v5781 = vadd.f32 %v5757, %v397
        %v5782 = vadd.f32 %v5762, %v399
        %v5783 = vadd.f32 %v5765, %v401
        %v5784 = vmul.f32 %v5768, %v5768
        %v5785 = vmul.f32 %v5769, %v5769
        %v5786 = vmul.f32 %v5770, %v5770
        %v5787 = vmul.f32 %v5771, %v5771
        %v5788 = vmul.f32 %v5772, %v5772
        %v5789 = vmul.f32 %v5773, %v5773
        %v5790 = vmul.f32 %v5774, %v5774
        %v5791 = vmul.f32 %v5775, %v5775
        %v5792 = vmul.f32 %v5776, %v5776
        %v5793 = vmul.f32 %v5777, %v5777
        %v5794 = vmul.f32 %v5778, %v5778
        %v5795 = vmul.f32 %v5779, %v5779
        %v5796 = vmul.f32 %v5780, %v5780
        %v5797 = vmul.f32 %v5781, %v5781
        %v5798 = vmul.f32 %v5782, %v5782
        %v5799 = vmul.f32 %v5783, %v5783
        %5800 = vadd.xlane.f32.xlu0 %v5784
        %v5801 = vpop.xlane.xlu0 %5800
        %5802 = vadd.xlane.f32.xlu0 %v5785
        %v5803 = vpop.xlane.xlu0 %5802
        %5804 = vadd.xlane.f32.xlu0 %v5786
        %v5805 = vpop.xlane.xlu0 %5804
        %5806 = vadd.xlane.f32.xlu0 %v5787
        %v5807 = vpop.xlane.xlu0 %5806
        %5808 = vadd.xlane.f32.xlu0 %v5788
        %v5809 = vpop.xlane.xlu0 %5808
        %5810 = vadd.xlane.f32.xlu0 %v5789
        %v5811 = vpop.xlane.xlu0 %5810
        %5812 = vadd.xlane.f32.xlu0 %v5790
        %v5813 = vpop.xlane.xlu0 %5812
        %5814 = vadd.xlane.f32.xlu0 %v5791
        %v5815 = vpop.xlane.xlu0 %5814
        %5816 = vadd.xlane.f32.xlu0 %v5792
        %v5817 = vpop.xlane.xlu0 %5816
        %5818 = vadd.xlane.f32.xlu0 %v5793
        %v5819 = vpop.xlane.xlu0 %5818
        %5820 = vadd.xlane.f32.xlu0 %v5794
        %v5821 = vpop.xlane.xlu0 %5820
        %5822 = vadd.xlane.f32.xlu0 %v5795
        %v5823 = vpop.xlane.xlu0 %5822
        %5824 = vadd.xlane.f32.xlu0 %v5796
        %v5825 = vpop.xlane.xlu0 %5824
        %5826 = vadd.xlane.f32.xlu0 %v5797
        %v5827 = vpop.xlane.xlu0 %5826
        %5828 = vadd.xlane.f32.xlu0 %v5798
        %v5829 = vpop.xlane.xlu0 %5828
        %5830 = vadd.xlane.f32.xlu0 %v5799
        %v5831 = vpop.xlane.xlu0 %5830
        %v5832 = vrcp.pop 128.0
        %v5833 = vmul.f32 %v5801, %v5832
        %v5834 = vmul.f32 %v5803, %v5832
        %v5835 = vmul.f32 %v5805, %v5832
        %v5836 = vmul.f32 %v5807, %v5832
        %v5837 = vmul.f32 %v5809, %v5832
        %v5838 = vmul.f32 %v5811, %v5832
        %v5839 = vmul.f32 %v5813, %v5832
        %v5840 = vmul.f32 %v5815, %v5832
        %v5841 = vmul.f32 %v5817, %v5832
        %v5842 = vmul.f32 %v5819, %v5832
        %v5843 = vmul.f32 %v5821, %v5832
        %v5844 = vmul.f32 %v5823, %v5832
        %v5845 = vmul.f32 %v5825, %v5832
        %v5846 = vmul.f32 %v5827, %v5832
        %v5847 = vmul.f32 %v5829, %v5832
        %v5848 = vmul.f32 %v5831, %v5832
        %v5849 = vadd.f32 %v5833, 1e-06
        %v5850 = vadd.f32 %v5834, 1e-06
        %v5851 = vadd.f32 %v5835, 1e-06
        %v5852 = vadd.f32 %v5836, 1e-06
        %v5853 = vadd.f32 %v5837, 1e-06
        %v5854 = vadd.f32 %v5838, 1e-06
        %v5855 = vadd.f32 %v5839, 1e-06
        %v5856 = vadd.f32 %v5840, 1e-06
        %v5857 = vadd.f32 %v5841, 1e-06
        %v5858 = vadd.f32 %v5842, 1e-06
        %v5859 = vadd.f32 %v5843, 1e-06
        %v5860 = vadd.f32 %v5844, 1e-06
        %v5861 = vadd.f32 %v5845, 1e-06
        %v5862 = vadd.f32 %v5846, 1e-06
        %v5863 = vadd.f32 %v5847, 1e-06
        %v5864 = vadd.f32 %v5848, 1e-06
        %v5865 = vrsqrt.pop %v5849
        %v5866 = vrsqrt.pop %v5850
        %v5867 = vrsqrt.pop %v5851
        %v5868 = vrsqrt.pop %v5852
        %v5869 = vrsqrt.pop %v5853
        %v5870 = vrsqrt.pop %v5854
        %v5871 = vrsqrt.pop %v5855
        %v5872 = vrsqrt.pop %v5856
        %v5873 = vrsqrt.pop %v5857
        %v5874 = vrsqrt.pop %v5858
        %v5875 = vrsqrt.pop %v5859
        %v5876 = vrsqrt.pop %v5860
        %v5877 = vrsqrt.pop %v5861
        %v5878 = vrsqrt.pop %v5862
        %v5879 = vrsqrt.pop %v5863
        %v5880 = vrsqrt.pop %v5864
        %v5881 = vmul.f32 %v5768, %v5865
        %v5882 = vmul.f32 %v5769, %v5866
        %v5883 = vmul.f32 %v5770, %v5867
        %v5884 = vmul.f32 %v5771, %v5868
        %v5885 = vmul.f32 %v5772, %v5869
        %v5886 = vmul.f32 %v5773, %v5870
        %v5887 = vmul.f32 %v5774, %v5871
        %v5888 = vmul.f32 %v5775, %v5872
        %v5889 = vmul.f32 %v5776, %v5873
        %v5890 = vmul.f32 %v5777, %v5874
        %v5891 = vmul.f32 %v5778, %v5875
        %v5892 = vmul.f32 %v5779, %v5876
        %v5893 = vmul.f32 %v5780, %v5877
        %v5894 = vmul.f32 %v5781, %v5878
        %v5895 = vmul.f32 %v5782, %v5879
        %v5896 = vmul.f32 %v5783, %v5880
        %v5897 = vld [vmem:[%s7] sm:$0x1]
        %v5899 = vlaneseq
        %v5900 = vshrl.u32 %v5899, 7
        %v5901 = vsub.s32 0, %v5900
        %v5902 = vrot.slane %v5897, %v5901
        %v5904 = vmul.f32 %v5881, %v5902
        %v5905 = vmul.f32 %v5882, %v5902
        %v5906 = vmul.f32 %v5883, %v5902
        %v5907 = vmul.f32 %v5884, %v5902
        %v5908 = vmul.f32 %v5885, %v5902
        %v5909 = vmul.f32 %v5886, %v5902
        %v5910 = vmul.f32 %v5887, %v5902
        %v5911 = vmul.f32 %v5888, %v5902
        %v5912 = vmul.f32 %v5889, %v5902
        %v5913 = vmul.f32 %v5890, %v5902
        %v5914 = vmul.f32 %v5891, %v5902
        %v5915 = vmul.f32 %v5892, %v5902
        %v5916 = vmul.f32 %v5893, %v5902
        %v5917 = vmul.f32 %v5894, %v5902
        %v5918 = vmul.f32 %v5895, %v5902
        %v5919 = vmul.f32 %v5896, %v5902
        %5920 = vst [vmem:[%s367] sm:$0xff] %v5904
        %5921 = vst [vmem:[%s367 + $0x8] sm:$0xff] %v5905
        %5922 = vst [vmem:[%s367 + $0x10] sm:$0xff] %v5906
        %5923 = vst [vmem:[%s367 + $0x18] sm:$0xff] %v5907
        %5924 = vst [vmem:[%s367 + $0x20] sm:$0xff] %v5908
        %5925 = vst [vmem:[%s367 + $0x28] sm:$0xff] %v5909
        %5926 = vst [vmem:[%s367 + $0x30] sm:$0xff] %v5910
        %5927 = vst [vmem:[%s367 + $0x38] sm:$0xff] %v5911
        %5928 = vst [vmem:[%s367 + $0x40] sm:$0xff] %v5912
        %5929 = vst [vmem:[%s367 + $0x48] sm:$0xff] %v5913
        %5930 = vst [vmem:[%s367 + $0x50] sm:$0xff] %v5914
        %5931 = vst [vmem:[%s367 + $0x58] sm:$0xff] %v5915
        %5932 = vst [vmem:[%s367 + $0x60] sm:$0xff] %v5916
        %5933 = vst [vmem:[%s367 + $0x68] sm:$0xff] %v5917
        %5934 = vst [vmem:[%s367 + $0x70] sm:$0xff] %v5918
        %5935 = vst [vmem:[%s367 + $0x78] sm:$0xff] %v5919
        %s5936 = sand.u32 %s208, 1
        %s5937 = scalar_lea.sflag [#allocation4], %s5936
        %s5938 = sand.u32 %s208, 1
        %s5939 = smul.addr %s5938, 128
        %s5940 = scalar_lea.vmem [#allocation10], %s5939
        // Predicated region
        $region69: #{tpu_custom_call.1} parent=51 // pred_check
          %p5941 = pneg %p218
        $region70: #{tpu_custom_call.1} parent=51 // pred_check_branch
          %5943 = sbr.rel (%p5941) target = $region72
        $region71: #{tpu_custom_call.1} parent=51 // pred_region
          %s5944 = smul.u32 16, %s27
          %s5946 = ssub.s32 2048, 2048
          %5947 = vsyncadd %s5937, %s5946
          %s5948 = smul.addr %s5944, 128
          %s5949 = scalar_lea.hbm %s8, %s5948
          %s5950 = sshll.u32 %s5940, 4
          %s5951 = int_to_ptr.vmem [resolvable:$true] %s5950
          %5956 = dma.vmem_to_hbm [thread:$0]  %s5951, 2048, %s5949, %s5937, 128, 128, 8
        $region72: #{tpu_custom_call.1} parent=51 // pred_fallthru
          _
      $region52: #{tpu_custom_call.1} parent=5 // pred_fallthru
        _
      %p5957 = scmp.le.s32.totalorder 2, %s22
      // Predicated region
      $region73: #{tpu_custom_call.1} parent=5 // pred_check
        %p5958 = pneg %p5957
      $region74: #{tpu_custom_call.1} parent=5 // pred_check_branch
        %5960 = sbr.rel (%p5958) target = $region76
      $region75: #{tpu_custom_call.1} parent=5 // pred_region
        %s5961 = ssub.s32 %s22, 2
        // Predicated region
        $region77: #{tpu_custom_call.1} parent=75 // pred_check
          %p5962 = pneg %p224
        $region78: #{tpu_custom_call.1} parent=75 // pred_check_branch
          %5964 = sbr.rel (%p5962) target = $region80
        $region79: #{tpu_custom_call.1} parent=75 // pred_region
          %s5965 = sand.u32 %s209, 1
          %s5966 = scalar_lea.sflag [#allocation4], %s5965
          %s5967 = sand.u32 %s209, 1
          %s5968 = smul.addr %s5967, 128
          %s5969 = scalar_lea.vmem [#allocation10], %s5968
          %5970 = dma.done %s5966, 2048
        $region80: #{tpu_custom_call.1} parent=75 // pred_fallthru
          _
      $region76: #{tpu_custom_call.1} parent=5 // pred_fallthru
        _
    $region6: #{tpu_custom_call.1} parent=1 // loop_footer
      %s26 = sadd.s32 1, %s22
    $region7: #{tpu_custom_call.1} parent=1 // loop_footer_branch
      %21 = sbr.rel target = $region3
    $region8: #{tpu_custom_call.1} parent=1 // loop_exit
      _
    %5971 = vsyncpa [#allocation3], 1
    %s5972 = scalar_lea.sflag [#allocation3], 1
    %5973 = vsyncpa %s5972, 1
    %5974 = vsyncpa [#allocation6], 1
    %5975 = vsyncpa [#allocation9], 1
    %5976 = vsyncpa [#allocation4], 1
    %s5977 = scalar_lea.sflag [#allocation4], 1
    %5978 = vsyncpa %s5977, 1

</llo_original>
